<compile_context>
chip_gen: v7x
topology: tpu7x:2x2x1
jax: 0.10.0
libtpu: 0.0.40
codegen_flags: <defaults>
</compile_context>

<pallas_src>
import jax
import jax.numpy as jnp
from jax import lax
from jax.experimental import pallas as pl
from jax.experimental.pallas import tpu as pltpu

INPUT_DIM = 128      # GRU input feature size
HIDDEN = 64          # GRU hidden size
HP = 128             # hidden padded to a full lane width per gate
NGATES = 3           # PyTorch gate order: r, z, n


def _gru_kernel(x_ref, w_ih_ref, w_hh_ref, b_ih_ref, b_hh_ref, o_ref, h_ref):
    """x_ref:    (T, B, INPUT_DIM)   bf16  (time-major)
       w_ih_ref: (INPUT_DIM, 3*HP)   bf16  (lane-padded, gate order r,z,n)
       w_hh_ref: (HP, 3*HP)          bf16
       b_ih_ref: (1, 3*HP)           f32
       b_hh_ref: (1, 3*HP)           f32
       o_ref:    (T, B, HP)          f32   (padded lanes are zero)
       h_ref:    (B, HP)             f32   VMEM scratch (recurrent state)
    """
    T = x_ref.shape[0]

    # h0 = zeros (matches the PyTorch module)
    h_ref[...] = jnp.zeros_like(h_ref)

    def step(t, carry):
        h = h_ref[...]                                               # (B, HP) f32

        # Input projection for this timestep: (B, D) @ (D, 3*HP), f32 acc.
        gi = jnp.dot(x_ref[t], w_ih_ref[...],
                     preferred_element_type=jnp.float32) + b_ih_ref[...]
        # Recurrent projection: (B, HP) @ (HP, 3*HP), f32 acc.
        gh = jnp.dot(h.astype(w_hh_ref.dtype), w_hh_ref[...],
                     preferred_element_type=jnp.float32) + b_hh_ref[...]

        # Gate slices are 128-lane aligned (lane-dense, no masking).
        r = jax.nn.sigmoid(gi[:, 0:HP] + gh[:, 0:HP])
        z = jax.nn.sigmoid(gi[:, HP:2 * HP] + gh[:, HP:2 * HP])
        n = jnp.tanh(gi[:, 2 * HP:3 * HP] + r * gh[:, 2 * HP:3 * HP])

        h_new = (1.0 - z) * n + z * h
        h_ref[...] = h_new
        o_ref[t] = h_new.astype(o_ref.dtype)
        return carry

    # Short static trip count -> fully unroll for LLO scheduler visibility.
    lax.fori_loop(0, T, step, 0, unroll=True)


def autoregressor_forward(x, w_ih_p, w_hh_p, b_ih_p, b_hh_p):
    """x: (B, T, INPUT_DIM) f32 (batch_first, like the PyTorch module).
       Returns (B, T, HIDDEN) f32."""
    B, T, D = x.shape
    # Time-major + bf16 for the MXU (cheap XLA ops outside the kernel).
    x_tm = jnp.transpose(x, (1, 0, 2)).astype(jnp.bfloat16)          # (T, B, D)

    vmem = pl.BlockSpec(memory_space=pltpu.MemorySpace.VMEM)
    out_tm = pl.pallas_call(
        _gru_kernel,
        out_shape=jax.ShapeDtypeStruct((T, B, HP), jnp.float32),
        in_specs=[vmem, vmem, vmem, vmem, vmem],
        out_specs=vmem,
        scratch_shapes=[pltpu.VMEM((B, HP), jnp.float32)],
    )(x_tm, w_ih_p, w_hh_p, b_ih_p, b_hh_p)

    # Back to batch_first and drop the lane padding.
    return jnp.transpose(out_tm, (1, 0, 2))[:, :, :HIDDEN]


# ----------------------------------------------------------------------------
# Parameter init (PyTorch GRU layout & init) + packing into the kernel layout.
# ----------------------------------------------------------------------------
def init_params(key):
    """PyTorch nn.GRU default init: U(-k, k), k = 1/sqrt(hidden)."""
    k = 1.0 / (HIDDEN ** 0.5)
    k1, k2, k3, k4 = jax.random.split(key, 4)
    w_ih = jax.random.uniform(k1, (NGATES * HIDDEN, INPUT_DIM), jnp.float32, -k, k)
    w_hh = jax.random.uniform(k2, (NGATES * HIDDEN, HIDDEN), jnp.float32, -k, k)
    b_ih = jax.random.uniform(k3, (NGATES * HIDDEN,), jnp.float32, -k, k)
    b_hh = jax.random.uniform(k4, (NGATES * HIDDEN,), jnp.float32, -k, k)
    return w_ih, w_hh, b_ih, b_hh


def pack_params(w_ih, w_hh, b_ih, b_hh):
    """PyTorch (out,in) weights -> transposed, per-gate lane-padded, bf16."""
    w_ih_p = jnp.zeros((INPUT_DIM, NGATES * HP), jnp.float32)
    w_hh_p = jnp.zeros((HP, NGATES * HP), jnp.float32)
    b_ih_p = jnp.zeros((1, NGATES * HP), jnp.float32)
    b_hh_p = jnp.zeros((1, NGATES * HP), jnp.float32)
    for g in range(NGATES):
        src = slice(g * HIDDEN, (g + 1) * HIDDEN)
        dst = slice(g * HP, g * HP + HIDDEN)
        w_ih_p = w_ih_p.at[:, dst].set(w_ih[src, :].T)
        w_hh_p = w_hh_p.at[:HIDDEN, dst].set(w_hh[src, :].T)
        b_ih_p = b_ih_p.at[0, dst].set(b_ih[src])
        b_hh_p = b_hh_p.at[0, dst].set(b_hh[src])
    return (w_ih_p.astype(jnp.bfloat16), w_hh_p.astype(jnp.bfloat16),
            b_ih_p, b_hh_p)


def gru_reference(x, w_ih, w_hh, b_ih, b_hh):
    """Pure-JAX f32 reference matching torch.nn.GRU(batch_first=True), h0=0."""
    B, T, _ = x.shape
    h = jnp.zeros((B, HIDDEN), jnp.float32)
    outs = []
    for t in range(T):
        gi = x[:, t, :] @ w_ih.T + b_ih
        gh = h @ w_hh.T + b_hh
        i_r, i_z, i_n = jnp.split(gi, 3, axis=1)
        h_r, h_z, h_n = jnp.split(gh, 3, axis=1)
        r = jax.nn.sigmoid(i_r + h_r)
        z = jax.nn.sigmoid(i_z + h_z)
        n = jnp.tanh(i_n + r * h_n)
        h = (1.0 - z) * n + z * h
        outs.append(h)
    return jnp.stack(outs, axis=1)


if __name__ == "__main__":
    key = jax.random.PRNGKey(0)
    kx, kp = jax.random.split(key)

    batch, seq = 2, 8
    x = jax.random.normal(kx, (batch, seq, INPUT_DIM), jnp.float32)

    w_ih, w_hh, b_ih, b_hh = init_params(kp)          # PyTorch layout (f32)
    packed = pack_params(w_ih, w_hh, b_ih, b_hh)      # kernel layout (bf16/f32)

    out = autoregressor_forward(x, *packed)
    out = jax.block_until_ready(out)

    ref = gru_reference(x, w_ih, w_hh, b_ih, b_hh)
    assert out.shape == (batch, seq, HIDDEN)
    max_err = float(jnp.max(jnp.abs(out - ref)))
    assert jnp.allclose(out, ref, atol=3e-2, rtol=3e-2), f"max_err={max_err}"

    print("KERNEL_OK")
</pallas_src>

<mosaic_0001>
module attributes {stable_mosaic.version = 11 : i64} {
  func.func @_gru_kernel(%arg0: memref<8x2x128xbf16, #tpu.memory_space<vmem>>, %arg1: memref<128x384xbf16, #tpu.memory_space<vmem>>, %arg2: memref<128x384xbf16, #tpu.memory_space<vmem>>, %arg3: memref<1x384xf32, #tpu.memory_space<vmem>>, %arg4: memref<1x384xf32, #tpu.memory_space<vmem>>, %arg5: memref<8x2x128xf32, #tpu.memory_space<vmem>>, %arg6: memref<2x128xf32, #tpu.memory_space<vmem>>) attributes {dimension_semantics = [], scalar_prefetch = 0 : i64, scratch_operands = 1 : i64, tpu.core_type = #tpu.core_type<tc>} {
    %cst = arith.constant 0.000000e+00 : f32
    %0 = vector.broadcast %cst : f32 to vector<2x128xf32>
    %c0 = arith.constant 0 : index
    %c0_0 = arith.constant 0 : index
    %1 = vector.load %arg6[%c0, %c0_0] : memref<2x128xf32, #tpu.memory_space<vmem>>, vector<2x128xf32>
    tpu.vector_store %arg6[%c0, %c0_0], %0 {strides = array<i32>} : memref<2x128xf32, #tpu.memory_space<vmem>>, vector<2x128xf32>,
    %c0_i32 = arith.constant 0 : i32
    %c0_1 = arith.constant 0 : index
    %c0_2 = arith.constant 0 : index
    %2 = vector.load %arg6[%c0_1, %c0_2] : memref<2x128xf32, #tpu.memory_space<vmem>>, vector<2x128xf32>
    %3 = arith.index_cast %c0_i32 : i32 to index
    %c0_3 = arith.constant 0 : index
    %c0_4 = arith.constant 0 : index
    %4 = vector.load %arg0[%3, %c0_3, %c0_4] : memref<8x2x128xbf16, #tpu.memory_space<vmem>>, vector<1x2x128xbf16>
    %5 = vector.shape_cast %4 : vector<1x2x128xbf16> to vector<2x128xbf16>
    %c0_5 = arith.constant 0 : index
    %c0_6 = arith.constant 0 : index
    %6 = vector.load %arg1[%c0_5, %c0_6] : memref<128x384xbf16, #tpu.memory_space<vmem>>, vector<128x384xbf16>
    %cst_7 = arith.constant dense<0.000000e+00> : vector<2x384xf32>
    %7 = tpu.matmul %5, %6, %cst_7 {dimension_numbers = #tpu.dot_dimension_numbers<[1], [0], [0], [1], [0, 0, 1, 1], [], []>} : vector<2x128xbf16>, vector<128x384xbf16>, vector<2x384xf32> -> vector<2x384xf32>
    %c0_8 = arith.constant 0 : index
    %c0_9 = arith.constant 0 : index
    %8 = vector.load %arg3[%c0_8, %c0_9] : memref<1x384xf32, #tpu.memory_space<vmem>>, vector<1x384xf32>
    %9 = vector.broadcast %8 : vector<1x384xf32> to vector<2x384xf32>
    %10 = arith.addf %7, %9 : vector<2x384xf32>
    %11 = arith.truncf %2 : vector<2x128xf32> to vector<2x128xbf16>
    %c0_10 = arith.constant 0 : index
    %c0_11 = arith.constant 0 : index
    %12 = vector.load %arg2[%c0_10, %c0_11] : memref<128x384xbf16, #tpu.memory_space<vmem>>, vector<128x384xbf16>
    %cst_12 = arith.constant dense<0.000000e+00> : vector<2x384xf32>
    %13 = tpu.matmul %11, %12, %cst_12 {dimension_numbers = #tpu.dot_dimension_numbers<[1], [0], [0], [1], [0, 0, 1, 1], [], []>} : vector<2x128xbf16>, vector<128x384xbf16>, vector<2x384xf32> -> vector<2x384xf32>
    %c0_13 = arith.constant 0 : index
    %c0_14 = arith.constant 0 : index
    %14 = vector.load %arg4[%c0_13, %c0_14] : memref<1x384xf32, #tpu.memory_space<vmem>>, vector<1x384xf32>
    %15 = vector.broadcast %14 : vector<1x384xf32> to vector<2x384xf32>
    %16 = arith.addf %13, %15 : vector<2x384xf32>
    %17 = vector.extract_strided_slice %10 {offsets = [0, 0], sizes = [2, 128], strides = [1, 1]} : vector<2x384xf32> to vector<2x128xf32>
    %18 = vector.extract_strided_slice %16 {offsets = [0, 0], sizes = [2, 128], strides = [1, 1]} : vector<2x384xf32> to vector<2x128xf32>
    %19 = arith.addf %17, %18 : vector<2x128xf32>
    %20 = arith.negf %19 : vector<2x128xf32>
    %21 = math.exp %20 : vector<2x128xf32>
    %cst_15 = arith.constant 1.000000e+00 : f32
    %22 = vector.broadcast %cst_15 : f32 to vector<2x128xf32>
    %23 = arith.addf %22, %21 : vector<2x128xf32>
    %24 = arith.divf %22, %23 : vector<2x128xf32>
    %25 = vector.extract_strided_slice %10 {offsets = [0, 128], sizes = [2, 128], strides = [1, 1]} : vector<2x384xf32> to vector<2x128xf32>
    %26 = vector.extract_strided_slice %16 {offsets = [0, 128], sizes = [2, 128], strides = [1, 1]} : vector<2x384xf32> to vector<2x128xf32>
    %27 = arith.addf %25, %26 : vector<2x128xf32>
    %28 = arith.negf %27 : vector<2x128xf32>
    %29 = math.exp %28 : vector<2x128xf32>
    %cst_16 = arith.constant 1.000000e+00 : f32
    %30 = vector.broadcast %cst_16 : f32 to vector<2x128xf32>
    %31 = arith.addf %30, %29 : vector<2x128xf32>
    %32 = arith.divf %30, %31 : vector<2x128xf32>
    %33 = vector.extract_strided_slice %10 {offsets = [0, 256], sizes = [2, 128], strides = [1, 1]} : vector<2x384xf32> to vector<2x128xf32>
    %34 = vector.extract_strided_slice %16 {offsets = [0, 256], sizes = [2, 128], strides = [1, 1]} : vector<2x384xf32> to vector<2x128xf32>
    %35 = arith.mulf %24, %34 : vector<2x128xf32>
    %36 = arith.addf %33, %35 : vector<2x128xf32>
    %37 = math.tanh %36 : vector<2x128xf32>
    %cst_17 = arith.constant 1.000000e+00 : f32
    %38 = vector.broadcast %cst_17 : f32 to vector<2x128xf32>
    %39 = arith.subf %38, %32 : vector<2x128xf32>
    %40 = arith.mulf %39, %37 : vector<2x128xf32>
    %41 = arith.mulf %32, %2 : vector<2x128xf32>
    %42 = arith.addf %40, %41 : vector<2x128xf32>
    %c0_18 = arith.constant 0 : index
    %c0_19 = arith.constant 0 : index
    %43 = vector.load %arg6[%c0_18, %c0_19] : memref<2x128xf32, #tpu.memory_space<vmem>>, vector<2x128xf32>
    tpu.vector_store %arg6[%c0_18, %c0_19], %42 {strides = array<i32>} : memref<2x128xf32, #tpu.memory_space<vmem>>, vector<2x128xf32>,
    %44 = arith.index_cast %c0_i32 : i32 to index
    %c0_20 = arith.constant 0 : index
    %c0_21 = arith.constant 0 : index
    %45 = vector.load %arg5[%44, %c0_20, %c0_21] : memref<8x2x128xf32, #tpu.memory_space<vmem>>, vector<1x2x128xf32>
    %46 = vector.shape_cast %45 : vector<1x2x128xf32> to vector<2x128xf32>
    %47 = vector.shape_cast %42 : vector<2x128xf32> to vector<1x2x128xf32>
    tpu.vector_store %arg5[%44, %c0_20, %c0_21], %47 {strides = array<i32>} : memref<8x2x128xf32, #tpu.memory_space<vmem>>, vector<1x2x128xf32>,
    %c1_i32 = arith.constant 1 : i32
    %c0_22 = arith.constant 0 : index
    %c0_23 = arith.constant 0 : index
    %48 = vector.load %arg6[%c0_22, %c0_23] : memref<2x128xf32, #tpu.memory_space<vmem>>, vector<2x128xf32>
    %49 = arith.index_cast %c1_i32 : i32 to index
    %c0_24 = arith.constant 0 : index
    %c0_25 = arith.constant 0 : index
    %50 = vector.load %arg0[%49, %c0_24, %c0_25] : memref<8x2x128xbf16, #tpu.memory_space<vmem>>, vector<1x2x128xbf16>
    %51 = vector.shape_cast %50 : vector<1x2x128xbf16> to vector<2x128xbf16>
    %c0_26 = arith.constant 0 : index
    %c0_27 = arith.constant 0 : index
    %52 = vector.load %arg1[%c0_26, %c0_27] : memref<128x384xbf16, #tpu.memory_space<vmem>>, vector<128x384xbf16>
    %cst_28 = arith.constant dense<0.000000e+00> : vector<2x384xf32>
    %53 = tpu.matmul %51, %52, %cst_28 {dimension_numbers = #tpu.dot_dimension_numbers<[1], [0], [0], [1], [0, 0, 1, 1], [], []>} : vector<2x128xbf16>, vector<128x384xbf16>, vector<2x384xf32> -> vector<2x384xf32>
    %c0_29 = arith.constant 0 : index
    %c0_30 = arith.constant 0 : index
    %54 = vector.load %arg3[%c0_29, %c0_30] : memref<1x384xf32, #tpu.memory_space<vmem>>, vector<1x384xf32>
    %55 = vector.broadcast %54 : vector<1x384xf32> to vector<2x384xf32>
    %56 = arith.addf %53, %55 : vector<2x384xf32>
    %57 = arith.truncf %48 : vector<2x128xf32> to vector<2x128xbf16>
    %c0_31 = arith.constant 0 : index
    %c0_32 = arith.constant 0 : index
    %58 = vector.load %arg2[%c0_31, %c0_32] : memref<128x384xbf16, #tpu.memory_space<vmem>>, vector<128x384xbf16>
    %cst_33 = arith.constant dense<0.000000e+00> : vector<2x384xf32>
    %59 = tpu.matmul %57, %58, %cst_33 {dimension_numbers = #tpu.dot_dimension_numbers<[1], [0], [0], [1], [0, 0, 1, 1], [], []>} : vector<2x128xbf16>, vector<128x384xbf16>, vector<2x384xf32> -> vector<2x384xf32>
    %c0_34 = arith.constant 0 : index
    %c0_35 = arith.constant 0 : index
    %60 = vector.load %arg4[%c0_34, %c0_35] : memref<1x384xf32, #tpu.memory_space<vmem>>, vector<1x384xf32>
    %61 = vector.broadcast %60 : vector<1x384xf32> to vector<2x384xf32>
    %62 = arith.addf %59, %61 : vector<2x384xf32>
    %63 = vector.extract_strided_slice %56 {offsets = [0, 0], sizes = [2, 128], strides = [1, 1]} : vector<2x384xf32> to vector<2x128xf32>
    %64 = vector.extract_strided_slice %62 {offsets = [0, 0], sizes = [2, 128], strides = [1, 1]} : vector<2x384xf32> to vector<2x128xf32>
    %65 = arith.addf %63, %64 : vector<2x128xf32>
    %66 = arith.negf %65 : vector<2x128xf32>
    %67 = math.exp %66 : vector<2x128xf32>
    %cst_36 = arith.constant 1.000000e+00 : f32
    %68 = vector.broadcast %cst_36 : f32 to vector<2x128xf32>
    %69 = arith.addf %68, %67 : vector<2x128xf32>
    %70 = arith.divf %68, %69 : vector<2x128xf32>
    %71 = vector.extract_strided_slice %56 {offsets = [0, 128], sizes = [2, 128], strides = [1, 1]} : vector<2x384xf32> to vector<2x128xf32>
    %72 = vector.extract_strided_slice %62 {offsets = [0, 128], sizes = [2, 128], strides = [1, 1]} : vector<2x384xf32> to vector<2x128xf32>
    %73 = arith.addf %71, %72 : vector<2x128xf32>
    %74 = arith.negf %73 : vector<2x128xf32>
    %75 = math.exp %74 : vector<2x128xf32>
    %cst_37 = arith.constant 1.000000e+00 : f32
    %76 = vector.broadcast %cst_37 : f32 to vector<2x128xf32>
    %77 = arith.addf %76, %75 : vector<2x128xf32>
    %78 = arith.divf %76, %77 : vector<2x128xf32>
    %79 = vector.extract_strided_slice %56 {offsets = [0, 256], sizes = [2, 128], strides = [1, 1]} : vector<2x384xf32> to vector<2x128xf32>
    %80 = vector.extract_strided_slice %62 {offsets = [0, 256], sizes = [2, 128], strides = [1, 1]} : vector<2x384xf32> to vector<2x128xf32>
    %81 = arith.mulf %70, %80 : vector<2x128xf32>
    %82 = arith.addf %79, %81 : vector<2x128xf32>
    %83 = math.tanh %82 : vector<2x128xf32>
    %cst_38 = arith.constant 1.000000e+00 : f32
    %84 = vector.broadcast %cst_38 : f32 to vector<2x128xf32>
    %85 = arith.subf %84, %78 : vector<2x128xf32>
    %86 = arith.mulf %85, %83 : vector<2x128xf32>
    %87 = arith.mulf %78, %48 : vector<2x128xf32>
    %88 = arith.addf %86, %87 : vector<2x128xf32>
    %c0_39 = arith.constant 0 : index
    %c0_40 = arith.constant 0 : index
    %89 = vector.load %arg6[%c0_39, %c0_40] : memref<2x128xf32, #tpu.memory_space<vmem>>, vector<2x128xf32>
    tpu.vector_store %arg6[%c0_39, %c0_40], %88 {strides = array<i32>} : memref<2x128xf32, #tpu.memory_space<vmem>>, vector<2x128xf32>,
    %90 = arith.index_cast %c1_i32 : i32 to index
    %c0_41 = arith.constant 0 : index
    %c0_42 = arith.constant 0 : index
    %91 = vector.load %arg5[%90, %c0_41, %c0_42] : memref<8x2x128xf32, #tpu.memory_space<vmem>>, vector<1x2x128xf32>
    %92 = vector.shape_cast %91 : vector<1x2x128xf32> to vector<2x128xf32>
    %93 = vector.shape_cast %88 : vector<2x128xf32> to vector<1x2x128xf32>
    tpu.vector_store %arg5[%90, %c0_41, %c0_42], %93 {strides = array<i32>} : memref<8x2x128xf32, #tpu.memory_space<vmem>>, vector<1x2x128xf32>,
    %c2_i32 = arith.constant 2 : i32
    %c0_43 = arith.constant 0 : index
    %c0_44 = arith.constant 0 : index
    %94 = vector.load %arg6[%c0_43, %c0_44] : memref<2x128xf32, #tpu.memory_space<vmem>>, vector<2x128xf32>
    %95 = arith.index_cast %c2_i32 : i32 to index
    %c0_45 = arith.constant 0 : index
    %c0_46 = arith.constant 0 : index
    %96 = vector.load %arg0[%95, %c0_45, %c0_46] : memref<8x2x128xbf16, #tpu.memory_space<vmem>>, vector<1x2x128xbf16>
    %97 = vector.shape_cast %96 : vector<1x2x128xbf16> to vector<2x128xbf16>
    %c0_47 = arith.constant 0 : index
    %c0_48 = arith.constant 0 : index
    %98 = vector.load %arg1[%c0_47, %c0_48] : memref<128x384xbf16, #tpu.memory_space<vmem>>, vector<128x384xbf16>
    %cst_49 = arith.constant dense<0.000000e+00> : vector<2x384xf32>
    %99 = tpu.matmul %97, %98, %cst_49 {dimension_numbers = #tpu.dot_dimension_numbers<[1], [0], [0], [1], [0, 0, 1, 1], [], []>} : vector<2x128xbf16>, vector<128x384xbf16>, vector<2x384xf32> -> vector<2x384xf32>
    %c0_50 = arith.constant 0 : index
    %c0_51 = arith.constant 0 : index
    %100 = vector.load %arg3[%c0_50, %c0_51] : memref<1x384xf32, #tpu.memory_space<vmem>>, vector<1x384xf32>
    %101 = vector.broadcast %100 : vector<1x384xf32> to vector<2x384xf32>
    %102 = arith.addf %99, %101 : vector<2x384xf32>
    %103 = arith.truncf %94 : vector<2x128xf32> to vector<2x128xbf16>
    %c0_52 = arith.constant 0 : index
    %c0_53 = arith.constant 0 : index
    %104 = vector.load %arg2[%c0_52, %c0_53] : memref<128x384xbf16, #tpu.memory_space<vmem>>, vector<128x384xbf16>
    %cst_54 = arith.constant dense<0.000000e+00> : vector<2x384xf32>
    %105 = tpu.matmul %103, %104, %cst_54 {dimension_numbers = #tpu.dot_dimension_numbers<[1], [0], [0], [1], [0, 0, 1, 1], [], []>} : vector<2x128xbf16>, vector<128x384xbf16>, vector<2x384xf32> -> vector<2x384xf32>
    %c0_55 = arith.constant 0 : index
    %c0_56 = arith.constant 0 : index
    %106 = vector.load %arg4[%c0_55, %c0_56] : memref<1x384xf32, #tpu.memory_space<vmem>>, vector<1x384xf32>
    %107 = vector.broadcast %106 : vector<1x384xf32> to vector<2x384xf32>
    %108 = arith.addf %105, %107 : vector<2x384xf32>
    %109 = vector.extract_strided_slice %102 {offsets = [0, 0], sizes = [2, 128], strides = [1, 1]} : vector<2x384xf32> to vector<2x128xf32>
    %110 = vector.extract_strided_slice %108 {offsets = [0, 0], sizes = [2, 128], strides = [1, 1]} : vector<2x384xf32> to vector<2x128xf32>
    %111 = arith.addf %109, %110 : vector<2x128xf32>
    %112 = arith.negf %111 : vector<2x128xf32>
    %113 = math.exp %112 : vector<2x128xf32>
    %cst_57 = arith.constant 1.000000e+00 : f32
    %114 = vector.broadcast %cst_57 : f32 to vector<2x128xf32>
    %115 = arith.addf %114, %113 : vector<2x128xf32>
    %116 = arith.divf %114, %115 : vector<2x128xf32>
    %117 = vector.extract_strided_slice %102 {offsets = [0, 128], sizes = [2, 128], strides = [1, 1]} : vector<2x384xf32> to vector<2x128xf32>
    %118 = vector.extract_strided_slice %108 {offsets = [0, 128], sizes = [2, 128], strides = [1, 1]} : vector<2x384xf32> to vector<2x128xf32>
    %119 = arith.addf %117, %118 : vector<2x128xf32>
    %120 = arith.negf %119 : vector<2x128xf32>
    %121 = math.exp %120 : vector<2x128xf32>
    %cst_58 = arith.constant 1.000000e+00 : f32
    %122 = vector.broadcast %cst_58 : f32 to vector<2x128xf32>
    %123 = arith.addf %122, %121 : vector<2x128xf32>
    %124 = arith.divf %122, %123 : vector<2x128xf32>
    %125 = vector.extract_strided_slice %102 {offsets = [0, 256], sizes = [2, 128], strides = [1, 1]} : vector<2x384xf32> to vector<2x128xf32>
    %126 = vector.extract_strided_slice %108 {offsets = [0, 256], sizes = [2, 128], strides = [1, 1]} : vector<2x384xf32> to vector<2x128xf32>
    %127 = arith.mulf %116, %126 : vector<2x128xf32>
    %128 = arith.addf %125, %127 : vector<2x128xf32>
    %129 = math.tanh %128 : vector<2x128xf32>
    %cst_59 = arith.constant 1.000000e+00 : f32
    %130 = vector.broadcast %cst_59 : f32 to vector<2x128xf32>
    %131 = arith.subf %130, %124 : vector<2x128xf32>
    %132 = arith.mulf %131, %129 : vector<2x128xf32>
    %133 = arith.mulf %124, %94 : vector<2x128xf32>
    %134 = arith.addf %132, %133 : vector<2x128xf32>
    %c0_60 = arith.constant 0 : index
    %c0_61 = arith.constant 0 : index
    %135 = vector.load %arg6[%c0_60, %c0_61] : memref<2x128xf32, #tpu.memory_space<vmem>>, vector<2x128xf32>
    tpu.vector_store %arg6[%c0_60, %c0_61], %134 {strides = array<i32>} : memref<2x128xf32, #tpu.memory_space<vmem>>, vector<2x128xf32>,
    %136 = arith.index_cast %c2_i32 : i32 to index
    %c0_62 = arith.constant 0 : index
    %c0_63 = arith.constant 0 : index
    %137 = vector.load %arg5[%136, %c0_62, %c0_63] : memref<8x2x128xf32, #tpu.memory_space<vmem>>, vector<1x2x128xf32>
    %138 = vector.shape_cast %137 : vector<1x2x128xf32> to vector<2x128xf32>
    %139 = vector.shape_cast %134 : vector<2x128xf32> to vector<1x2x128xf32>
    tpu.vector_store %arg5[%136, %c0_62, %c0_63], %139 {strides = array<i32>} : memref<8x2x128xf32, #tpu.memory_space<vmem>>, vector<1x2x128xf32>,
    %c3_i32 = arith.constant 3 : i32
    %c0_64 = arith.constant 0 : index
    %c0_65 = arith.constant 0 : index
    %140 = vector.load %arg6[%c0_64, %c0_65] : memref<2x128xf32, #tpu.memory_space<vmem>>, vector<2x128xf32>
    %141 = arith.index_cast %c3_i32 : i32 to index
    %c0_66 = arith.constant 0 : index
    %c0_67 = arith.constant 0 : index
    %142 = vector.load %arg0[%141, %c0_66, %c0_67] : memref<8x2x128xbf16, #tpu.memory_space<vmem>>, vector<1x2x128xbf16>
    %143 = vector.shape_cast %142 : vector<1x2x128xbf16> to vector<2x128xbf16>
    %c0_68 = arith.constant 0 : index
    %c0_69 = arith.constant 0 : index
    %144 = vector.load %arg1[%c0_68, %c0_69] : memref<128x384xbf16, #tpu.memory_space<vmem>>, vector<128x384xbf16>
    %cst_70 = arith.constant dense<0.000000e+00> : vector<2x384xf32>
    %145 = tpu.matmul %143, %144, %cst_70 {dimension_numbers = #tpu.dot_dimension_numbers<[1], [0], [0], [1], [0, 0, 1, 1], [], []>} : vector<2x128xbf16>, vector<128x384xbf16>, vector<2x384xf32> -> vector<2x384xf32>
    %c0_71 = arith.constant 0 : index
    %c0_72 = arith.constant 0 : index
    %146 = vector.load %arg3[%c0_71, %c0_72] : memref<1x384xf32, #tpu.memory_space<vmem>>, vector<1x384xf32>
    %147 = vector.broadcast %146 : vector<1x384xf32> to vector<2x384xf32>
    %148 = arith.addf %145, %147 : vector<2x384xf32>
    %149 = arith.truncf %140 : vector<2x128xf32> to vector<2x128xbf16>
    %c0_73 = arith.constant 0 : index
    %c0_74 = arith.constant 0 : index
    %150 = vector.load %arg2[%c0_73, %c0_74] : memref<128x384xbf16, #tpu.memory_space<vmem>>, vector<128x384xbf16>
    %cst_75 = arith.constant dense<0.000000e+00> : vector<2x384xf32>
    %151 = tpu.matmul %149, %150, %cst_75 {dimension_numbers = #tpu.dot_dimension_numbers<[1], [0], [0], [1], [0, 0, 1, 1], [], []>} : vector<2x128xbf16>, vector<128x384xbf16>, vector<2x384xf32> -> vector<2x384xf32>
    %c0_76 = arith.constant 0 : index
    %c0_77 = arith.constant 0 : index
    %152 = vector.load %arg4[%c0_76, %c0_77] : memref<1x384xf32, #tpu.memory_space<vmem>>, vector<1x384xf32>
    %153 = vector.broadcast %152 : vector<1x384xf32> to vector<2x384xf32>
    %154 = arith.addf %151, %153 : vector<2x384xf32>
    %155 = vector.extract_strided_slice %148 {offsets = [0, 0], sizes = [2, 128], strides = [1, 1]} : vector<2x384xf32> to vector<2x128xf32>
    %156 = vector.extract_strided_slice %154 {offsets = [0, 0], sizes = [2, 128], strides = [1, 1]} : vector<2x384xf32> to vector<2x128xf32>
    %157 = arith.addf %155, %156 : vector<2x128xf32>
    %158 = arith.negf %157 : vector<2x128xf32>
    %159 = math.exp %158 : vector<2x128xf32>
    %cst_78 = arith.constant 1.000000e+00 : f32
    %160 = vector.broadcast %cst_78 : f32 to vector<2x128xf32>
    %161 = arith.addf %160, %159 : vector<2x128xf32>
    %162 = arith.divf %160, %161 : vector<2x128xf32>
    %163 = vector.extract_strided_slice %148 {offsets = [0, 128], sizes = [2, 128], strides = [1, 1]} : vector<2x384xf32> to vector<2x128xf32>
    %164 = vector.extract_strided_slice %154 {offsets = [0, 128], sizes = [2, 128], strides = [1, 1]} : vector<2x384xf32> to vector<2x128xf32>
    %165 = arith.addf %163, %164 : vector<2x128xf32>
    %166 = arith.negf %165 : vector<2x128xf32>
    %167 = math.exp %166 : vector<2x128xf32>
    %cst_79 = arith.constant 1.000000e+00 : f32
    %168 = vector.broadcast %cst_79 : f32 to vector<2x128xf32>
    %169 = arith.addf %168, %167 : vector<2x128xf32>
    %170 = arith.divf %168, %169 : vector<2x128xf32>
    %171 = vector.extract_strided_slice %148 {offsets = [0, 256], sizes = [2, 128], strides = [1, 1]} : vector<2x384xf32> to vector<2x128xf32>
    %172 = vector.extract_strided_slice %154 {offsets = [0, 256], sizes = [2, 128], strides = [1, 1]} : vector<2x384xf32> to vector<2x128xf32>
    %173 = arith.mulf %162, %172 : vector<2x128xf32>
    %174 = arith.addf %171, %173 : vector<2x128xf32>
    %175 = math.tanh %174 : vector<2x128xf32>
    %cst_80 = arith.constant 1.000000e+00 : f32
    %176 = vector.broadcast %cst_80 : f32 to vector<2x128xf32>
    %177 = arith.subf %176, %170 : vector<2x128xf32>
    %178 = arith.mulf %177, %175 : vector<2x128xf32>
    %179 = arith.mulf %170, %140 : vector<2x128xf32>
    %180 = arith.addf %178, %179 : vector<2x128xf32>
    %c0_81 = arith.constant 0 : index
    %c0_82 = arith.constant 0 : index
    %181 = vector.load %arg6[%c0_81, %c0_82] : memref<2x128xf32, #tpu.memory_space<vmem>>, vector<2x128xf32>
    tpu.vector_store %arg6[%c0_81, %c0_82], %180 {strides = array<i32>} : memref<2x128xf32, #tpu.memory_space<vmem>>, vector<2x128xf32>,
    %182 = arith.index_cast %c3_i32 : i32 to index
    %c0_83 = arith.constant 0 : index
    %c0_84 = arith.constant 0 : index
    %183 = vector.load %arg5[%182, %c0_83, %c0_84] : memref<8x2x128xf32, #tpu.memory_space<vmem>>, vector<1x2x128xf32>
    %184 = vector.shape_cast %183 : vector<1x2x128xf32> to vector<2x128xf32>
    %185 = vector.shape_cast %180 : vector<2x128xf32> to vector<1x2x128xf32>
    tpu.vector_store %arg5[%182, %c0_83, %c0_84], %185 {strides = array<i32>} : memref<8x2x128xf32, #tpu.memory_space<vmem>>, vector<1x2x128xf32>,
    %c4_i32 = arith.constant 4 : i32
    %c0_85 = arith.constant 0 : index
    %c0_86 = arith.constant 0 : index
    %186 = vector.load %arg6[%c0_85, %c0_86] : memref<2x128xf32, #tpu.memory_space<vmem>>, vector<2x128xf32>
    %187 = arith.index_cast %c4_i32 : i32 to index
    %c0_87 = arith.constant 0 : index
    %c0_88 = arith.constant 0 : index
    %188 = vector.load %arg0[%187, %c0_87, %c0_88] : memref<8x2x128xbf16, #tpu.memory_space<vmem>>, vector<1x2x128xbf16>
    %189 = vector.shape_cast %188 : vector<1x2x128xbf16> to vector<2x128xbf16>
    %c0_89 = arith.constant 0 : index
    %c0_90 = arith.constant 0 : index
    %190 = vector.load %arg1[%c0_89, %c0_90] : memref<128x384xbf16, #tpu.memory_space<vmem>>, vector<128x384xbf16>
    %cst_91 = arith.constant dense<0.000000e+00> : vector<2x384xf32>
    %191 = tpu.matmul %189, %190, %cst_91 {dimension_numbers = #tpu.dot_dimension_numbers<[1], [0], [0], [1], [0, 0, 1, 1], [], []>} : vector<2x128xbf16>, vector<128x384xbf16>, vector<2x384xf32> -> vector<2x384xf32>
    %c0_92 = arith.constant 0 : index
    %c0_93 = arith.constant 0 : index
    %192 = vector.load %arg3[%c0_92, %c0_93] : memref<1x384xf32, #tpu.memory_space<vmem>>, vector<1x384xf32>
    %193 = vector.broadcast %192 : vector<1x384xf32> to vector<2x384xf32>
    %194 = arith.addf %191, %193 : vector<2x384xf32>
    %195 = arith.truncf %186 : vector<2x128xf32> to vector<2x128xbf16>
    %c0_94 = arith.constant 0 : index
    %c0_95 = arith.constant 0 : index
    %196 = vector.load %arg2[%c0_94, %c0_95] : memref<128x384xbf16, #tpu.memory_space<vmem>>, vector<128x384xbf16>
    %cst_96 = arith.constant dense<0.000000e+00> : vector<2x384xf32>
    %197 = tpu.matmul %195, %196, %cst_96 {dimension_numbers = #tpu.dot_dimension_numbers<[1], [0], [0], [1], [0, 0, 1, 1], [], []>} : vector<2x128xbf16>, vector<128x384xbf16>, vector<2x384xf32> -> vector<2x384xf32>
    %c0_97 = arith.constant 0 : index
    %c0_98 = arith.constant 0 : index
    %198 = vector.load %arg4[%c0_97, %c0_98] : memref<1x384xf32, #tpu.memory_space<vmem>>, vector<1x384xf32>
    %199 = vector.broadcast %198 : vector<1x384xf32> to vector<2x384xf32>
    %200 = arith.addf %197, %199 : vector<2x384xf32>
    %201 = vector.extract_strided_slice %194 {offsets = [0, 0], sizes = [2, 128], strides = [1, 1]} : vector<2x384xf32> to vector<2x128xf32>
    %202 = vector.extract_strided_slice %200 {offsets = [0, 0], sizes = [2, 128], strides = [1, 1]} : vector<2x384xf32> to vector<2x128xf32>
    %203 = arith.addf %201, %202 : vector<2x128xf32>
    %204 = arith.negf %203 : vector<2x128xf32>
    %205 = math.exp %204 : vector<2x128xf32>
    %cst_99 = arith.constant 1.000000e+00 : f32
    %206 = vector.broadcast %cst_99 : f32 to vector<2x128xf32>
    %207 = arith.addf %206, %205 : vector<2x128xf32>
    %208 = arith.divf %206, %207 : vector<2x128xf32>
    %209 = vector.extract_strided_slice %194 {offsets = [0, 128], sizes = [2, 128], strides = [1, 1]} : vector<2x384xf32> to vector<2x128xf32>
    %210 = vector.extract_strided_slice %200 {offsets = [0, 128], sizes = [2, 128], strides = [1, 1]} : vector<2x384xf32> to vector<2x128xf32>
    %211 = arith.addf %209, %210 : vector<2x128xf32>
    %212 = arith.negf %211 : vector<2x128xf32>
    %213 = math.exp %212 : vector<2x128xf32>
    %cst_100 = arith.constant 1.000000e+00 : f32
    %214 = vector.broadcast %cst_100 : f32 to vector<2x128xf32>
    %215 = arith.addf %214, %213 : vector<2x128xf32>
    %216 = arith.divf %214, %215 : vector<2x128xf32>
    %217 = vector.extract_strided_slice %194 {offsets = [0, 256], sizes = [2, 128], strides = [1, 1]} : vector<2x384xf32> to vector<2x128xf32>
    %218 = vector.extract_strided_slice %200 {offsets = [0, 256], sizes = [2, 128], strides = [1, 1]} : vector<2x384xf32> to vector<2x128xf32>
    %219 = arith.mulf %208, %218 : vector<2x128xf32>
    %220 = arith.addf %217, %219 : vector<2x128xf32>
    %221 = math.tanh %220 : vector<2x128xf32>
    %cst_101 = arith.constant 1.000000e+00 : f32
    %222 = vector.broadcast %cst_101 : f32 to vector<2x128xf32>
    %223 = arith.subf %222, %216 : vector<2x128xf32>
    %224 = arith.mulf %223, %221 : vector<2x128xf32>
    %225 = arith.mulf %216, %186 : vector<2x128xf32>
    %226 = arith.addf %224, %225 : vector<2x128xf32>
    %c0_102 = arith.constant 0 : index
    %c0_103 = arith.constant 0 : index
    %227 = vector.load %arg6[%c0_102, %c0_103] : memref<2x128xf32, #tpu.memory_space<vmem>>, vector<2x128xf32>
    tpu.vector_store %arg6[%c0_102, %c0_103], %226 {strides = array<i32>} : memref<2x128xf32, #tpu.memory_space<vmem>>, vector<2x128xf32>,
    %228 = arith.index_cast %c4_i32 : i32 to index
    %c0_104 = arith.constant 0 : index
    %c0_105 = arith.constant 0 : index
    %229 = vector.load %arg5[%228, %c0_104, %c0_105] : memref<8x2x128xf32, #tpu.memory_space<vmem>>, vector<1x2x128xf32>
    %230 = vector.shape_cast %229 : vector<1x2x128xf32> to vector<2x128xf32>
    %231 = vector.shape_cast %226 : vector<2x128xf32> to vector<1x2x128xf32>
    tpu.vector_store %arg5[%228, %c0_104, %c0_105], %231 {strides = array<i32>} : memref<8x2x128xf32, #tpu.memory_space<vmem>>, vector<1x2x128xf32>,
    %c5_i32 = arith.constant 5 : i32
    %c0_106 = arith.constant 0 : index
    %c0_107 = arith.constant 0 : index
    %232 = vector.load %arg6[%c0_106, %c0_107] : memref<2x128xf32, #tpu.memory_space<vmem>>, vector<2x128xf32>
    %233 = arith.index_cast %c5_i32 : i32 to index
    %c0_108 = arith.constant 0 : index
    %c0_109 = arith.constant 0 : index
    %234 = vector.load %arg0[%233, %c0_108, %c0_109] : memref<8x2x128xbf16, #tpu.memory_space<vmem>>, vector<1x2x128xbf16>
    %235 = vector.shape_cast %234 : vector<1x2x128xbf16> to vector<2x128xbf16>
    %c0_110 = arith.constant 0 : index
    %c0_111 = arith.constant 0 : index
    %236 = vector.load %arg1[%c0_110, %c0_111] : memref<128x384xbf16, #tpu.memory_space<vmem>>, vector<128x384xbf16>
    %cst_112 = arith.constant dense<0.000000e+00> : vector<2x384xf32>
    %237 = tpu.matmul %235, %236, %cst_112 {dimension_numbers = #tpu.dot_dimension_numbers<[1], [0], [0], [1], [0, 0, 1, 1], [], []>} : vector<2x128xbf16>, vector<128x384xbf16>, vector<2x384xf32> -> vector<2x384xf32>
    %c0_113 = arith.constant 0 : index
    %c0_114 = arith.constant 0 : index
    %238 = vector.load %arg3[%c0_113, %c0_114] : memref<1x384xf32, #tpu.memory_space<vmem>>, vector<1x384xf32>
    %239 = vector.broadcast %238 : vector<1x384xf32> to vector<2x384xf32>
    %240 = arith.addf %237, %239 : vector<2x384xf32>
    %241 = arith.truncf %232 : vector<2x128xf32> to vector<2x128xbf16>
    %c0_115 = arith.constant 0 : index
    %c0_116 = arith.constant 0 : index
    %242 = vector.load %arg2[%c0_115, %c0_116] : memref<128x384xbf16, #tpu.memory_space<vmem>>, vector<128x384xbf16>
    %cst_117 = arith.constant dense<0.000000e+00> : vector<2x384xf32>
    %243 = tpu.matmul %241, %242, %cst_117 {dimension_numbers = #tpu.dot_dimension_numbers<[1], [0], [0], [1], [0, 0, 1, 1], [], []>} : vector<2x128xbf16>, vector<128x384xbf16>, vector<2x384xf32> -> vector<2x384xf32>
    %c0_118 = arith.constant 0 : index
    %c0_119 = arith.constant 0 : index
    %244 = vector.load %arg4[%c0_118, %c0_119] : memref<1x384xf32, #tpu.memory_space<vmem>>, vector<1x384xf32>
    %245 = vector.broadcast %244 : vector<1x384xf32> to vector<2x384xf32>
    %246 = arith.addf %243, %245 : vector<2x384xf32>
    %247 = vector.extract_strided_slice %240 {offsets = [0, 0], sizes = [2, 128], strides = [1, 1]} : vector<2x384xf32> to vector<2x128xf32>
    %248 = vector.extract_strided_slice %246 {offsets = [0, 0], sizes = [2, 128], strides = [1, 1]} : vector<2x384xf32> to vector<2x128xf32>
    %249 = arith.addf %247, %248 : vector<2x128xf32>
    %250 = arith.negf %249 : vector<2x128xf32>
    %251 = math.exp %250 : vector<2x128xf32>
    %cst_120 = arith.constant 1.000000e+00 : f32
    %252 = vector.broadcast %cst_120 : f32 to vector<2x128xf32>
    %253 = arith.addf %252, %251 : vector<2x128xf32>
    %254 = arith.divf %252, %253 : vector<2x128xf32>
    %255 = vector.extract_strided_slice %240 {offsets = [0, 128], sizes = [2, 128], strides = [1, 1]} : vector<2x384xf32> to vector<2x128xf32>
    %256 = vector.extract_strided_slice %246 {offsets = [0, 128], sizes = [2, 128], strides = [1, 1]} : vector<2x384xf32> to vector<2x128xf32>
    %257 = arith.addf %255, %256 : vector<2x128xf32>
    %258 = arith.negf %257 : vector<2x128xf32>
    %259 = math.exp %258 : vector<2x128xf32>
    %cst_121 = arith.constant 1.000000e+00 : f32
    %260 = vector.broadcast %cst_121 : f32 to vector<2x128xf32>
    %261 = arith.addf %260, %259 : vector<2x128xf32>
    %262 = arith.divf %260, %261 : vector<2x128xf32>
    %263 = vector.extract_strided_slice %240 {offsets = [0, 256], sizes = [2, 128], strides = [1, 1]} : vector<2x384xf32> to vector<2x128xf32>
    %264 = vector.extract_strided_slice %246 {offsets = [0, 256], sizes = [2, 128], strides = [1, 1]} : vector<2x384xf32> to vector<2x128xf32>
    %265 = arith.mulf %254, %264 : vector<2x128xf32>
    %266 = arith.addf %263, %265 : vector<2x128xf32>
    %267 = math.tanh %266 : vector<2x128xf32>
    %cst_122 = arith.constant 1.000000e+00 : f32
    %268 = vector.broadcast %cst_122 : f32 to vector<2x128xf32>
    %269 = arith.subf %268, %262 : vector<2x128xf32>
    %270 = arith.mulf %269, %267 : vector<2x128xf32>
    %271 = arith.mulf %262, %232 : vector<2x128xf32>
    %272 = arith.addf %270, %271 : vector<2x128xf32>
    %c0_123 = arith.constant 0 : index
    %c0_124 = arith.constant 0 : index
    %273 = vector.load %arg6[%c0_123, %c0_124] : memref<2x128xf32, #tpu.memory_space<vmem>>, vector<2x128xf32>
    tpu.vector_store %arg6[%c0_123, %c0_124], %272 {strides = array<i32>} : memref<2x128xf32, #tpu.memory_space<vmem>>, vector<2x128xf32>,
    %274 = arith.index_cast %c5_i32 : i32 to index
    %c0_125 = arith.constant 0 : index
    %c0_126 = arith.constant 0 : index
    %275 = vector.load %arg5[%274, %c0_125, %c0_126] : memref<8x2x128xf32, #tpu.memory_space<vmem>>, vector<1x2x128xf32>
    %276 = vector.shape_cast %275 : vector<1x2x128xf32> to vector<2x128xf32>
    %277 = vector.shape_cast %272 : vector<2x128xf32> to vector<1x2x128xf32>
    tpu.vector_store %arg5[%274, %c0_125, %c0_126], %277 {strides = array<i32>} : memref<8x2x128xf32, #tpu.memory_space<vmem>>, vector<1x2x128xf32>,
    %c6_i32 = arith.constant 6 : i32
    %c0_127 = arith.constant 0 : index
    %c0_128 = arith.constant 0 : index
    %278 = vector.load %arg6[%c0_127, %c0_128] : memref<2x128xf32, #tpu.memory_space<vmem>>, vector<2x128xf32>
    %279 = arith.index_cast %c6_i32 : i32 to index
    %c0_129 = arith.constant 0 : index
    %c0_130 = arith.constant 0 : index
    %280 = vector.load %arg0[%279, %c0_129, %c0_130] : memref<8x2x128xbf16, #tpu.memory_space<vmem>>, vector<1x2x128xbf16>
    %281 = vector.shape_cast %280 : vector<1x2x128xbf16> to vector<2x128xbf16>
    %c0_131 = arith.constant 0 : index
    %c0_132 = arith.constant 0 : index
    %282 = vector.load %arg1[%c0_131, %c0_132] : memref<128x384xbf16, #tpu.memory_space<vmem>>, vector<128x384xbf16>
    %cst_133 = arith.constant dense<0.000000e+00> : vector<2x384xf32>
    %283 = tpu.matmul %281, %282, %cst_133 {dimension_numbers = #tpu.dot_dimension_numbers<[1], [0], [0], [1], [0, 0, 1, 1], [], []>} : vector<2x128xbf16>, vector<128x384xbf16>, vector<2x384xf32> -> vector<2x384xf32>
    %c0_134 = arith.constant 0 : index
    %c0_135 = arith.constant 0 : index
    %284 = vector.load %arg3[%c0_134, %c0_135] : memref<1x384xf32, #tpu.memory_space<vmem>>, vector<1x384xf32>
    %285 = vector.broadcast %284 : vector<1x384xf32> to vector<2x384xf32>
    %286 = arith.addf %283, %285 : vector<2x384xf32>
    %287 = arith.truncf %278 : vector<2x128xf32> to vector<2x128xbf16>
    %c0_136 = arith.constant 0 : index
    %c0_137 = arith.constant 0 : index
    %288 = vector.load %arg2[%c0_136, %c0_137] : memref<128x384xbf16, #tpu.memory_space<vmem>>, vector<128x384xbf16>
    %cst_138 = arith.constant dense<0.000000e+00> : vector<2x384xf32>
    %289 = tpu.matmul %287, %288, %cst_138 {dimension_numbers = #tpu.dot_dimension_numbers<[1], [0], [0], [1], [0, 0, 1, 1], [], []>} : vector<2x128xbf16>, vector<128x384xbf16>, vector<2x384xf32> -> vector<2x384xf32>
    %c0_139 = arith.constant 0 : index
    %c0_140 = arith.constant 0 : index
    %290 = vector.load %arg4[%c0_139, %c0_140] : memref<1x384xf32, #tpu.memory_space<vmem>>, vector<1x384xf32>
    %291 = vector.broadcast %290 : vector<1x384xf32> to vector<2x384xf32>
    %292 = arith.addf %289, %291 : vector<2x384xf32>
    %293 = vector.extract_strided_slice %286 {offsets = [0, 0], sizes = [2, 128], strides = [1, 1]} : vector<2x384xf32> to vector<2x128xf32>
    %294 = vector.extract_strided_slice %292 {offsets = [0, 0], sizes = [2, 128], strides = [1, 1]} : vector<2x384xf32> to vector<2x128xf32>
    %295 = arith.addf %293, %294 : vector<2x128xf32>
    %296 = arith.negf %295 : vector<2x128xf32>
    %297 = math.exp %296 : vector<2x128xf32>
    %cst_141 = arith.constant 1.000000e+00 : f32
    %298 = vector.broadcast %cst_141 : f32 to vector<2x128xf32>
    %299 = arith.addf %298, %297 : vector<2x128xf32>
    %300 = arith.divf %298, %299 : vector<2x128xf32>
    %301 = vector.extract_strided_slice %286 {offsets = [0, 128], sizes = [2, 128], strides = [1, 1]} : vector<2x384xf32> to vector<2x128xf32>
    %302 = vector.extract_strided_slice %292 {offsets = [0, 128], sizes = [2, 128], strides = [1, 1]} : vector<2x384xf32> to vector<2x128xf32>
    %303 = arith.addf %301, %302 : vector<2x128xf32>
    %304 = arith.negf %303 : vector<2x128xf32>
    %305 = math.exp %304 : vector<2x128xf32>
    %cst_142 = arith.constant 1.000000e+00 : f32
    %306 = vector.broadcast %cst_142 : f32 to vector<2x128xf32>
    %307 = arith.addf %306, %305 : vector<2x128xf32>
    %308 = arith.divf %306, %307 : vector<2x128xf32>
    %309 = vector.extract_strided_slice %286 {offsets = [0, 256], sizes = [2, 128], strides = [1, 1]} : vector<2x384xf32> to vector<2x128xf32>
    %310 = vector.extract_strided_slice %292 {offsets = [0, 256], sizes = [2, 128], strides = [1, 1]} : vector<2x384xf32> to vector<2x128xf32>
    %311 = arith.mulf %300, %310 : vector<2x128xf32>
    %312 = arith.addf %309, %311 : vector<2x128xf32>
    %313 = math.tanh %312 : vector<2x128xf32>
    %cst_143 = arith.constant 1.000000e+00 : f32
    %314 = vector.broadcast %cst_143 : f32 to vector<2x128xf32>
    %315 = arith.subf %314, %308 : vector<2x128xf32>
    %316 = arith.mulf %315, %313 : vector<2x128xf32>
    %317 = arith.mulf %308, %278 : vector<2x128xf32>
    %318 = arith.addf %316, %317 : vector<2x128xf32>
    %c0_144 = arith.constant 0 : index
    %c0_145 = arith.constant 0 : index
    %319 = vector.load %arg6[%c0_144, %c0_145] : memref<2x128xf32, #tpu.memory_space<vmem>>, vector<2x128xf32>
    tpu.vector_store %arg6[%c0_144, %c0_145], %318 {strides = array<i32>} : memref<2x128xf32, #tpu.memory_space<vmem>>, vector<2x128xf32>,
    %320 = arith.index_cast %c6_i32 : i32 to index
    %c0_146 = arith.constant 0 : index
    %c0_147 = arith.constant 0 : index
    %321 = vector.load %arg5[%320, %c0_146, %c0_147] : memref<8x2x128xf32, #tpu.memory_space<vmem>>, vector<1x2x128xf32>
    %322 = vector.shape_cast %321 : vector<1x2x128xf32> to vector<2x128xf32>
    %323 = vector.shape_cast %318 : vector<2x128xf32> to vector<1x2x128xf32>
    tpu.vector_store %arg5[%320, %c0_146, %c0_147], %323 {strides = array<i32>} : memref<8x2x128xf32, #tpu.memory_space<vmem>>, vector<1x2x128xf32>,
    %c7_i32 = arith.constant 7 : i32
    %c0_148 = arith.constant 0 : index
    %c0_149 = arith.constant 0 : index
    %324 = vector.load %arg6[%c0_148, %c0_149] : memref<2x128xf32, #tpu.memory_space<vmem>>, vector<2x128xf32>
    %325 = arith.index_cast %c7_i32 : i32 to index
    %c0_150 = arith.constant 0 : index
    %c0_151 = arith.constant 0 : index
    %326 = vector.load %arg0[%325, %c0_150, %c0_151] : memref<8x2x128xbf16, #tpu.memory_space<vmem>>, vector<1x2x128xbf16>
    %327 = vector.shape_cast %326 : vector<1x2x128xbf16> to vector<2x128xbf16>
    %c0_152 = arith.constant 0 : index
    %c0_153 = arith.constant 0 : index
    %328 = vector.load %arg1[%c0_152, %c0_153] : memref<128x384xbf16, #tpu.memory_space<vmem>>, vector<128x384xbf16>
    %cst_154 = arith.constant dense<0.000000e+00> : vector<2x384xf32>
    %329 = tpu.matmul %327, %328, %cst_154 {dimension_numbers = #tpu.dot_dimension_numbers<[1], [0], [0], [1], [0, 0, 1, 1], [], []>} : vector<2x128xbf16>, vector<128x384xbf16>, vector<2x384xf32> -> vector<2x384xf32>
    %c0_155 = arith.constant 0 : index
    %c0_156 = arith.constant 0 : index
    %330 = vector.load %arg3[%c0_155, %c0_156] : memref<1x384xf32, #tpu.memory_space<vmem>>, vector<1x384xf32>
    %331 = vector.broadcast %330 : vector<1x384xf32> to vector<2x384xf32>
    %332 = arith.addf %329, %331 : vector<2x384xf32>
    %333 = arith.truncf %324 : vector<2x128xf32> to vector<2x128xbf16>
    %c0_157 = arith.constant 0 : index
    %c0_158 = arith.constant 0 : index
    %334 = vector.load %arg2[%c0_157, %c0_158] : memref<128x384xbf16, #tpu.memory_space<vmem>>, vector<128x384xbf16>
    %cst_159 = arith.constant dense<0.000000e+00> : vector<2x384xf32>
    %335 = tpu.matmul %333, %334, %cst_159 {dimension_numbers = #tpu.dot_dimension_numbers<[1], [0], [0], [1], [0, 0, 1, 1], [], []>} : vector<2x128xbf16>, vector<128x384xbf16>, vector<2x384xf32> -> vector<2x384xf32>
    %c0_160 = arith.constant 0 : index
    %c0_161 = arith.constant 0 : index
    %336 = vector.load %arg4[%c0_160, %c0_161] : memref<1x384xf32, #tpu.memory_space<vmem>>, vector<1x384xf32>
    %337 = vector.broadcast %336 : vector<1x384xf32> to vector<2x384xf32>
    %338 = arith.addf %335, %337 : vector<2x384xf32>
    %339 = vector.extract_strided_slice %332 {offsets = [0, 0], sizes = [2, 128], strides = [1, 1]} : vector<2x384xf32> to vector<2x128xf32>
    %340 = vector.extract_strided_slice %338 {offsets = [0, 0], sizes = [2, 128], strides = [1, 1]} : vector<2x384xf32> to vector<2x128xf32>
    %341 = arith.addf %339, %340 : vector<2x128xf32>
    %342 = arith.negf %341 : vector<2x128xf32>
    %343 = math.exp %342 : vector<2x128xf32>
    %cst_162 = arith.constant 1.000000e+00 : f32
    %344 = vector.broadcast %cst_162 : f32 to vector<2x128xf32>
    %345 = arith.addf %344, %343 : vector<2x128xf32>
    %346 = arith.divf %344, %345 : vector<2x128xf32>
    %347 = vector.extract_strided_slice %332 {offsets = [0, 128], sizes = [2, 128], strides = [1, 1]} : vector<2x384xf32> to vector<2x128xf32>
    %348 = vector.extract_strided_slice %338 {offsets = [0, 128], sizes = [2, 128], strides = [1, 1]} : vector<2x384xf32> to vector<2x128xf32>
    %349 = arith.addf %347, %348 : vector<2x128xf32>
    %350 = arith.negf %349 : vector<2x128xf32>
    %351 = math.exp %350 : vector<2x128xf32>
    %cst_163 = arith.constant 1.000000e+00 : f32
    %352 = vector.broadcast %cst_163 : f32 to vector<2x128xf32>
    %353 = arith.addf %352, %351 : vector<2x128xf32>
    %354 = arith.divf %352, %353 : vector<2x128xf32>
    %355 = vector.extract_strided_slice %332 {offsets = [0, 256], sizes = [2, 128], strides = [1, 1]} : vector<2x384xf32> to vector<2x128xf32>
    %356 = vector.extract_strided_slice %338 {offsets = [0, 256], sizes = [2, 128], strides = [1, 1]} : vector<2x384xf32> to vector<2x128xf32>
    %357 = arith.mulf %346, %356 : vector<2x128xf32>
    %358 = arith.addf %355, %357 : vector<2x128xf32>
    %359 = math.tanh %358 : vector<2x128xf32>
    %cst_164 = arith.constant 1.000000e+00 : f32
    %360 = vector.broadcast %cst_164 : f32 to vector<2x128xf32>
    %361 = arith.subf %360, %354 : vector<2x128xf32>
    %362 = arith.mulf %361, %359 : vector<2x128xf32>
    %363 = arith.mulf %354, %324 : vector<2x128xf32>
    %364 = arith.addf %362, %363 : vector<2x128xf32>
    %c0_165 = arith.constant 0 : index
    %c0_166 = arith.constant 0 : index
    %365 = vector.load %arg6[%c0_165, %c0_166] : memref<2x128xf32, #tpu.memory_space<vmem>>, vector<2x128xf32>
    tpu.vector_store %arg6[%c0_165, %c0_166], %364 {strides = array<i32>} : memref<2x128xf32, #tpu.memory_space<vmem>>, vector<2x128xf32>,
    %366 = arith.index_cast %c7_i32 : i32 to index
    %c0_167 = arith.constant 0 : index
    %c0_168 = arith.constant 0 : index
    %367 = vector.load %arg5[%366, %c0_167, %c0_168] : memref<8x2x128xf32, #tpu.memory_space<vmem>>, vector<1x2x128xf32>
    %368 = vector.shape_cast %367 : vector<1x2x128xf32> to vector<2x128xf32>
    %369 = vector.shape_cast %364 : vector<2x128xf32> to vector<1x2x128xf32>
    tpu.vector_store %arg5[%366, %c0_167, %c0_168], %369 {strides = array<i32>} : memref<8x2x128xf32, #tpu.memory_space<vmem>>, vector<1x2x128xf32>,
    %c8_i32 = arith.constant 8 : i32
    return
  }
}

</mosaic_0001>

<llo_original>
// kernel: tpu_custom_call.1
$region0: #{tpu_custom_call.1}
  #allocation0 [shape = 'u32[]', space=smem, size = 0x4, offset = 0x4, fixed_abs, tag = 'smem constant byte address 0x4 - core index']
  #allocation1 [shape = 'u32[144,128]{1,0:T(1,128)}', space=vmem, size = 0x12000, scoped, tag = 'internal scratch']
  #allocation2 [shape = 'f32[2,128]{1,0:T(2,128)}', space=vmem, size = 0x400, scoped, tag = 'scratch operand']
  %s0 = inlined_call_operand.hbm [shape: bf16[8,2,128], index: 0, kind: input, shape index: {}]
  %s1 = inlined_call_operand.hbm [shape: bf16[128,384], index: 1, kind: input, shape index: {}]
  %s2 = inlined_call_operand.hbm [shape: bf16[128,384], index: 2, kind: input, shape index: {}]
  %s3 = inlined_call_operand.vmem [shape: f32[1,384], index: 3, kind: input, shape index: {}]
  %s4 = inlined_call_operand.vmem [shape: f32[1,384], index: 4, kind: input, shape index: {}]
  %s5 = inlined_call_operand.hbm [shape: f32[8,2,128], index: 5, kind: output, shape index: {}]
  %s6 = sld [smem:[#allocation0]]
  $region42: #{tpu_custom_call.1} parent=0
    _
  %s8 = ssub.s32 1, %s6
  %s9 = scalar_select 0, %s8, %s6
  $region1: #{tpu_custom_call.1} parent=0
    #allocation3 [shape = 'u8[4096]{0}', space=vmem, size = 0x1000, scoped, tag = 'input window, operand 0, single buffered']
    #allocation4 [shape = 's32[1]{0}', space=sflag, size = 0x4, scoped, tag = 'scoped memory for tpu_custom_call.1']
    #allocation5 [shape = 's32[1]{0}', space=sflag, size = 0x4, scoped, tag = 'scoped memory for tpu_custom_call.1']
    #allocation6 [shape = 'u8[98304]{0}', space=vmem, size = 0x18000, scoped, tag = 'input window, operand 1, single buffered']
    #allocation7 [shape = 's32[1]{0}', space=sflag, size = 0x4, scoped, tag = 'scoped memory for tpu_custom_call.1']
    #allocation8 [shape = 'u8[98304]{0}', space=vmem, size = 0x18000, scoped, tag = 'input window, operand 2, single buffered']
    #allocation9 [shape = 'u8[8192]{0}', space=vmem, size = 0x2000, scoped, tag = 'output window, operand 0, single buffered']
    %10 = vsyncpa [#allocation4], 0
    %11 = vsyncpa [#allocation7], 0
    %12 = vsyncpa [#allocation5], 0
    // Predicated region
    $region2: #{tpu_custom_call.1} parent=1 // pred_check
      _
    $region3: #{tpu_custom_call.1} parent=1 // pred_check_branch
      %14 = sbr.rel (0) target = $region5
    $region4: #{tpu_custom_call.1} parent=1 // pred_region
      %s16 = ssub.s32 128, 128
      %17 = vsyncadd [#allocation4], %s16
      %s18 = sshll.u32 [#allocation3], 4
      %s19 = int_to_ptr.vmem [resolvable:$true] %s18
      %24 = dma.hbm_to_vmem [thread:$0]  %s0, 128, %s19, [#allocation4], 16, 16, 1
    $region5: #{tpu_custom_call.1} parent=1 // pred_fallthru
      _
    // Predicated region
    $region6: #{tpu_custom_call.1} parent=1 // pred_check
      _
    $region7: #{tpu_custom_call.1} parent=1 // pred_check_branch
      %26 = sbr.rel (0) target = $region9
    $region8: #{tpu_custom_call.1} parent=1 // pred_region
      %s28 = ssub.s32 3072, 3072
      %29 = vsyncadd [#allocation7], %s28
      %s30 = sshll.u32 [#allocation6], 4
      %s31 = int_to_ptr.vmem [resolvable:$true] %s30
      %36 = dma.hbm_to_vmem [thread:$0]  %s1, 3072, %s31, [#allocation7], 192, 192, 12
    $region9: #{tpu_custom_call.1} parent=1 // pred_fallthru
      _
    // Predicated region
    $region10: #{tpu_custom_call.1} parent=1 // pred_check
      _
    $region11: #{tpu_custom_call.1} parent=1 // pred_check_branch
      %38 = sbr.rel (0) target = $region13
    $region12: #{tpu_custom_call.1} parent=1 // pred_region
      %s40 = ssub.s32 3072, 3072
      %41 = vsyncadd [#allocation7], %s40
      %s42 = sshll.u32 [#allocation8], 4
      %s43 = int_to_ptr.vmem [resolvable:$true] %s42
      %48 = dma.hbm_to_vmem [thread:$0]  %s2, 3072, %s43, [#allocation7], 192, 192, 12
    $region13: #{tpu_custom_call.1} parent=1 // pred_fallthru
      _
    // Predicated region
    $region14: #{tpu_custom_call.1} parent=1 // pred_check
      _
    $region15: #{tpu_custom_call.1} parent=1 // pred_check_branch
      %50 = sbr.rel (0) target = $region17
    $region16: #{tpu_custom_call.1} parent=1 // pred_region
      _
    $region17: #{tpu_custom_call.1} parent=1 // pred_fallthru
      _
    // Predicated region
    $region18: #{tpu_custom_call.1} parent=1 // pred_check
      _
    $region19: #{tpu_custom_call.1} parent=1 // pred_check_branch
      %52 = sbr.rel (0) target = $region21
    $region20: #{tpu_custom_call.1} parent=1 // pred_region
      _
    $region21: #{tpu_custom_call.1} parent=1 // pred_fallthru
      _
    // Predicated region
    $region22: #{tpu_custom_call.1} parent=1 // pred_check
      _
    $region23: #{tpu_custom_call.1} parent=1 // pred_check_branch
      %54 = sbr.rel (0) target = $region25
    $region24: #{tpu_custom_call.1} parent=1 // pred_region
      %55 = dma.done [#allocation4], 128
    $region25: #{tpu_custom_call.1} parent=1 // pred_fallthru
      _
    // Predicated region
    $region26: #{tpu_custom_call.1} parent=1 // pred_check
      _
    $region27: #{tpu_custom_call.1} parent=1 // pred_check_branch
      %57 = sbr.rel (0) target = $region29
    $region28: #{tpu_custom_call.1} parent=1 // pred_region
      %58 = dma.done [#allocation7], 3072
    $region29: #{tpu_custom_call.1} parent=1 // pred_fallthru
      _
    // Predicated region
    $region30: #{tpu_custom_call.1} parent=1 // pred_check
      _
    $region31: #{tpu_custom_call.1} parent=1 // pred_check_branch
      %60 = sbr.rel (0) target = $region33
    $region32: #{tpu_custom_call.1} parent=1 // pred_region
      %61 = dma.done [#allocation7], 3072
    $region33: #{tpu_custom_call.1} parent=1 // pred_fallthru
      _
    %63 = vst [vmem:[#allocation2] sm:$0x3] 0.0
    %v64 = vld [vmem:[#allocation2] sm:$0x3]
    %v65 = vld [vmem:[#allocation3] sm:$0x1]
    %v66 = vld [vmem:[#allocation6] sm:$0xff]
    %v67 = vld [vmem:[#allocation6 + $0x8] sm:$0xf]
    %v68 = vld [vmem:[#allocation6 + $0xc] sm:$0xff]
    %v69 = vld [vmem:[#allocation6 + $0x14] sm:$0xf]
    %v70 = vld [vmem:[#allocation6 + $0x18] sm:$0xff]
    %v71 = vld [vmem:[#allocation6 + $0x20] sm:$0xf]
    %v72 = vld [vmem:[#allocation6 + $0x24] sm:$0xff]
    %v73 = vld [vmem:[#allocation6 + $0x2c] sm:$0xf]
    %v74 = vld [vmem:[#allocation6 + $0x30] sm:$0xff]
    %v75 = vld [vmem:[#allocation6 + $0x38] sm:$0xf]
    %v76 = vld [vmem:[#allocation6 + $0x3c] sm:$0xff]
    %v77 = vld [vmem:[#allocation6 + $0x44] sm:$0xf]
    %v78 = vld [vmem:[#allocation6 + $0x48] sm:$0xff]
    %v79 = vld [vmem:[#allocation6 + $0x50] sm:$0xf]
    %v80 = vld [vmem:[#allocation6 + $0x54] sm:$0xff]
    %v81 = vld [vmem:[#allocation6 + $0x5c] sm:$0xf]
    %v82 = vld [vmem:[#allocation6 + $0x60] sm:$0xff]
    %v83 = vld [vmem:[#allocation6 + $0x68] sm:$0xf]
    %v84 = vld [vmem:[#allocation6 + $0x6c] sm:$0xff]
    %v85 = vld [vmem:[#allocation6 + $0x74] sm:$0xf]
    %v86 = vld [vmem:[#allocation6 + $0x78] sm:$0xff]
    %v87 = vld [vmem:[#allocation6 + $0x80] sm:$0xf]
    %v88 = vld [vmem:[#allocation6 + $0x84] sm:$0xff]
    %v89 = vld [vmem:[#allocation6 + $0x8c] sm:$0xf]
    %v90 = vld [vmem:[#allocation6 + $0x90] sm:$0xff]
    %v91 = vld [vmem:[#allocation6 + $0x98] sm:$0xf]
    %v92 = vld [vmem:[#allocation6 + $0x9c] sm:$0xff]
    %v93 = vld [vmem:[#allocation6 + $0xa4] sm:$0xf]
    %v94 = vld [vmem:[#allocation6 + $0xa8] sm:$0xff]
    %v95 = vld [vmem:[#allocation6 + $0xb0] sm:$0xf]
    %v96 = vld [vmem:[#allocation6 + $0xb4] sm:$0xff]
    %v97 = vld [vmem:[#allocation6 + $0xbc] sm:$0xf]
    %v98 = vld [vmem:[%s3] sm:$0x7]
    %v100 = vlaneseq
    %v101 = vshrl.u32 %v100, 7
    %v102 = vsub.s32 0, %v101
    %v103 = vrot.slane %v98, %v102
    %v104 = vlaneseq
    %v105 = vshrl.u32 %v104, 7
    %v106 = vsub.s32 1, %v105
    %v107 = vrot.slane %v98, %v106
    %v108 = vlaneseq
    %v109 = vshrl.u32 %v108, 7
    %v110 = vsub.s32 2, %v109
    %v111 = vrot.slane %v98, %v110
    %v147 = vunpack.c.l.b16 %v66
    %v148 = vunpack.c.h.b16 %v66
    %v149 = vunpack.c.l.b16 %v67
    %v150 = vunpack.c.l.b16 %v68
    %v151 = vunpack.c.h.b16 %v68
    %v152 = vunpack.c.l.b16 %v69
    %v153 = vunpack.c.l.b16 %v70
    %v154 = vunpack.c.h.b16 %v70
    %v155 = vunpack.c.l.b16 %v71
    %v156 = vunpack.c.l.b16 %v72
    %v157 = vunpack.c.h.b16 %v72
    %v158 = vunpack.c.l.b16 %v73
    %v159 = vunpack.c.l.b16 %v74
    %v160 = vunpack.c.h.b16 %v74
    %v161 = vunpack.c.l.b16 %v75
    %v162 = vunpack.c.l.b16 %v76
    %v163 = vunpack.c.h.b16 %v76
    %v164 = vunpack.c.l.b16 %v77
    %v165 = vunpack.c.l.b16 %v78
    %v166 = vunpack.c.h.b16 %v78
    %v167 = vunpack.c.l.b16 %v79
    %v168 = vunpack.c.l.b16 %v80
    %v169 = vunpack.c.h.b16 %v80
    %v170 = vunpack.c.l.b16 %v81
    %v171 = vunpack.c.l.b16 %v82
    %v172 = vunpack.c.h.b16 %v82
    %v173 = vunpack.c.l.b16 %v83
    %v174 = vunpack.c.l.b16 %v84
    %v175 = vunpack.c.h.b16 %v84
    %v176 = vunpack.c.l.b16 %v85
    %v177 = vunpack.c.l.b16 %v86
    %v178 = vunpack.c.h.b16 %v86
    %v179 = vunpack.c.l.b16 %v87
    %v180 = vunpack.c.l.b16 %v88
    %v181 = vunpack.c.h.b16 %v88
    %v182 = vunpack.c.l.b16 %v89
    %v183 = vunpack.c.l.b16 %v90
    %v184 = vunpack.c.h.b16 %v90
    %v185 = vunpack.c.l.b16 %v91
    %v186 = vunpack.c.l.b16 %v92
    %v187 = vunpack.c.h.b16 %v92
    %v188 = vunpack.c.l.b16 %v93
    %v189 = vunpack.c.l.b16 %v94
    %v190 = vunpack.c.h.b16 %v94
    %v191 = vunpack.c.l.b16 %v95
    %v192 = vunpack.c.l.b16 %v96
    %v193 = vunpack.c.h.b16 %v96
    %v194 = vunpack.c.l.b16 %v97
    %v195 = vpack.c.b16 %v150, %v147
    %v196 = vpack.c.b16 %v151, %v148
    %v197 = vpack.c.b16 %v152, %v149
    %v198 = vpack.c.b16 %v156, %v153
    %v199 = vpack.c.b16 %v157, %v154
    %v200 = vpack.c.b16 %v158, %v155
    %v201 = vpack.c.b16 %v162, %v159
    %v202 = vpack.c.b16 %v163, %v160
    %v203 = vpack.c.b16 %v164, %v161
    %v204 = vpack.c.b16 %v168, %v165
    %v205 = vpack.c.b16 %v169, %v166
    %v206 = vpack.c.b16 %v170, %v167
    %v207 = vpack.c.b16 %v174, %v171
    %v208 = vpack.c.b16 %v175, %v172
    %v209 = vpack.c.b16 %v176, %v173
    %v210 = vpack.c.b16 %v180, %v177
    %v211 = vpack.c.b16 %v181, %v178
    %v212 = vpack.c.b16 %v182, %v179
    %v213 = vpack.c.b16 %v186, %v183
    %v214 = vpack.c.b16 %v187, %v184
    %v215 = vpack.c.b16 %v188, %v185
    %v216 = vpack.c.b16 %v192, %v189
    %v217 = vpack.c.b16 %v193, %v190
    %v218 = vpack.c.b16 %v194, %v191
    %243 = vmatprep.subr.bf16.mxu0 %v196
    %244 = vmatpush1.bf16.msra.mxu0 %v195
    %245 = vmatprep.subr.bf16.mxu0 %v199
    %246 = vmatpush1.bf16.msra.mxu0 %v198
    %247 = vmatprep.subr.bf16.mxu0 %v202
    %248 = vmatpush1.bf16.msra.mxu0 %v201
    %249 = vmatprep.subr.bf16.mxu0 %v205
    %250 = vmatpush1.bf16.msra.mxu0 %v204
    %251 = vmatprep.subr.bf16.mxu0 %v208
    %252 = vmatpush1.bf16.msra.mxu0 %v207
    %253 = vmatprep.subr.bf16.mxu0 %v211
    %254 = vmatpush1.bf16.msra.mxu0 %v210
    %255 = vmatprep.subr.bf16.mxu0 %v214
    %256 = vmatpush1.bf16.msra.mxu0 %v213
    %257 = vmatprep.subr.bf16.mxu0 %v217
    %258 = vmatpush1.bf16.msra.mxu0 %v216
    %259 = vmatprep.subr.bf16.mxu0 0
    %260 = vmatpush1.bf16.msra.mxu0 0
    %261 = vmatprep.subr.bf16.mxu0 0
    %262 = vmatpush1.bf16.msra.mxu0 0
    %263 = vmatprep.subr.bf16.mxu0 0
    %264 = vmatpush1.bf16.msra.mxu0 0
    %265 = vmatprep.subr.bf16.mxu0 0
    %266 = vmatpush1.bf16.msra.mxu0 0
    %267 = vmatprep.subr.bf16.mxu0 0
    %268 = vmatpush1.bf16.msra.mxu0 0
    %269 = vmatprep.subr.bf16.mxu0 0
    %270 = vmatpush1.bf16.msra.mxu0 0
    %271 = vmatprep.subr.bf16.mxu0 0
    %272 = vmatpush1.bf16.msra.mxu0 0
    %273 = vmatprep.subr.bf16.mxu0 0
    %274 = vmatpush1.bf16.msra.mxu0 0
    %275 = vmatprep.mubr.bf16.mxu0 0
    %276 = vmatmul.mubr.bf16.gmra.mrb[0].mxu0 %v65
    %v277 = vpop.f32.mrb[0].mxu0
    %v278 = vadd.f32 %v103, %v277
    %v279 = vpop.f32.mrb[0].mxu0
    %v280 = vadd.f32 %v107, %v279
    %v281 = vpop.f32.mrb[0].mxu0
    %v282 = vpop.f32.mrb[0].mxu0
    %283 = vdwg.mxu0
    %284 = vmatprep.subr.bf16.mxu0 0
    %285 = vmatpush1.bf16.msra.mxu0 %v197
    %286 = vmatprep.subr.bf16.mxu0 0
    %287 = vmatpush1.bf16.msra.mxu0 %v200
    %288 = vmatprep.subr.bf16.mxu0 0
    %289 = vmatpush1.bf16.msra.mxu0 %v203
    %290 = vmatprep.subr.bf16.mxu0 0
    %291 = vmatpush1.bf16.msra.mxu0 %v206
    %292 = vmatprep.subr.bf16.mxu0 0
    %293 = vmatpush1.bf16.msra.mxu0 %v209
    %294 = vmatprep.subr.bf16.mxu0 0
    %295 = vmatpush1.bf16.msra.mxu0 %v212
    %296 = vmatprep.subr.bf16.mxu0 0
    %297 = vmatpush1.bf16.msra.mxu0 %v215
    %298 = vmatprep.subr.bf16.mxu0 0
    %299 = vmatpush1.bf16.msra.mxu0 %v218
    %300 = vmatprep.subr.bf16.mxu0 0
    %301 = vmatpush1.bf16.msra.mxu0 0
    %302 = vmatprep.subr.bf16.mxu0 0
    %303 = vmatpush1.bf16.msra.mxu0 0
    %304 = vmatprep.subr.bf16.mxu0 0
    %305 = vmatpush1.bf16.msra.mxu0 0
    %306 = vmatprep.subr.bf16.mxu0 0
    %307 = vmatpush1.bf16.msra.mxu0 0
    %308 = vmatprep.subr.bf16.mxu0 0
    %309 = vmatpush1.bf16.msra.mxu0 0
    %310 = vmatprep.subr.bf16.mxu0 0
    %311 = vmatpush1.bf16.msra.mxu0 0
    %312 = vmatprep.subr.bf16.mxu0 0
    %313 = vmatpush1.bf16.msra.mxu0 0
    %314 = vmatprep.subr.bf16.mxu0 0
    %315 = vmatpush1.bf16.msra.mxu0 0
    %316 = vmatprep.mubr.bf16.mxu0 0
    %317 = vmatmul.mubr.bf16.gmra.mrb[0].mxu0 %v65
    %v318 = vpop.f32.mrb[0].mxu0
    %v319 = vadd.f32 %v111, %v318
    %v320 = vpop.f32.mrb[0].mxu0
    %v321 = vpop.f32.mrb[0].mxu0
    %v322 = vpop.f32.mrb[0].mxu0
    %323 = vdwg.mxu0
    %v324 = vpack.c.bf16 %v64, %v64
    %v325 = vld [vmem:[#allocation8] sm:$0xff]
    %v326 = vld [vmem:[#allocation8 + $0x8] sm:$0xf]
    %v327 = vld [vmem:[#allocation8 + $0xc] sm:$0xff]
    %v328 = vld [vmem:[#allocation8 + $0x14] sm:$0xf]
    %v329 = vld [vmem:[#allocation8 + $0x18] sm:$0xff]
    %v330 = vld [vmem:[#allocation8 + $0x20] sm:$0xf]
    %v331 = vld [vmem:[#allocation8 + $0x24] sm:$0xff]
    %v332 = vld [vmem:[#allocation8 + $0x2c] sm:$0xf]
    %v333 = vld [vmem:[#allocation8 + $0x30] sm:$0xff]
    %v334 = vld [vmem:[#allocation8 + $0x38] sm:$0xf]
    %v335 = vld [vmem:[#allocation8 + $0x3c] sm:$0xff]
    %v336 = vld [vmem:[#allocation8 + $0x44] sm:$0xf]
    %v337 = vld [vmem:[#allocation8 + $0x48] sm:$0xff]
    %v338 = vld [vmem:[#allocation8 + $0x50] sm:$0xf]
    %v339 = vld [vmem:[#allocation8 + $0x54] sm:$0xff]
    %v340 = vld [vmem:[#allocation8 + $0x5c] sm:$0xf]
    %v341 = vld [vmem:[#allocation8 + $0x60] sm:$0xff]
    %v342 = vld [vmem:[#allocation8 + $0x68] sm:$0xf]
    %v343 = vld [vmem:[#allocation8 + $0x6c] sm:$0xff]
    %v344 = vld [vmem:[#allocation8 + $0x74] sm:$0xf]
    %v345 = vld [vmem:[#allocation8 + $0x78] sm:$0xff]
    %v346 = vld [vmem:[#allocation8 + $0x80] sm:$0xf]
    %v347 = vld [vmem:[#allocation8 + $0x84] sm:$0xff]
    %v348 = vld [vmem:[#allocation8 + $0x8c] sm:$0xf]
    %v349 = vld [vmem:[#allocation8 + $0x90] sm:$0xff]
    %v350 = vld [vmem:[#allocation8 + $0x98] sm:$0xf]
    %v351 = vld [vmem:[#allocation8 + $0x9c] sm:$0xff]
    %v352 = vld [vmem:[#allocation8 + $0xa4] sm:$0xf]
    %v353 = vld [vmem:[#allocation8 + $0xa8] sm:$0xff]
    %v354 = vld [vmem:[#allocation8 + $0xb0] sm:$0xf]
    %v355 = vld [vmem:[#allocation8 + $0xb4] sm:$0xff]
    %v356 = vld [vmem:[#allocation8 + $0xbc] sm:$0xf]
    %v357 = vld [vmem:[%s4] sm:$0x7]
    %v359 = vlaneseq
    %v360 = vshrl.u32 %v359, 7
    %v361 = vsub.s32 0, %v360
    %v362 = vrot.slane %v357, %v361
    %v363 = vlaneseq
    %v364 = vshrl.u32 %v363, 7
    %v365 = vsub.s32 1, %v364
    %v366 = vrot.slane %v357, %v365
    %v367 = vlaneseq
    %v368 = vshrl.u32 %v367, 7
    %v369 = vsub.s32 2, %v368
    %v370 = vrot.slane %v357, %v369
    %v406 = vunpack.c.l.b16 %v325
    %v407 = vunpack.c.h.b16 %v325
    %v408 = vunpack.c.l.b16 %v326
    %v409 = vunpack.c.l.b16 %v327
    %v410 = vunpack.c.h.b16 %v327
    %v411 = vunpack.c.l.b16 %v328
    %v412 = vunpack.c.l.b16 %v329
    %v413 = vunpack.c.h.b16 %v329
    %v414 = vunpack.c.l.b16 %v330
    %v415 = vunpack.c.l.b16 %v331
    %v416 = vunpack.c.h.b16 %v331
    %v417 = vunpack.c.l.b16 %v332
    %v418 = vunpack.c.l.b16 %v333
    %v419 = vunpack.c.h.b16 %v333
    %v420 = vunpack.c.l.b16 %v334
    %v421 = vunpack.c.l.b16 %v335
    %v422 = vunpack.c.h.b16 %v335
    %v423 = vunpack.c.l.b16 %v336
    %v424 = vunpack.c.l.b16 %v337
    %v425 = vunpack.c.h.b16 %v337
    %v426 = vunpack.c.l.b16 %v338
    %v427 = vunpack.c.l.b16 %v339
    %v428 = vunpack.c.h.b16 %v339
    %v429 = vunpack.c.l.b16 %v340
    %v430 = vunpack.c.l.b16 %v341
    %v431 = vunpack.c.h.b16 %v341
    %v432 = vunpack.c.l.b16 %v342
    %v433 = vunpack.c.l.b16 %v343
    %v434 = vunpack.c.h.b16 %v343
    %v435 = vunpack.c.l.b16 %v344
    %v436 = vunpack.c.l.b16 %v345
    %v437 = vunpack.c.h.b16 %v345
    %v438 = vunpack.c.l.b16 %v346
    %v439 = vunpack.c.l.b16 %v347
    %v440 = vunpack.c.h.b16 %v347
    %v441 = vunpack.c.l.b16 %v348
    %v442 = vunpack.c.l.b16 %v349
    %v443 = vunpack.c.h.b16 %v349
    %v444 = vunpack.c.l.b16 %v350
    %v445 = vunpack.c.l.b16 %v351
    %v446 = vunpack.c.h.b16 %v351
    %v447 = vunpack.c.l.b16 %v352
    %v448 = vunpack.c.l.b16 %v353
    %v449 = vunpack.c.h.b16 %v353
    %v450 = vunpack.c.l.b16 %v354
    %v451 = vunpack.c.l.b16 %v355
    %v452 = vunpack.c.h.b16 %v355
    %v453 = vunpack.c.l.b16 %v356
    %v454 = vpack.c.b16 %v409, %v406
    %v455 = vpack.c.b16 %v410, %v407
    %v456 = vpack.c.b16 %v411, %v408
    %v457 = vpack.c.b16 %v415, %v412
    %v458 = vpack.c.b16 %v416, %v413
    %v459 = vpack.c.b16 %v417, %v414
    %v460 = vpack.c.b16 %v421, %v418
    %v461 = vpack.c.b16 %v422, %v419
    %v462 = vpack.c.b16 %v423, %v420
    %v463 = vpack.c.b16 %v427, %v424
    %v464 = vpack.c.b16 %v428, %v425
    %v465 = vpack.c.b16 %v429, %v426
    %v466 = vpack.c.b16 %v433, %v430
    %v467 = vpack.c.b16 %v434, %v431
    %v468 = vpack.c.b16 %v435, %v432
    %v469 = vpack.c.b16 %v439, %v436
    %v470 = vpack.c.b16 %v440, %v437
    %v471 = vpack.c.b16 %v441, %v438
    %v472 = vpack.c.b16 %v445, %v442
    %v473 = vpack.c.b16 %v446, %v443
    %v474 = vpack.c.b16 %v447, %v444
    %v475 = vpack.c.b16 %v451, %v448
    %v476 = vpack.c.b16 %v452, %v449
    %v477 = vpack.c.b16 %v453, %v450
    %502 = vmatprep.subr.bf16.mxu0 %v455
    %503 = vmatpush1.bf16.msra.mxu0 %v454
    %504 = vmatprep.subr.bf16.mxu0 %v458
    %505 = vmatpush1.bf16.msra.mxu0 %v457
    %506 = vmatprep.subr.bf16.mxu0 %v461
    %507 = vmatpush1.bf16.msra.mxu0 %v460
    %508 = vmatprep.subr.bf16.mxu0 %v464
    %509 = vmatpush1.bf16.msra.mxu0 %v463
    %510 = vmatprep.subr.bf16.mxu0 %v467
    %511 = vmatpush1.bf16.msra.mxu0 %v466
    %512 = vmatprep.subr.bf16.mxu0 %v470
    %513 = vmatpush1.bf16.msra.mxu0 %v469
    %514 = vmatprep.subr.bf16.mxu0 %v473
    %515 = vmatpush1.bf16.msra.mxu0 %v472
    %516 = vmatprep.subr.bf16.mxu0 %v476
    %517 = vmatpush1.bf16.msra.mxu0 %v475
    %518 = vmatprep.subr.bf16.mxu0 0
    %519 = vmatpush1.bf16.msra.mxu0 0
    %520 = vmatprep.subr.bf16.mxu0 0
    %521 = vmatpush1.bf16.msra.mxu0 0
    %522 = vmatprep.subr.bf16.mxu0 0
    %523 = vmatpush1.bf16.msra.mxu0 0
    %524 = vmatprep.subr.bf16.mxu0 0
    %525 = vmatpush1.bf16.msra.mxu0 0
    %526 = vmatprep.subr.bf16.mxu0 0
    %527 = vmatpush1.bf16.msra.mxu0 0
    %528 = vmatprep.subr.bf16.mxu0 0
    %529 = vmatpush1.bf16.msra.mxu0 0
    %530 = vmatprep.subr.bf16.mxu0 0
    %531 = vmatpush1.bf16.msra.mxu0 0
    %532 = vmatprep.subr.bf16.mxu0 0
    %533 = vmatpush1.bf16.msra.mxu0 0
    %534 = vmatprep.mubr.bf16.mxu0 0
    %535 = vmatmul.mubr.bf16.gmra.mrb[0].mxu0 %v324
    %v536 = vpop.f32.mrb[0].mxu0
    %v537 = vadd.f32 %v362, %v536
    %v538 = vpop.f32.mrb[0].mxu0
    %v539 = vadd.f32 %v366, %v538
    %v540 = vpop.f32.mrb[0].mxu0
    %v541 = vpop.f32.mrb[0].mxu0
    %542 = vdwg.mxu0
    %543 = vmatprep.subr.bf16.mxu0 0
    %544 = vmatpush1.bf16.msra.mxu0 %v456
    %545 = vmatprep.subr.bf16.mxu0 0
    %546 = vmatpush1.bf16.msra.mxu0 %v459
    %547 = vmatprep.subr.bf16.mxu0 0
    %548 = vmatpush1.bf16.msra.mxu0 %v462
    %549 = vmatprep.subr.bf16.mxu0 0
    %550 = vmatpush1.bf16.msra.mxu0 %v465
    %551 = vmatprep.subr.bf16.mxu0 0
    %552 = vmatpush1.bf16.msra.mxu0 %v468
    %553 = vmatprep.subr.bf16.mxu0 0
    %554 = vmatpush1.bf16.msra.mxu0 %v471
    %555 = vmatprep.subr.bf16.mxu0 0
    %556 = vmatpush1.bf16.msra.mxu0 %v474
    %557 = vmatprep.subr.bf16.mxu0 0
    %558 = vmatpush1.bf16.msra.mxu0 %v477
    %559 = vmatprep.subr.bf16.mxu0 0
    %560 = vmatpush1.bf16.msra.mxu0 0
    %561 = vmatprep.subr.bf16.mxu0 0
    %562 = vmatpush1.bf16.msra.mxu0 0
    %563 = vmatprep.subr.bf16.mxu0 0
    %564 = vmatpush1.bf16.msra.mxu0 0
    %565 = vmatprep.subr.bf16.mxu0 0
    %566 = vmatpush1.bf16.msra.mxu0 0
    %567 = vmatprep.subr.bf16.mxu0 0
    %568 = vmatpush1.bf16.msra.mxu0 0
    %569 = vmatprep.subr.bf16.mxu0 0
    %570 = vmatpush1.bf16.msra.mxu0 0
    %571 = vmatprep.subr.bf16.mxu0 0
    %572 = vmatpush1.bf16.msra.mxu0 0
    %573 = vmatprep.subr.bf16.mxu0 0
    %574 = vmatpush1.bf16.msra.mxu0 0
    %575 = vmatprep.mubr.bf16.mxu0 0
    %576 = vmatmul.mubr.bf16.gmra.mrb[0].mxu0 %v324
    %v577 = vpop.f32.mrb[0].mxu0
    %v578 = vadd.f32 %v370, %v577
    %v579 = vpop.f32.mrb[0].mxu0
    %v580 = vpop.f32.mrb[0].mxu0
    %v581 = vpop.f32.mrb[0].mxu0
    %582 = vdwg.mxu0
    %v583 = vadd.f32 %v278, %v537
    %v584 = vxor.u32 %v583, 2147483648
    %v585 = vmul.f32 %v584, 1.442695
    %v586 = vpow.pop %v585
    %v587 = vadd.f32 %v586, 1.0
    %v588 = vrcp.pop %v587
    %v589 = vmul.f32 1.0, %v588
    %v590 = vadd.f32 %v280, %v539
    %v591 = vxor.u32 %v590, 2147483648
    %v592 = vmul.f32 %v591, 1.442695
    %v593 = vpow.pop %v592
    %v594 = vadd.f32 %v593, 1.0
    %v595 = vrcp.pop %v594
    %v596 = vmul.f32 1.0, %v595
    %v597 = vmul.f32 %v589, %v578
    %v598 = vadd.f32 %v319, %v597
    %v599 = vtanh.pop %v598
    %v600 = vsub.f32 1.0, %v596
    %v601 = vmul.f32 %v600, %v599
    %v602 = vmul.f32 %v596, %v64
    %v603 = vadd.f32 %v601, %v602
    %604 = vst [vmem:[#allocation2] sm:$0x3] %v603
    %605 = vst [vmem:[#allocation9] sm:$0x3] %v603
    %v606 = vld [vmem:[#allocation2] sm:$0x3]
    %s607 = scalar_lea.vmem [#allocation3], 1
    %v608 = vld [vmem:[%s607] sm:$0x1]
    %v609 = vld [vmem:[#allocation6] sm:$0xff]
    %v610 = vld [vmem:[#allocation6 + $0x8] sm:$0xf]
    %v611 = vld [vmem:[#allocation6 + $0xc] sm:$0xff]
    %v612 = vld [vmem:[#allocation6 + $0x14] sm:$0xf]
    %v613 = vld [vmem:[#allocation6 + $0x18] sm:$0xff]
    %v614 = vld [vmem:[#allocation6 + $0x20] sm:$0xf]
    %v615 = vld [vmem:[#allocation6 + $0x24] sm:$0xff]
    %v616 = vld [vmem:[#allocation6 + $0x2c] sm:$0xf]
    %v617 = vld [vmem:[#allocation6 + $0x30] sm:$0xff]
    %v618 = vld [vmem:[#allocation6 + $0x38] sm:$0xf]
    %v619 = vld [vmem:[#allocation6 + $0x3c] sm:$0xff]
    %v620 = vld [vmem:[#allocation6 + $0x44] sm:$0xf]
    %v621 = vld [vmem:[#allocation6 + $0x48] sm:$0xff]
    %v622 = vld [vmem:[#allocation6 + $0x50] sm:$0xf]
    %v623 = vld [vmem:[#allocation6 + $0x54] sm:$0xff]
    %v624 = vld [vmem:[#allocation6 + $0x5c] sm:$0xf]
    %v625 = vld [vmem:[#allocation6 + $0x60] sm:$0xff]
    %v626 = vld [vmem:[#allocation6 + $0x68] sm:$0xf]
    %v627 = vld [vmem:[#allocation6 + $0x6c] sm:$0xff]
    %v628 = vld [vmem:[#allocation6 + $0x74] sm:$0xf]
    %v629 = vld [vmem:[#allocation6 + $0x78] sm:$0xff]
    %v630 = vld [vmem:[#allocation6 + $0x80] sm:$0xf]
    %v631 = vld [vmem:[#allocation6 + $0x84] sm:$0xff]
    %v632 = vld [vmem:[#allocation6 + $0x8c] sm:$0xf]
    %v633 = vld [vmem:[#allocation6 + $0x90] sm:$0xff]
    %v634 = vld [vmem:[#allocation6 + $0x98] sm:$0xf]
    %v635 = vld [vmem:[#allocation6 + $0x9c] sm:$0xff]
    %v636 = vld [vmem:[#allocation6 + $0xa4] sm:$0xf]
    %v637 = vld [vmem:[#allocation6 + $0xa8] sm:$0xff]
    %v638 = vld [vmem:[#allocation6 + $0xb0] sm:$0xf]
    %v639 = vld [vmem:[#allocation6 + $0xb4] sm:$0xff]
    %v640 = vld [vmem:[#allocation6 + $0xbc] sm:$0xf]
    %v641 = vld [vmem:[%s3] sm:$0x7]
    %v643 = vlaneseq
    %v644 = vshrl.u32 %v643, 7
    %v645 = vsub.s32 0, %v644
    %v646 = vrot.slane %v641, %v645
    %v647 = vlaneseq
    %v648 = vshrl.u32 %v647, 7
    %v649 = vsub.s32 1, %v648
    %v650 = vrot.slane %v641, %v649
    %v651 = vlaneseq
    %v652 = vshrl.u32 %v651, 7
    %v653 = vsub.s32 2, %v652
    %v654 = vrot.slane %v641, %v653
    %v690 = vunpack.c.l.b16 %v609
    %v691 = vunpack.c.h.b16 %v609
    %v692 = vunpack.c.l.b16 %v610
    %v693 = vunpack.c.l.b16 %v611
    %v694 = vunpack.c.h.b16 %v611
    %v695 = vunpack.c.l.b16 %v612
    %v696 = vunpack.c.l.b16 %v613
    %v697 = vunpack.c.h.b16 %v613
    %v698 = vunpack.c.l.b16 %v614
    %v699 = vunpack.c.l.b16 %v615
    %v700 = vunpack.c.h.b16 %v615
    %v701 = vunpack.c.l.b16 %v616
    %v702 = vunpack.c.l.b16 %v617
    %v703 = vunpack.c.h.b16 %v617
    %v704 = vunpack.c.l.b16 %v618
    %v705 = vunpack.c.l.b16 %v619
    %v706 = vunpack.c.h.b16 %v619
    %v707 = vunpack.c.l.b16 %v620
    %v708 = vunpack.c.l.b16 %v621
    %v709 = vunpack.c.h.b16 %v621
    %v710 = vunpack.c.l.b16 %v622
    %v711 = vunpack.c.l.b16 %v623
    %v712 = vunpack.c.h.b16 %v623
    %v713 = vunpack.c.l.b16 %v624
    %v714 = vunpack.c.l.b16 %v625
    %v715 = vunpack.c.h.b16 %v625
    %v716 = vunpack.c.l.b16 %v626
    %v717 = vunpack.c.l.b16 %v627
    %v718 = vunpack.c.h.b16 %v627
    %v719 = vunpack.c.l.b16 %v628
    %v720 = vunpack.c.l.b16 %v629
    %v721 = vunpack.c.h.b16 %v629
    %v722 = vunpack.c.l.b16 %v630
    %v723 = vunpack.c.l.b16 %v631
    %v724 = vunpack.c.h.b16 %v631
    %v725 = vunpack.c.l.b16 %v632
    %v726 = vunpack.c.l.b16 %v633
    %v727 = vunpack.c.h.b16 %v633
    %v728 = vunpack.c.l.b16 %v634
    %v729 = vunpack.c.l.b16 %v635
    %v730 = vunpack.c.h.b16 %v635
    %v731 = vunpack.c.l.b16 %v636
    %v732 = vunpack.c.l.b16 %v637
    %v733 = vunpack.c.h.b16 %v637
    %v734 = vunpack.c.l.b16 %v638
    %v735 = vunpack.c.l.b16 %v639
    %v736 = vunpack.c.h.b16 %v639
    %v737 = vunpack.c.l.b16 %v640
    %v738 = vpack.c.b16 %v693, %v690
    %v739 = vpack.c.b16 %v694, %v691
    %v740 = vpack.c.b16 %v695, %v692
    %v741 = vpack.c.b16 %v699, %v696
    %v742 = vpack.c.b16 %v700, %v697
    %v743 = vpack.c.b16 %v701, %v698
    %v744 = vpack.c.b16 %v705, %v702
    %v745 = vpack.c.b16 %v706, %v703
    %v746 = vpack.c.b16 %v707, %v704
    %v747 = vpack.c.b16 %v711, %v708
    %v748 = vpack.c.b16 %v712, %v709
    %v749 = vpack.c.b16 %v713, %v710
    %v750 = vpack.c.b16 %v717, %v714
    %v751 = vpack.c.b16 %v718, %v715
    %v752 = vpack.c.b16 %v719, %v716
    %v753 = vpack.c.b16 %v723, %v720
    %v754 = vpack.c.b16 %v724, %v721
    %v755 = vpack.c.b16 %v725, %v722
    %v756 = vpack.c.b16 %v729, %v726
    %v757 = vpack.c.b16 %v730, %v727
    %v758 = vpack.c.b16 %v731, %v728
    %v759 = vpack.c.b16 %v735, %v732
    %v760 = vpack.c.b16 %v736, %v733
    %v761 = vpack.c.b16 %v737, %v734
    %786 = vmatprep.subr.bf16.mxu0 %v739
    %787 = vmatpush1.bf16.msra.mxu0 %v738
    %788 = vmatprep.subr.bf16.mxu0 %v742
    %789 = vmatpush1.bf16.msra.mxu0 %v741
    %790 = vmatprep.subr.bf16.mxu0 %v745
    %791 = vmatpush1.bf16.msra.mxu0 %v744
    %792 = vmatprep.subr.bf16.mxu0 %v748
    %793 = vmatpush1.bf16.msra.mxu0 %v747
    %794 = vmatprep.subr.bf16.mxu0 %v751
    %795 = vmatpush1.bf16.msra.mxu0 %v750
    %796 = vmatprep.subr.bf16.mxu0 %v754
    %797 = vmatpush1.bf16.msra.mxu0 %v753
    %798 = vmatprep.subr.bf16.mxu0 %v757
    %799 = vmatpush1.bf16.msra.mxu0 %v756
    %800 = vmatprep.subr.bf16.mxu0 %v760
    %801 = vmatpush1.bf16.msra.mxu0 %v759
    %802 = vmatprep.subr.bf16.mxu0 0
    %803 = vmatpush1.bf16.msra.mxu0 0
    %804 = vmatprep.subr.bf16.mxu0 0
    %805 = vmatpush1.bf16.msra.mxu0 0
    %806 = vmatprep.subr.bf16.mxu0 0
    %807 = vmatpush1.bf16.msra.mxu0 0
    %808 = vmatprep.subr.bf16.mxu0 0
    %809 = vmatpush1.bf16.msra.mxu0 0
    %810 = vmatprep.subr.bf16.mxu0 0
    %811 = vmatpush1.bf16.msra.mxu0 0
    %812 = vmatprep.subr.bf16.mxu0 0
    %813 = vmatpush1.bf16.msra.mxu0 0
    %814 = vmatprep.subr.bf16.mxu0 0
    %815 = vmatpush1.bf16.msra.mxu0 0
    %816 = vmatprep.subr.bf16.mxu0 0
    %817 = vmatpush1.bf16.msra.mxu0 0
    %818 = vmatprep.mubr.bf16.mxu0 0
    %819 = vmatmul.mubr.bf16.gmra.mrb[0].mxu0 %v608
    %v820 = vpop.f32.mrb[0].mxu0
    %v821 = vadd.f32 %v646, %v820
    %v822 = vpop.f32.mrb[0].mxu0
    %v823 = vadd.f32 %v650, %v822
    %v824 = vpop.f32.mrb[0].mxu0
    %v825 = vpop.f32.mrb[0].mxu0
    %826 = vdwg.mxu0
    %827 = vmatprep.subr.bf16.mxu0 0
    %828 = vmatpush1.bf16.msra.mxu0 %v740
    %829 = vmatprep.subr.bf16.mxu0 0
    %830 = vmatpush1.bf16.msra.mxu0 %v743
    %831 = vmatprep.subr.bf16.mxu0 0
    %832 = vmatpush1.bf16.msra.mxu0 %v746
    %833 = vmatprep.subr.bf16.mxu0 0
    %834 = vmatpush1.bf16.msra.mxu0 %v749
    %835 = vmatprep.subr.bf16.mxu0 0
    %836 = vmatpush1.bf16.msra.mxu0 %v752
    %837 = vmatprep.subr.bf16.mxu0 0
    %838 = vmatpush1.bf16.msra.mxu0 %v755
    %839 = vmatprep.subr.bf16.mxu0 0
    %840 = vmatpush1.bf16.msra.mxu0 %v758
    %841 = vmatprep.subr.bf16.mxu0 0
    %842 = vmatpush1.bf16.msra.mxu0 %v761
    %843 = vmatprep.subr.bf16.mxu0 0
    %844 = vmatpush1.bf16.msra.mxu0 0
    %845 = vmatprep.subr.bf16.mxu0 0
    %846 = vmatpush1.bf16.msra.mxu0 0
    %847 = vmatprep.subr.bf16.mxu0 0
    %848 = vmatpush1.bf16.msra.mxu0 0
    %849 = vmatprep.subr.bf16.mxu0 0
    %850 = vmatpush1.bf16.msra.mxu0 0
    %851 = vmatprep.subr.bf16.mxu0 0
    %852 = vmatpush1.bf16.msra.mxu0 0
    %853 = vmatprep.subr.bf16.mxu0 0
    %854 = vmatpush1.bf16.msra.mxu0 0
    %855 = vmatprep.subr.bf16.mxu0 0
    %856 = vmatpush1.bf16.msra.mxu0 0
    %857 = vmatprep.subr.bf16.mxu0 0
    %858 = vmatpush1.bf16.msra.mxu0 0
    %859 = vmatprep.mubr.bf16.mxu0 0
    %860 = vmatmul.mubr.bf16.gmra.mrb[0].mxu0 %v608
    %v861 = vpop.f32.mrb[0].mxu0
    %v862 = vadd.f32 %v654, %v861
    %v863 = vpop.f32.mrb[0].mxu0
    %v864 = vpop.f32.mrb[0].mxu0
    %v865 = vpop.f32.mrb[0].mxu0
    %866 = vdwg.mxu0
    %v867 = vpack.c.bf16 %v606, %v606
    %v868 = vld [vmem:[#allocation8] sm:$0xff]
    %v869 = vld [vmem:[#allocation8 + $0x8] sm:$0xf]
    %v870 = vld [vmem:[#allocation8 + $0xc] sm:$0xff]
    %v871 = vld [vmem:[#allocation8 + $0x14] sm:$0xf]
    %v872 = vld [vmem:[#allocation8 + $0x18] sm:$0xff]
    %v873 = vld [vmem:[#allocation8 + $0x20] sm:$0xf]
    %v874 = vld [vmem:[#allocation8 + $0x24] sm:$0xff]
    %v875 = vld [vmem:[#allocation8 + $0x2c] sm:$0xf]
    %v876 = vld [vmem:[#allocation8 + $0x30] sm:$0xff]
    %v877 = vld [vmem:[#allocation8 + $0x38] sm:$0xf]
    %v878 = vld [vmem:[#allocation8 + $0x3c] sm:$0xff]
    %v879 = vld [vmem:[#allocation8 + $0x44] sm:$0xf]
    %v880 = vld [vmem:[#allocation8 + $0x48] sm:$0xff]
    %v881 = vld [vmem:[#allocation8 + $0x50] sm:$0xf]
    %v882 = vld [vmem:[#allocation8 + $0x54] sm:$0xff]
    %v883 = vld [vmem:[#allocation8 + $0x5c] sm:$0xf]
    %v884 = vld [vmem:[#allocation8 + $0x60] sm:$0xff]
    %v885 = vld [vmem:[#allocation8 + $0x68] sm:$0xf]
    %v886 = vld [vmem:[#allocation8 + $0x6c] sm:$0xff]
    %v887 = vld [vmem:[#allocation8 + $0x74] sm:$0xf]
    %v888 = vld [vmem:[#allocation8 + $0x78] sm:$0xff]
    %v889 = vld [vmem:[#allocation8 + $0x80] sm:$0xf]
    %v890 = vld [vmem:[#allocation8 + $0x84] sm:$0xff]
    %v891 = vld [vmem:[#allocation8 + $0x8c] sm:$0xf]
    %v892 = vld [vmem:[#allocation8 + $0x90] sm:$0xff]
    %v893 = vld [vmem:[#allocation8 + $0x98] sm:$0xf]
    %v894 = vld [vmem:[#allocation8 + $0x9c] sm:$0xff]
    %v895 = vld [vmem:[#allocation8 + $0xa4] sm:$0xf]
    %v896 = vld [vmem:[#allocation8 + $0xa8] sm:$0xff]
    %v897 = vld [vmem:[#allocation8 + $0xb0] sm:$0xf]
    %v898 = vld [vmem:[#allocation8 + $0xb4] sm:$0xff]
    %v899 = vld [vmem:[#allocation8 + $0xbc] sm:$0xf]
    %v900 = vld [vmem:[%s4] sm:$0x7]
    %v902 = vlaneseq
    %v903 = vshrl.u32 %v902, 7
    %v904 = vsub.s32 0, %v903
    %v905 = vrot.slane %v900, %v904
    %v906 = vlaneseq
    %v907 = vshrl.u32 %v906, 7
    %v908 = vsub.s32 1, %v907
    %v909 = vrot.slane %v900, %v908
    %v910 = vlaneseq
    %v911 = vshrl.u32 %v910, 7
    %v912 = vsub.s32 2, %v911
    %v913 = vrot.slane %v900, %v912
    %v949 = vunpack.c.l.b16 %v868
    %v950 = vunpack.c.h.b16 %v868
    %v951 = vunpack.c.l.b16 %v869
    %v952 = vunpack.c.l.b16 %v870
    %v953 = vunpack.c.h.b16 %v870
    %v954 = vunpack.c.l.b16 %v871
    %v955 = vunpack.c.l.b16 %v872
    %v956 = vunpack.c.h.b16 %v872
    %v957 = vunpack.c.l.b16 %v873
    %v958 = vunpack.c.l.b16 %v874
    %v959 = vunpack.c.h.b16 %v874
    %v960 = vunpack.c.l.b16 %v875
    %v961 = vunpack.c.l.b16 %v876
    %v962 = vunpack.c.h.b16 %v876
    %v963 = vunpack.c.l.b16 %v877
    %v964 = vunpack.c.l.b16 %v878
    %v965 = vunpack.c.h.b16 %v878
    %v966 = vunpack.c.l.b16 %v879
    %v967 = vunpack.c.l.b16 %v880
    %v968 = vunpack.c.h.b16 %v880
    %v969 = vunpack.c.l.b16 %v881
    %v970 = vunpack.c.l.b16 %v882
    %v971 = vunpack.c.h.b16 %v882
    %v972 = vunpack.c.l.b16 %v883
    %v973 = vunpack.c.l.b16 %v884
    %v974 = vunpack.c.h.b16 %v884
    %v975 = vunpack.c.l.b16 %v885
    %v976 = vunpack.c.l.b16 %v886
    %v977 = vunpack.c.h.b16 %v886
    %v978 = vunpack.c.l.b16 %v887
    %v979 = vunpack.c.l.b16 %v888
    %v980 = vunpack.c.h.b16 %v888
    %v981 = vunpack.c.l.b16 %v889
    %v982 = vunpack.c.l.b16 %v890
    %v983 = vunpack.c.h.b16 %v890
    %v984 = vunpack.c.l.b16 %v891
    %v985 = vunpack.c.l.b16 %v892
    %v986 = vunpack.c.h.b16 %v892
    %v987 = vunpack.c.l.b16 %v893
    %v988 = vunpack.c.l.b16 %v894
    %v989 = vunpack.c.h.b16 %v894
    %v990 = vunpack.c.l.b16 %v895
    %v991 = vunpack.c.l.b16 %v896
    %v992 = vunpack.c.h.b16 %v896
    %v993 = vunpack.c.l.b16 %v897
    %v994 = vunpack.c.l.b16 %v898
    %v995 = vunpack.c.h.b16 %v898
    %v996 = vunpack.c.l.b16 %v899
    %v997 = vpack.c.b16 %v952, %v949
    %v998 = vpack.c.b16 %v953, %v950
    %v999 = vpack.c.b16 %v954, %v951
    %v1000 = vpack.c.b16 %v958, %v955
    %v1001 = vpack.c.b16 %v959, %v956
    %v1002 = vpack.c.b16 %v960, %v957
    %v1003 = vpack.c.b16 %v964, %v961
    %v1004 = vpack.c.b16 %v965, %v962
    %v1005 = vpack.c.b16 %v966, %v963
    %v1006 = vpack.c.b16 %v970, %v967
    %v1007 = vpack.c.b16 %v971, %v968
    %v1008 = vpack.c.b16 %v972, %v969
    %v1009 = vpack.c.b16 %v976, %v973
    %v1010 = vpack.c.b16 %v977, %v974
    %v1011 = vpack.c.b16 %v978, %v975
    %v1012 = vpack.c.b16 %v982, %v979
    %v1013 = vpack.c.b16 %v983, %v980
    %v1014 = vpack.c.b16 %v984, %v981
    %v1015 = vpack.c.b16 %v988, %v985
    %v1016 = vpack.c.b16 %v989, %v986
    %v1017 = vpack.c.b16 %v990, %v987
    %v1018 = vpack.c.b16 %v994, %v991
    %v1019 = vpack.c.b16 %v995, %v992
    %v1020 = vpack.c.b16 %v996, %v993
    %1045 = vmatprep.subr.bf16.mxu0 %v998
    %1046 = vmatpush1.bf16.msra.mxu0 %v997
    %1047 = vmatprep.subr.bf16.mxu0 %v1001
    %1048 = vmatpush1.bf16.msra.mxu0 %v1000
    %1049 = vmatprep.subr.bf16.mxu0 %v1004
    %1050 = vmatpush1.bf16.msra.mxu0 %v1003
    %1051 = vmatprep.subr.bf16.mxu0 %v1007
    %1052 = vmatpush1.bf16.msra.mxu0 %v1006
    %1053 = vmatprep.subr.bf16.mxu0 %v1010
    %1054 = vmatpush1.bf16.msra.mxu0 %v1009
    %1055 = vmatprep.subr.bf16.mxu0 %v1013
    %1056 = vmatpush1.bf16.msra.mxu0 %v1012
    %1057 = vmatprep.subr.bf16.mxu0 %v1016
    %1058 = vmatpush1.bf16.msra.mxu0 %v1015
    %1059 = vmatprep.subr.bf16.mxu0 %v1019
    %1060 = vmatpush1.bf16.msra.mxu0 %v1018
    %1061 = vmatprep.subr.bf16.mxu0 0
    %1062 = vmatpush1.bf16.msra.mxu0 0
    %1063 = vmatprep.subr.bf16.mxu0 0
    %1064 = vmatpush1.bf16.msra.mxu0 0
    %1065 = vmatprep.subr.bf16.mxu0 0
    %1066 = vmatpush1.bf16.msra.mxu0 0
    %1067 = vmatprep.subr.bf16.mxu0 0
    %1068 = vmatpush1.bf16.msra.mxu0 0
    %1069 = vmatprep.subr.bf16.mxu0 0
    %1070 = vmatpush1.bf16.msra.mxu0 0
    %1071 = vmatprep.subr.bf16.mxu0 0
    %1072 = vmatpush1.bf16.msra.mxu0 0
    %1073 = vmatprep.subr.bf16.mxu0 0
    %1074 = vmatpush1.bf16.msra.mxu0 0
    %1075 = vmatprep.subr.bf16.mxu0 0
    %1076 = vmatpush1.bf16.msra.mxu0 0
    %1077 = vmatprep.mubr.bf16.mxu0 0
    %1078 = vmatmul.mubr.bf16.gmra.mrb[0].mxu0 %v867
    %v1079 = vpop.f32.mrb[0].mxu0
    %v1080 = vadd.f32 %v905, %v1079
    %v1081 = vpop.f32.mrb[0].mxu0
    %v1082 = vadd.f32 %v909, %v1081
    %v1083 = vpop.f32.mrb[0].mxu0
    %v1084 = vpop.f32.mrb[0].mxu0
    %1085 = vdwg.mxu0
    %1086 = vmatprep.subr.bf16.mxu0 0
    %1087 = vmatpush1.bf16.msra.mxu0 %v999
    %1088 = vmatprep.subr.bf16.mxu0 0
    %1089 = vmatpush1.bf16.msra.mxu0 %v1002
    %1090 = vmatprep.subr.bf16.mxu0 0
    %1091 = vmatpush1.bf16.msra.mxu0 %v1005
    %1092 = vmatprep.subr.bf16.mxu0 0
    %1093 = vmatpush1.bf16.msra.mxu0 %v1008
    %1094 = vmatprep.subr.bf16.mxu0 0
    %1095 = vmatpush1.bf16.msra.mxu0 %v1011
    %1096 = vmatprep.subr.bf16.mxu0 0
    %1097 = vmatpush1.bf16.msra.mxu0 %v1014
    %1098 = vmatprep.subr.bf16.mxu0 0
    %1099 = vmatpush1.bf16.msra.mxu0 %v1017
    %1100 = vmatprep.subr.bf16.mxu0 0
    %1101 = vmatpush1.bf16.msra.mxu0 %v1020
    %1102 = vmatprep.subr.bf16.mxu0 0
    %1103 = vmatpush1.bf16.msra.mxu0 0
    %1104 = vmatprep.subr.bf16.mxu0 0
    %1105 = vmatpush1.bf16.msra.mxu0 0
    %1106 = vmatprep.subr.bf16.mxu0 0
    %1107 = vmatpush1.bf16.msra.mxu0 0
    %1108 = vmatprep.subr.bf16.mxu0 0
    %1109 = vmatpush1.bf16.msra.mxu0 0
    %1110 = vmatprep.subr.bf16.mxu0 0
    %1111 = vmatpush1.bf16.msra.mxu0 0
    %1112 = vmatprep.subr.bf16.mxu0 0
    %1113 = vmatpush1.bf16.msra.mxu0 0
    %1114 = vmatprep.subr.bf16.mxu0 0
    %1115 = vmatpush1.bf16.msra.mxu0 0
    %1116 = vmatprep.subr.bf16.mxu0 0
    %1117 = vmatpush1.bf16.msra.mxu0 0
    %1118 = vmatprep.mubr.bf16.mxu0 0
    %1119 = vmatmul.mubr.bf16.gmra.mrb[0].mxu0 %v867
    %v1120 = vpop.f32.mrb[0].mxu0
    %v1121 = vadd.f32 %v913, %v1120
    %v1122 = vpop.f32.mrb[0].mxu0
    %v1123 = vpop.f32.mrb[0].mxu0
    %v1124 = vpop.f32.mrb[0].mxu0
    %1125 = vdwg.mxu0
    %v1126 = vadd.f32 %v821, %v1080
    %v1127 = vxor.u32 %v1126, 2147483648
    %v1128 = vmul.f32 %v1127, 1.442695
    %v1129 = vpow.pop %v1128
    %v1130 = vadd.f32 %v1129, 1.0
    %v1131 = vrcp.pop %v1130
    %v1132 = vmul.f32 1.0, %v1131
    %v1133 = vadd.f32 %v823, %v1082
    %v1134 = vxor.u32 %v1133, 2147483648
    %v1135 = vmul.f32 %v1134, 1.442695
    %v1136 = vpow.pop %v1135
    %v1137 = vadd.f32 %v1136, 1.0
    %v1138 = vrcp.pop %v1137
    %v1139 = vmul.f32 1.0, %v1138
    %v1140 = vmul.f32 %v1132, %v1121
    %v1141 = vadd.f32 %v862, %v1140
    %v1142 = vtanh.pop %v1141
    %v1143 = vsub.f32 1.0, %v1139
    %v1144 = vmul.f32 %v1143, %v1142
    %v1145 = vmul.f32 %v1139, %v606
    %v1146 = vadd.f32 %v1144, %v1145
    %1147 = vst [vmem:[#allocation2] sm:$0x3] %v1146
    %s1148 = scalar_lea.vmem [#allocation9], 2
    %1149 = vst [vmem:[%s1148] sm:$0x3] %v1146
    %v1150 = vld [vmem:[#allocation2] sm:$0x3]
    %s1151 = scalar_lea.vmem [#allocation3], 2
    %v1152 = vld [vmem:[%s1151] sm:$0x1]
    %v1153 = vld [vmem:[#allocation6] sm:$0xff]
    %v1154 = vld [vmem:[#allocation6 + $0x8] sm:$0xf]
    %v1155 = vld [vmem:[#allocation6 + $0xc] sm:$0xff]
    %v1156 = vld [vmem:[#allocation6 + $0x14] sm:$0xf]
    %v1157 = vld [vmem:[#allocation6 + $0x18] sm:$0xff]
    %v1158 = vld [vmem:[#allocation6 + $0x20] sm:$0xf]
    %v1159 = vld [vmem:[#allocation6 + $0x24] sm:$0xff]
    %v1160 = vld [vmem:[#allocation6 + $0x2c] sm:$0xf]
    %v1161 = vld [vmem:[#allocation6 + $0x30] sm:$0xff]
    %v1162 = vld [vmem:[#allocation6 + $0x38] sm:$0xf]
    %v1163 = vld [vmem:[#allocation6 + $0x3c] sm:$0xff]
    %v1164 = vld [vmem:[#allocation6 + $0x44] sm:$0xf]
    %v1165 = vld [vmem:[#allocation6 + $0x48] sm:$0xff]
    %v1166 = vld [vmem:[#allocation6 + $0x50] sm:$0xf]
    %v1167 = vld [vmem:[#allocation6 + $0x54] sm:$0xff]
    %v1168 = vld [vmem:[#allocation6 + $0x5c] sm:$0xf]
    %v1169 = vld [vmem:[#allocation6 + $0x60] sm:$0xff]
    %v1170 = vld [vmem:[#allocation6 + $0x68] sm:$0xf]
    %v1171 = vld [vmem:[#allocation6 + $0x6c] sm:$0xff]
    %v1172 = vld [vmem:[#allocation6 + $0x74] sm:$0xf]
    %v1173 = vld [vmem:[#allocation6 + $0x78] sm:$0xff]
    %v1174 = vld [vmem:[#allocation6 + $0x80] sm:$0xf]
    %v1175 = vld [vmem:[#allocation6 + $0x84] sm:$0xff]
    %v1176 = vld [vmem:[#allocation6 + $0x8c] sm:$0xf]
    %v1177 = vld [vmem:[#allocation6 + $0x90] sm:$0xff]
    %v1178 = vld [vmem:[#allocation6 + $0x98] sm:$0xf]
    %v1179 = vld [vmem:[#allocation6 + $0x9c] sm:$0xff]
    %v1180 = vld [vmem:[#allocation6 + $0xa4] sm:$0xf]
    %v1181 = vld [vmem:[#allocation6 + $0xa8] sm:$0xff]
    %v1182 = vld [vmem:[#allocation6 + $0xb0] sm:$0xf]
    %v1183 = vld [vmem:[#allocation6 + $0xb4] sm:$0xff]
    %v1184 = vld [vmem:[#allocation6 + $0xbc] sm:$0xf]
    %v1185 = vld [vmem:[%s3] sm:$0x7]
    %v1187 = vlaneseq
    %v1188 = vshrl.u32 %v1187, 7
    %v1189 = vsub.s32 0, %v1188
    %v1190 = vrot.slane %v1185, %v1189
    %v1191 = vlaneseq
    %v1192 = vshrl.u32 %v1191, 7
    %v1193 = vsub.s32 1, %v1192
    %v1194 = vrot.slane %v1185, %v1193
    %v1195 = vlaneseq
    %v1196 = vshrl.u32 %v1195, 7
    %v1197 = vsub.s32 2, %v1196
    %v1198 = vrot.slane %v1185, %v1197
    %v1234 = vunpack.c.l.b16 %v1153
    %v1235 = vunpack.c.h.b16 %v1153
    %v1236 = vunpack.c.l.b16 %v1154
    %v1237 = vunpack.c.l.b16 %v1155
    %v1238 = vunpack.c.h.b16 %v1155
    %v1239 = vunpack.c.l.b16 %v1156
    %v1240 = vunpack.c.l.b16 %v1157
    %v1241 = vunpack.c.h.b16 %v1157
    %v1242 = vunpack.c.l.b16 %v1158
    %v1243 = vunpack.c.l.b16 %v1159
    %v1244 = vunpack.c.h.b16 %v1159
    %v1245 = vunpack.c.l.b16 %v1160
    %v1246 = vunpack.c.l.b16 %v1161
    %v1247 = vunpack.c.h.b16 %v1161
    %v1248 = vunpack.c.l.b16 %v1162
    %v1249 = vunpack.c.l.b16 %v1163
    %v1250 = vunpack.c.h.b16 %v1163
    %v1251 = vunpack.c.l.b16 %v1164
    %v1252 = vunpack.c.l.b16 %v1165
    %v1253 = vunpack.c.h.b16 %v1165
    %v1254 = vunpack.c.l.b16 %v1166
    %v1255 = vunpack.c.l.b16 %v1167
    %v1256 = vunpack.c.h.b16 %v1167
    %v1257 = vunpack.c.l.b16 %v1168
    %v1258 = vunpack.c.l.b16 %v1169
    %v1259 = vunpack.c.h.b16 %v1169
    %v1260 = vunpack.c.l.b16 %v1170
    %v1261 = vunpack.c.l.b16 %v1171
    %v1262 = vunpack.c.h.b16 %v1171
    %v1263 = vunpack.c.l.b16 %v1172
    %v1264 = vunpack.c.l.b16 %v1173
    %v1265 = vunpack.c.h.b16 %v1173
    %v1266 = vunpack.c.l.b16 %v1174
    %v1267 = vunpack.c.l.b16 %v1175
    %v1268 = vunpack.c.h.b16 %v1175
    %v1269 = vunpack.c.l.b16 %v1176
    %v1270 = vunpack.c.l.b16 %v1177
    %v1271 = vunpack.c.h.b16 %v1177
    %v1272 = vunpack.c.l.b16 %v1178
    %v1273 = vunpack.c.l.b16 %v1179
    %v1274 = vunpack.c.h.b16 %v1179
    %v1275 = vunpack.c.l.b16 %v1180
    %v1276 = vunpack.c.l.b16 %v1181
    %v1277 = vunpack.c.h.b16 %v1181
    %v1278 = vunpack.c.l.b16 %v1182
    %v1279 = vunpack.c.l.b16 %v1183
    %v1280 = vunpack.c.h.b16 %v1183
    %v1281 = vunpack.c.l.b16 %v1184
    %v1282 = vpack.c.b16 %v1237, %v1234
    %v1283 = vpack.c.b16 %v1238, %v1235
    %v1284 = vpack.c.b16 %v1239, %v1236
    %v1285 = vpack.c.b16 %v1243, %v1240
    %v1286 = vpack.c.b16 %v1244, %v1241
    %v1287 = vpack.c.b16 %v1245, %v1242
    %v1288 = vpack.c.b16 %v1249, %v1246
    %v1289 = vpack.c.b16 %v1250, %v1247
    %v1290 = vpack.c.b16 %v1251, %v1248
    %v1291 = vpack.c.b16 %v1255, %v1252
    %v1292 = vpack.c.b16 %v1256, %v1253
    %v1293 = vpack.c.b16 %v1257, %v1254
    %v1294 = vpack.c.b16 %v1261, %v1258
    %v1295 = vpack.c.b16 %v1262, %v1259
    %v1296 = vpack.c.b16 %v1263, %v1260
    %v1297 = vpack.c.b16 %v1267, %v1264
    %v1298 = vpack.c.b16 %v1268, %v1265
    %v1299 = vpack.c.b16 %v1269, %v1266
    %v1300 = vpack.c.b16 %v1273, %v1270
    %v1301 = vpack.c.b16 %v1274, %v1271
    %v1302 = vpack.c.b16 %v1275, %v1272
    %v1303 = vpack.c.b16 %v1279, %v1276
    %v1304 = vpack.c.b16 %v1280, %v1277
    %v1305 = vpack.c.b16 %v1281, %v1278
    %1330 = vmatprep.subr.bf16.mxu0 %v1283
    %1331 = vmatpush1.bf16.msra.mxu0 %v1282
    %1332 = vmatprep.subr.bf16.mxu0 %v1286
    %1333 = vmatpush1.bf16.msra.mxu0 %v1285
    %1334 = vmatprep.subr.bf16.mxu0 %v1289
    %1335 = vmatpush1.bf16.msra.mxu0 %v1288
    %1336 = vmatprep.subr.bf16.mxu0 %v1292
    %1337 = vmatpush1.bf16.msra.mxu0 %v1291
    %1338 = vmatprep.subr.bf16.mxu0 %v1295
    %1339 = vmatpush1.bf16.msra.mxu0 %v1294
    %1340 = vmatprep.subr.bf16.mxu0 %v1298
    %1341 = vmatpush1.bf16.msra.mxu0 %v1297
    %1342 = vmatprep.subr.bf16.mxu0 %v1301
    %1343 = vmatpush1.bf16.msra.mxu0 %v1300
    %1344 = vmatprep.subr.bf16.mxu0 %v1304
    %1345 = vmatpush1.bf16.msra.mxu0 %v1303
    %1346 = vmatprep.subr.bf16.mxu0 0
    %1347 = vmatpush1.bf16.msra.mxu0 0
    %1348 = vmatprep.subr.bf16.mxu0 0
    %1349 = vmatpush1.bf16.msra.mxu0 0
    %1350 = vmatprep.subr.bf16.mxu0 0
    %1351 = vmatpush1.bf16.msra.mxu0 0
    %1352 = vmatprep.subr.bf16.mxu0 0
    %1353 = vmatpush1.bf16.msra.mxu0 0
    %1354 = vmatprep.subr.bf16.mxu0 0
    %1355 = vmatpush1.bf16.msra.mxu0 0
    %1356 = vmatprep.subr.bf16.mxu0 0
    %1357 = vmatpush1.bf16.msra.mxu0 0
    %1358 = vmatprep.subr.bf16.mxu0 0
    %1359 = vmatpush1.bf16.msra.mxu0 0
    %1360 = vmatprep.subr.bf16.mxu0 0
    %1361 = vmatpush1.bf16.msra.mxu0 0
    %1362 = vmatprep.mubr.bf16.mxu0 0
    %1363 = vmatmul.mubr.bf16.gmra.mrb[0].mxu0 %v1152
    %v1364 = vpop.f32.mrb[0].mxu0
    %v1365 = vadd.f32 %v1190, %v1364
    %v1366 = vpop.f32.mrb[0].mxu0
    %v1367 = vadd.f32 %v1194, %v1366
    %v1368 = vpop.f32.mrb[0].mxu0
    %v1369 = vpop.f32.mrb[0].mxu0
    %1370 = vdwg.mxu0
    %1371 = vmatprep.subr.bf16.mxu0 0
    %1372 = vmatpush1.bf16.msra.mxu0 %v1284
    %1373 = vmatprep.subr.bf16.mxu0 0
    %1374 = vmatpush1.bf16.msra.mxu0 %v1287
    %1375 = vmatprep.subr.bf16.mxu0 0
    %1376 = vmatpush1.bf16.msra.mxu0 %v1290
    %1377 = vmatprep.subr.bf16.mxu0 0
    %1378 = vmatpush1.bf16.msra.mxu0 %v1293
    %1379 = vmatprep.subr.bf16.mxu0 0
    %1380 = vmatpush1.bf16.msra.mxu0 %v1296
    %1381 = vmatprep.subr.bf16.mxu0 0
    %1382 = vmatpush1.bf16.msra.mxu0 %v1299
    %1383 = vmatprep.subr.bf16.mxu0 0
    %1384 = vmatpush1.bf16.msra.mxu0 %v1302
    %1385 = vmatprep.subr.bf16.mxu0 0
    %1386 = vmatpush1.bf16.msra.mxu0 %v1305
    %1387 = vmatprep.subr.bf16.mxu0 0
    %1388 = vmatpush1.bf16.msra.mxu0 0
    %1389 = vmatprep.subr.bf16.mxu0 0
    %1390 = vmatpush1.bf16.msra.mxu0 0
    %1391 = vmatprep.subr.bf16.mxu0 0
    %1392 = vmatpush1.bf16.msra.mxu0 0
    %1393 = vmatprep.subr.bf16.mxu0 0
    %1394 = vmatpush1.bf16.msra.mxu0 0
    %1395 = vmatprep.subr.bf16.mxu0 0
    %1396 = vmatpush1.bf16.msra.mxu0 0
    %1397 = vmatprep.subr.bf16.mxu0 0
    %1398 = vmatpush1.bf16.msra.mxu0 0
    %1399 = vmatprep.subr.bf16.mxu0 0
    %1400 = vmatpush1.bf16.msra.mxu0 0
    %1401 = vmatprep.subr.bf16.mxu0 0
    %1402 = vmatpush1.bf16.msra.mxu0 0
    %1403 = vmatprep.mubr.bf16.mxu0 0
    %1404 = vmatmul.mubr.bf16.gmra.mrb[0].mxu0 %v1152
    %v1405 = vpop.f32.mrb[0].mxu0
    %v1406 = vadd.f32 %v1198, %v1405
    %v1407 = vpop.f32.mrb[0].mxu0
    %v1408 = vpop.f32.mrb[0].mxu0
    %v1409 = vpop.f32.mrb[0].mxu0
    %1410 = vdwg.mxu0
    %v1411 = vpack.c.bf16 %v1150, %v1150
    %v1412 = vld [vmem:[#allocation8] sm:$0xff]
    %v1413 = vld [vmem:[#allocation8 + $0x8] sm:$0xf]
    %v1414 = vld [vmem:[#allocation8 + $0xc] sm:$0xff]
    %v1415 = vld [vmem:[#allocation8 + $0x14] sm:$0xf]
    %v1416 = vld [vmem:[#allocation8 + $0x18] sm:$0xff]
    %v1417 = vld [vmem:[#allocation8 + $0x20] sm:$0xf]
    %v1418 = vld [vmem:[#allocation8 + $0x24] sm:$0xff]
    %v1419 = vld [vmem:[#allocation8 + $0x2c] sm:$0xf]
    %v1420 = vld [vmem:[#allocation8 + $0x30] sm:$0xff]
    %v1421 = vld [vmem:[#allocation8 + $0x38] sm:$0xf]
    %v1422 = vld [vmem:[#allocation8 + $0x3c] sm:$0xff]
    %v1423 = vld [vmem:[#allocation8 + $0x44] sm:$0xf]
    %v1424 = vld [vmem:[#allocation8 + $0x48] sm:$0xff]
    %v1425 = vld [vmem:[#allocation8 + $0x50] sm:$0xf]
    %v1426 = vld [vmem:[#allocation8 + $0x54] sm:$0xff]
    %v1427 = vld [vmem:[#allocation8 + $0x5c] sm:$0xf]
    %v1428 = vld [vmem:[#allocation8 + $0x60] sm:$0xff]
    %v1429 = vld [vmem:[#allocation8 + $0x68] sm:$0xf]
    %v1430 = vld [vmem:[#allocation8 + $0x6c] sm:$0xff]
    %v1431 = vld [vmem:[#allocation8 + $0x74] sm:$0xf]
    %v1432 = vld [vmem:[#allocation8 + $0x78] sm:$0xff]
    %v1433 = vld [vmem:[#allocation8 + $0x80] sm:$0xf]
    %v1434 = vld [vmem:[#allocation8 + $0x84] sm:$0xff]
    %v1435 = vld [vmem:[#allocation8 + $0x8c] sm:$0xf]
    %v1436 = vld [vmem:[#allocation8 + $0x90] sm:$0xff]
    %v1437 = vld [vmem:[#allocation8 + $0x98] sm:$0xf]
    %v1438 = vld [vmem:[#allocation8 + $0x9c] sm:$0xff]
    %v1439 = vld [vmem:[#allocation8 + $0xa4] sm:$0xf]
    %v1440 = vld [vmem:[#allocation8 + $0xa8] sm:$0xff]
    %v1441 = vld [vmem:[#allocation8 + $0xb0] sm:$0xf]
    %v1442 = vld [vmem:[#allocation8 + $0xb4] sm:$0xff]
    %v1443 = vld [vmem:[#allocation8 + $0xbc] sm:$0xf]
    %v1444 = vld [vmem:[%s4] sm:$0x7]
    %v1446 = vlaneseq
    %v1447 = vshrl.u32 %v1446, 7
    %v1448 = vsub.s32 0, %v1447
    %v1449 = vrot.slane %v1444, %v1448
    %v1450 = vlaneseq
    %v1451 = vshrl.u32 %v1450, 7
    %v1452 = vsub.s32 1, %v1451
    %v1453 = vrot.slane %v1444, %v1452
    %v1454 = vlaneseq
    %v1455 = vshrl.u32 %v1454, 7
    %v1456 = vsub.s32 2, %v1455
    %v1457 = vrot.slane %v1444, %v1456
    %v1493 = vunpack.c.l.b16 %v1412
    %v1494 = vunpack.c.h.b16 %v1412
    %v1495 = vunpack.c.l.b16 %v1413
    %v1496 = vunpack.c.l.b16 %v1414
    %v1497 = vunpack.c.h.b16 %v1414
    %v1498 = vunpack.c.l.b16 %v1415
    %v1499 = vunpack.c.l.b16 %v1416
    %v1500 = vunpack.c.h.b16 %v1416
    %v1501 = vunpack.c.l.b16 %v1417
    %v1502 = vunpack.c.l.b16 %v1418
    %v1503 = vunpack.c.h.b16 %v1418
    %v1504 = vunpack.c.l.b16 %v1419
    %v1505 = vunpack.c.l.b16 %v1420
    %v1506 = vunpack.c.h.b16 %v1420
    %v1507 = vunpack.c.l.b16 %v1421
    %v1508 = vunpack.c.l.b16 %v1422
    %v1509 = vunpack.c.h.b16 %v1422
    %v1510 = vunpack.c.l.b16 %v1423
    %v1511 = vunpack.c.l.b16 %v1424
    %v1512 = vunpack.c.h.b16 %v1424
    %v1513 = vunpack.c.l.b16 %v1425
    %v1514 = vunpack.c.l.b16 %v1426
    %v1515 = vunpack.c.h.b16 %v1426
    %v1516 = vunpack.c.l.b16 %v1427
    %v1517 = vunpack.c.l.b16 %v1428
    %v1518 = vunpack.c.h.b16 %v1428
    %v1519 = vunpack.c.l.b16 %v1429
    %v1520 = vunpack.c.l.b16 %v1430
    %v1521 = vunpack.c.h.b16 %v1430
    %v1522 = vunpack.c.l.b16 %v1431
    %v1523 = vunpack.c.l.b16 %v1432
    %v1524 = vunpack.c.h.b16 %v1432
    %v1525 = vunpack.c.l.b16 %v1433
    %v1526 = vunpack.c.l.b16 %v1434
    %v1527 = vunpack.c.h.b16 %v1434
    %v1528 = vunpack.c.l.b16 %v1435
    %v1529 = vunpack.c.l.b16 %v1436
    %v1530 = vunpack.c.h.b16 %v1436
    %v1531 = vunpack.c.l.b16 %v1437
    %v1532 = vunpack.c.l.b16 %v1438
    %v1533 = vunpack.c.h.b16 %v1438
    %v1534 = vunpack.c.l.b16 %v1439
    %v1535 = vunpack.c.l.b16 %v1440
    %v1536 = vunpack.c.h.b16 %v1440
    %v1537 = vunpack.c.l.b16 %v1441
    %v1538 = vunpack.c.l.b16 %v1442
    %v1539 = vunpack.c.h.b16 %v1442
    %v1540 = vunpack.c.l.b16 %v1443
    %v1541 = vpack.c.b16 %v1496, %v1493
    %v1542 = vpack.c.b16 %v1497, %v1494
    %v1543 = vpack.c.b16 %v1498, %v1495
    %v1544 = vpack.c.b16 %v1502, %v1499
    %v1545 = vpack.c.b16 %v1503, %v1500
    %v1546 = vpack.c.b16 %v1504, %v1501
    %v1547 = vpack.c.b16 %v1508, %v1505
    %v1548 = vpack.c.b16 %v1509, %v1506
    %v1549 = vpack.c.b16 %v1510, %v1507
    %v1550 = vpack.c.b16 %v1514, %v1511
    %v1551 = vpack.c.b16 %v1515, %v1512
    %v1552 = vpack.c.b16 %v1516, %v1513
    %v1553 = vpack.c.b16 %v1520, %v1517
    %v1554 = vpack.c.b16 %v1521, %v1518
    %v1555 = vpack.c.b16 %v1522, %v1519
    %v1556 = vpack.c.b16 %v1526, %v1523
    %v1557 = vpack.c.b16 %v1527, %v1524
    %v1558 = vpack.c.b16 %v1528, %v1525
    %v1559 = vpack.c.b16 %v1532, %v1529
    %v1560 = vpack.c.b16 %v1533, %v1530
    %v1561 = vpack.c.b16 %v1534, %v1531
    %v1562 = vpack.c.b16 %v1538, %v1535
    %v1563 = vpack.c.b16 %v1539, %v1536
    %v1564 = vpack.c.b16 %v1540, %v1537
    %1589 = vmatprep.subr.bf16.mxu0 %v1542
    %1590 = vmatpush1.bf16.msra.mxu0 %v1541
    %1591 = vmatprep.subr.bf16.mxu0 %v1545
    %1592 = vmatpush1.bf16.msra.mxu0 %v1544
    %1593 = vmatprep.subr.bf16.mxu0 %v1548
    %1594 = vmatpush1.bf16.msra.mxu0 %v1547
    %1595 = vmatprep.subr.bf16.mxu0 %v1551
    %1596 = vmatpush1.bf16.msra.mxu0 %v1550
    %1597 = vmatprep.subr.bf16.mxu0 %v1554
    %1598 = vmatpush1.bf16.msra.mxu0 %v1553
    %1599 = vmatprep.subr.bf16.mxu0 %v1557
    %1600 = vmatpush1.bf16.msra.mxu0 %v1556
    %1601 = vmatprep.subr.bf16.mxu0 %v1560
    %1602 = vmatpush1.bf16.msra.mxu0 %v1559
    %1603 = vmatprep.subr.bf16.mxu0 %v1563
    %1604 = vmatpush1.bf16.msra.mxu0 %v1562
    %1605 = vmatprep.subr.bf16.mxu0 0
    %1606 = vmatpush1.bf16.msra.mxu0 0
    %1607 = vmatprep.subr.bf16.mxu0 0
    %1608 = vmatpush1.bf16.msra.mxu0 0
    %1609 = vmatprep.subr.bf16.mxu0 0
    %1610 = vmatpush1.bf16.msra.mxu0 0
    %1611 = vmatprep.subr.bf16.mxu0 0
    %1612 = vmatpush1.bf16.msra.mxu0 0
    %1613 = vmatprep.subr.bf16.mxu0 0
    %1614 = vmatpush1.bf16.msra.mxu0 0
    %1615 = vmatprep.subr.bf16.mxu0 0
    %1616 = vmatpush1.bf16.msra.mxu0 0
    %1617 = vmatprep.subr.bf16.mxu0 0
    %1618 = vmatpush1.bf16.msra.mxu0 0
    %1619 = vmatprep.subr.bf16.mxu0 0
    %1620 = vmatpush1.bf16.msra.mxu0 0
    %1621 = vmatprep.mubr.bf16.mxu0 0
    %1622 = vmatmul.mubr.bf16.gmra.mrb[0].mxu0 %v1411
    %v1623 = vpop.f32.mrb[0].mxu0
    %v1624 = vadd.f32 %v1449, %v1623
    %v1625 = vpop.f32.mrb[0].mxu0
    %v1626 = vadd.f32 %v1453, %v1625
    %v1627 = vpop.f32.mrb[0].mxu0
    %v1628 = vpop.f32.mrb[0].mxu0
    %1629 = vdwg.mxu0
    %1630 = vmatprep.subr.bf16.mxu0 0
    %1631 = vmatpush1.bf16.msra.mxu0 %v1543
    %1632 = vmatprep.subr.bf16.mxu0 0
    %1633 = vmatpush1.bf16.msra.mxu0 %v1546
    %1634 = vmatprep.subr.bf16.mxu0 0
    %1635 = vmatpush1.bf16.msra.mxu0 %v1549
    %1636 = vmatprep.subr.bf16.mxu0 0
    %1637 = vmatpush1.bf16.msra.mxu0 %v1552
    %1638 = vmatprep.subr.bf16.mxu0 0
    %1639 = vmatpush1.bf16.msra.mxu0 %v1555
    %1640 = vmatprep.subr.bf16.mxu0 0
    %1641 = vmatpush1.bf16.msra.mxu0 %v1558
    %1642 = vmatprep.subr.bf16.mxu0 0
    %1643 = vmatpush1.bf16.msra.mxu0 %v1561
    %1644 = vmatprep.subr.bf16.mxu0 0
    %1645 = vmatpush1.bf16.msra.mxu0 %v1564
    %1646 = vmatprep.subr.bf16.mxu0 0
    %1647 = vmatpush1.bf16.msra.mxu0 0
    %1648 = vmatprep.subr.bf16.mxu0 0
    %1649 = vmatpush1.bf16.msra.mxu0 0
    %1650 = vmatprep.subr.bf16.mxu0 0
    %1651 = vmatpush1.bf16.msra.mxu0 0
    %1652 = vmatprep.subr.bf16.mxu0 0
    %1653 = vmatpush1.bf16.msra.mxu0 0
    %1654 = vmatprep.subr.bf16.mxu0 0
    %1655 = vmatpush1.bf16.msra.mxu0 0
    %1656 = vmatprep.subr.bf16.mxu0 0
    %1657 = vmatpush1.bf16.msra.mxu0 0
    %1658 = vmatprep.subr.bf16.mxu0 0
    %1659 = vmatpush1.bf16.msra.mxu0 0
    %1660 = vmatprep.subr.bf16.mxu0 0
    %1661 = vmatpush1.bf16.msra.mxu0 0
    %1662 = vmatprep.mubr.bf16.mxu0 0
    %1663 = vmatmul.mubr.bf16.gmra.mrb[0].mxu0 %v1411
    %v1664 = vpop.f32.mrb[0].mxu0
    %v1665 = vadd.f32 %v1457, %v1664
    %v1666 = vpop.f32.mrb[0].mxu0
    %v1667 = vpop.f32.mrb[0].mxu0
    %v1668 = vpop.f32.mrb[0].mxu0
    %1669 = vdwg.mxu0
    %v1670 = vadd.f32 %v1365, %v1624
    %v1671 = vxor.u32 %v1670, 2147483648
    %v1672 = vmul.f32 %v1671, 1.442695
    %v1673 = vpow.pop %v1672
    %v1674 = vadd.f32 %v1673, 1.0
    %v1675 = vrcp.pop %v1674
    %v1676 = vmul.f32 1.0, %v1675
    %v1677 = vadd.f32 %v1367, %v1626
    %v1678 = vxor.u32 %v1677, 2147483648
    %v1679 = vmul.f32 %v1678, 1.442695
    %v1680 = vpow.pop %v1679
    %v1681 = vadd.f32 %v1680, 1.0
    %v1682 = vrcp.pop %v1681
    %v1683 = vmul.f32 1.0, %v1682
    %v1684 = vmul.f32 %v1676, %v1665
    %v1685 = vadd.f32 %v1406, %v1684
    %v1686 = vtanh.pop %v1685
    %v1687 = vsub.f32 1.0, %v1683
    %v1688 = vmul.f32 %v1687, %v1686
    %v1689 = vmul.f32 %v1683, %v1150
    %v1690 = vadd.f32 %v1688, %v1689
    %1691 = vst [vmem:[#allocation2] sm:$0x3] %v1690
    %s1692 = scalar_lea.vmem [#allocation9], 4
    %1693 = vst [vmem:[%s1692] sm:$0x3] %v1690
    %v1694 = vld [vmem:[#allocation2] sm:$0x3]
    %s1695 = scalar_lea.vmem [#allocation3], 3
    %v1696 = vld [vmem:[%s1695] sm:$0x1]
    %v1697 = vld [vmem:[#allocation6] sm:$0xff]
    %v1698 = vld [vmem:[#allocation6 + $0x8] sm:$0xf]
    %v1699 = vld [vmem:[#allocation6 + $0xc] sm:$0xff]
    %v1700 = vld [vmem:[#allocation6 + $0x14] sm:$0xf]
    %v1701 = vld [vmem:[#allocation6 + $0x18] sm:$0xff]
    %v1702 = vld [vmem:[#allocation6 + $0x20] sm:$0xf]
    %v1703 = vld [vmem:[#allocation6 + $0x24] sm:$0xff]
    %v1704 = vld [vmem:[#allocation6 + $0x2c] sm:$0xf]
    %v1705 = vld [vmem:[#allocation6 + $0x30] sm:$0xff]
    %v1706 = vld [vmem:[#allocation6 + $0x38] sm:$0xf]
    %v1707 = vld [vmem:[#allocation6 + $0x3c] sm:$0xff]
    %v1708 = vld [vmem:[#allocation6 + $0x44] sm:$0xf]
    %v1709 = vld [vmem:[#allocation6 + $0x48] sm:$0xff]
    %v1710 = vld [vmem:[#allocation6 + $0x50] sm:$0xf]
    %v1711 = vld [vmem:[#allocation6 + $0x54] sm:$0xff]
    %v1712 = vld [vmem:[#allocation6 + $0x5c] sm:$0xf]
    %v1713 = vld [vmem:[#allocation6 + $0x60] sm:$0xff]
    %v1714 = vld [vmem:[#allocation6 + $0x68] sm:$0xf]
    %v1715 = vld [vmem:[#allocation6 + $0x6c] sm:$0xff]
    %v1716 = vld [vmem:[#allocation6 + $0x74] sm:$0xf]
    %v1717 = vld [vmem:[#allocation6 + $0x78] sm:$0xff]
    %v1718 = vld [vmem:[#allocation6 + $0x80] sm:$0xf]
    %v1719 = vld [vmem:[#allocation6 + $0x84] sm:$0xff]
    %v1720 = vld [vmem:[#allocation6 + $0x8c] sm:$0xf]
    %v1721 = vld [vmem:[#allocation6 + $0x90] sm:$0xff]
    %v1722 = vld [vmem:[#allocation6 + $0x98] sm:$0xf]
    %v1723 = vld [vmem:[#allocation6 + $0x9c] sm:$0xff]
    %v1724 = vld [vmem:[#allocation6 + $0xa4] sm:$0xf]
    %v1725 = vld [vmem:[#allocation6 + $0xa8] sm:$0xff]
    %v1726 = vld [vmem:[#allocation6 + $0xb0] sm:$0xf]
    %v1727 = vld [vmem:[#allocation6 + $0xb4] sm:$0xff]
    %v1728 = vld [vmem:[#allocation6 + $0xbc] sm:$0xf]
    %v1729 = vld [vmem:[%s3] sm:$0x7]
    %v1731 = vlaneseq
    %v1732 = vshrl.u32 %v1731, 7
    %v1733 = vsub.s32 0, %v1732
    %v1734 = vrot.slane %v1729, %v1733
    %v1735 = vlaneseq
    %v1736 = vshrl.u32 %v1735, 7
    %v1737 = vsub.s32 1, %v1736
    %v1738 = vrot.slane %v1729, %v1737
    %v1739 = vlaneseq
    %v1740 = vshrl.u32 %v1739, 7
    %v1741 = vsub.s32 2, %v1740
    %v1742 = vrot.slane %v1729, %v1741
    %v1778 = vunpack.c.l.b16 %v1697
    %v1779 = vunpack.c.h.b16 %v1697
    %v1780 = vunpack.c.l.b16 %v1698
    %v1781 = vunpack.c.l.b16 %v1699
    %v1782 = vunpack.c.h.b16 %v1699
    %v1783 = vunpack.c.l.b16 %v1700
    %v1784 = vunpack.c.l.b16 %v1701
    %v1785 = vunpack.c.h.b16 %v1701
    %v1786 = vunpack.c.l.b16 %v1702
    %v1787 = vunpack.c.l.b16 %v1703
    %v1788 = vunpack.c.h.b16 %v1703
    %v1789 = vunpack.c.l.b16 %v1704
    %v1790 = vunpack.c.l.b16 %v1705
    %v1791 = vunpack.c.h.b16 %v1705
    %v1792 = vunpack.c.l.b16 %v1706
    %v1793 = vunpack.c.l.b16 %v1707
    %v1794 = vunpack.c.h.b16 %v1707
    %v1795 = vunpack.c.l.b16 %v1708
    %v1796 = vunpack.c.l.b16 %v1709
    %v1797 = vunpack.c.h.b16 %v1709
    %v1798 = vunpack.c.l.b16 %v1710
    %v1799 = vunpack.c.l.b16 %v1711
    %v1800 = vunpack.c.h.b16 %v1711
    %v1801 = vunpack.c.l.b16 %v1712
    %v1802 = vunpack.c.l.b16 %v1713
    %v1803 = vunpack.c.h.b16 %v1713
    %v1804 = vunpack.c.l.b16 %v1714
    %v1805 = vunpack.c.l.b16 %v1715
    %v1806 = vunpack.c.h.b16 %v1715
    %v1807 = vunpack.c.l.b16 %v1716
    %v1808 = vunpack.c.l.b16 %v1717
    %v1809 = vunpack.c.h.b16 %v1717
    %v1810 = vunpack.c.l.b16 %v1718
    %v1811 = vunpack.c.l.b16 %v1719
    %v1812 = vunpack.c.h.b16 %v1719
    %v1813 = vunpack.c.l.b16 %v1720
    %v1814 = vunpack.c.l.b16 %v1721
    %v1815 = vunpack.c.h.b16 %v1721
    %v1816 = vunpack.c.l.b16 %v1722
    %v1817 = vunpack.c.l.b16 %v1723
    %v1818 = vunpack.c.h.b16 %v1723
    %v1819 = vunpack.c.l.b16 %v1724
    %v1820 = vunpack.c.l.b16 %v1725
    %v1821 = vunpack.c.h.b16 %v1725
    %v1822 = vunpack.c.l.b16 %v1726
    %v1823 = vunpack.c.l.b16 %v1727
    %v1824 = vunpack.c.h.b16 %v1727
    %v1825 = vunpack.c.l.b16 %v1728
    %v1826 = vpack.c.b16 %v1781, %v1778
    %v1827 = vpack.c.b16 %v1782, %v1779
    %v1828 = vpack.c.b16 %v1783, %v1780
    %v1829 = vpack.c.b16 %v1787, %v1784
    %v1830 = vpack.c.b16 %v1788, %v1785
    %v1831 = vpack.c.b16 %v1789, %v1786
    %v1832 = vpack.c.b16 %v1793, %v1790
    %v1833 = vpack.c.b16 %v1794, %v1791
    %v1834 = vpack.c.b16 %v1795, %v1792
    %v1835 = vpack.c.b16 %v1799, %v1796
    %v1836 = vpack.c.b16 %v1800, %v1797
    %v1837 = vpack.c.b16 %v1801, %v1798
    %v1838 = vpack.c.b16 %v1805, %v1802
    %v1839 = vpack.c.b16 %v1806, %v1803
    %v1840 = vpack.c.b16 %v1807, %v1804
    %v1841 = vpack.c.b16 %v1811, %v1808
    %v1842 = vpack.c.b16 %v1812, %v1809
    %v1843 = vpack.c.b16 %v1813, %v1810
    %v1844 = vpack.c.b16 %v1817, %v1814
    %v1845 = vpack.c.b16 %v1818, %v1815
    %v1846 = vpack.c.b16 %v1819, %v1816
    %v1847 = vpack.c.b16 %v1823, %v1820
    %v1848 = vpack.c.b16 %v1824, %v1821
    %v1849 = vpack.c.b16 %v1825, %v1822
    %1874 = vmatprep.subr.bf16.mxu0 %v1827
    %1875 = vmatpush1.bf16.msra.mxu0 %v1826
    %1876 = vmatprep.subr.bf16.mxu0 %v1830
    %1877 = vmatpush1.bf16.msra.mxu0 %v1829
    %1878 = vmatprep.subr.bf16.mxu0 %v1833
    %1879 = vmatpush1.bf16.msra.mxu0 %v1832
    %1880 = vmatprep.subr.bf16.mxu0 %v1836
    %1881 = vmatpush1.bf16.msra.mxu0 %v1835
    %1882 = vmatprep.subr.bf16.mxu0 %v1839
    %1883 = vmatpush1.bf16.msra.mxu0 %v1838
    %1884 = vmatprep.subr.bf16.mxu0 %v1842
    %1885 = vmatpush1.bf16.msra.mxu0 %v1841
    %1886 = vmatprep.subr.bf16.mxu0 %v1845
    %1887 = vmatpush1.bf16.msra.mxu0 %v1844
    %1888 = vmatprep.subr.bf16.mxu0 %v1848
    %1889 = vmatpush1.bf16.msra.mxu0 %v1847
    %1890 = vmatprep.subr.bf16.mxu0 0
    %1891 = vmatpush1.bf16.msra.mxu0 0
    %1892 = vmatprep.subr.bf16.mxu0 0
    %1893 = vmatpush1.bf16.msra.mxu0 0
    %1894 = vmatprep.subr.bf16.mxu0 0
    %1895 = vmatpush1.bf16.msra.mxu0 0
    %1896 = vmatprep.subr.bf16.mxu0 0
    %1897 = vmatpush1.bf16.msra.mxu0 0
    %1898 = vmatprep.subr.bf16.mxu0 0
    %1899 = vmatpush1.bf16.msra.mxu0 0
    %1900 = vmatprep.subr.bf16.mxu0 0
    %1901 = vmatpush1.bf16.msra.mxu0 0
    %1902 = vmatprep.subr.bf16.mxu0 0
    %1903 = vmatpush1.bf16.msra.mxu0 0
    %1904 = vmatprep.subr.bf16.mxu0 0
    %1905 = vmatpush1.bf16.msra.mxu0 0
    %1906 = vmatprep.mubr.bf16.mxu0 0
    %1907 = vmatmul.mubr.bf16.gmra.mrb[0].mxu0 %v1696
    %v1908 = vpop.f32.mrb[0].mxu0
    %v1909 = vadd.f32 %v1734, %v1908
    %v1910 = vpop.f32.mrb[0].mxu0
    %v1911 = vadd.f32 %v1738, %v1910
    %v1912 = vpop.f32.mrb[0].mxu0
    %v1913 = vpop.f32.mrb[0].mxu0
    %1914 = vdwg.mxu0
    %1915 = vmatprep.subr.bf16.mxu0 0
    %1916 = vmatpush1.bf16.msra.mxu0 %v1828
    %1917 = vmatprep.subr.bf16.mxu0 0
    %1918 = vmatpush1.bf16.msra.mxu0 %v1831
    %1919 = vmatprep.subr.bf16.mxu0 0
    %1920 = vmatpush1.bf16.msra.mxu0 %v1834
    %1921 = vmatprep.subr.bf16.mxu0 0
    %1922 = vmatpush1.bf16.msra.mxu0 %v1837
    %1923 = vmatprep.subr.bf16.mxu0 0
    %1924 = vmatpush1.bf16.msra.mxu0 %v1840
    %1925 = vmatprep.subr.bf16.mxu0 0
    %1926 = vmatpush1.bf16.msra.mxu0 %v1843
    %1927 = vmatprep.subr.bf16.mxu0 0
    %1928 = vmatpush1.bf16.msra.mxu0 %v1846
    %1929 = vmatprep.subr.bf16.mxu0 0
    %1930 = vmatpush1.bf16.msra.mxu0 %v1849
    %1931 = vmatprep.subr.bf16.mxu0 0
    %1932 = vmatpush1.bf16.msra.mxu0 0
    %1933 = vmatprep.subr.bf16.mxu0 0
    %1934 = vmatpush1.bf16.msra.mxu0 0
    %1935 = vmatprep.subr.bf16.mxu0 0
    %1936 = vmatpush1.bf16.msra.mxu0 0
    %1937 = vmatprep.subr.bf16.mxu0 0
    %1938 = vmatpush1.bf16.msra.mxu0 0
    %1939 = vmatprep.subr.bf16.mxu0 0
    %1940 = vmatpush1.bf16.msra.mxu0 0
    %1941 = vmatprep.subr.bf16.mxu0 0
    %1942 = vmatpush1.bf16.msra.mxu0 0
    %1943 = vmatprep.subr.bf16.mxu0 0
    %1944 = vmatpush1.bf16.msra.mxu0 0
    %1945 = vmatprep.subr.bf16.mxu0 0
    %1946 = vmatpush1.bf16.msra.mxu0 0
    %1947 = vmatprep.mubr.bf16.mxu0 0
    %1948 = vmatmul.mubr.bf16.gmra.mrb[0].mxu0 %v1696
    %v1949 = vpop.f32.mrb[0].mxu0
    %v1950 = vadd.f32 %v1742, %v1949
    %v1951 = vpop.f32.mrb[0].mxu0
    %v1952 = vpop.f32.mrb[0].mxu0
    %v1953 = vpop.f32.mrb[0].mxu0
    %1954 = vdwg.mxu0
    %v1955 = vpack.c.bf16 %v1694, %v1694
    %v1956 = vld [vmem:[#allocation8] sm:$0xff]
    %v1957 = vld [vmem:[#allocation8 + $0x8] sm:$0xf]
    %v1958 = vld [vmem:[#allocation8 + $0xc] sm:$0xff]
    %v1959 = vld [vmem:[#allocation8 + $0x14] sm:$0xf]
    %v1960 = vld [vmem:[#allocation8 + $0x18] sm:$0xff]
    %v1961 = vld [vmem:[#allocation8 + $0x20] sm:$0xf]
    %v1962 = vld [vmem:[#allocation8 + $0x24] sm:$0xff]
    %v1963 = vld [vmem:[#allocation8 + $0x2c] sm:$0xf]
    %v1964 = vld [vmem:[#allocation8 + $0x30] sm:$0xff]
    %v1965 = vld [vmem:[#allocation8 + $0x38] sm:$0xf]
    %v1966 = vld [vmem:[#allocation8 + $0x3c] sm:$0xff]
    %v1967 = vld [vmem:[#allocation8 + $0x44] sm:$0xf]
    %v1968 = vld [vmem:[#allocation8 + $0x48] sm:$0xff]
    %v1969 = vld [vmem:[#allocation8 + $0x50] sm:$0xf]
    %v1970 = vld [vmem:[#allocation8 + $0x54] sm:$0xff]
    %v1971 = vld [vmem:[#allocation8 + $0x5c] sm:$0xf]
    %v1972 = vld [vmem:[#allocation8 + $0x60] sm:$0xff]
    %v1973 = vld [vmem:[#allocation8 + $0x68] sm:$0xf]
    %v1974 = vld [vmem:[#allocation8 + $0x6c] sm:$0xff]
    %v1975 = vld [vmem:[#allocation8 + $0x74] sm:$0xf]
    %v1976 = vld [vmem:[#allocation8 + $0x78] sm:$0xff]
    %v1977 = vld [vmem:[#allocation8 + $0x80] sm:$0xf]
    %v1978 = vld [vmem:[#allocation8 + $0x84] sm:$0xff]
    %v1979 = vld [vmem:[#allocation8 + $0x8c] sm:$0xf]
    %v1980 = vld [vmem:[#allocation8 + $0x90] sm:$0xff]
    %v1981 = vld [vmem:[#allocation8 + $0x98] sm:$0xf]
    %v1982 = vld [vmem:[#allocation8 + $0x9c] sm:$0xff]
    %v1983 = vld [vmem:[#allocation8 + $0xa4] sm:$0xf]
    %v1984 = vld [vmem:[#allocation8 + $0xa8] sm:$0xff]
    %v1985 = vld [vmem:[#allocation8 + $0xb0] sm:$0xf]
    %v1986 = vld [vmem:[#allocation8 + $0xb4] sm:$0xff]
    %v1987 = vld [vmem:[#allocation8 + $0xbc] sm:$0xf]
    %v1988 = vld [vmem:[%s4] sm:$0x7]
    %v1990 = vlaneseq
    %v1991 = vshrl.u32 %v1990, 7
    %v1992 = vsub.s32 0, %v1991
    %v1993 = vrot.slane %v1988, %v1992
    %v1994 = vlaneseq
    %v1995 = vshrl.u32 %v1994, 7
    %v1996 = vsub.s32 1, %v1995
    %v1997 = vrot.slane %v1988, %v1996
    %v1998 = vlaneseq
    %v1999 = vshrl.u32 %v1998, 7
    %v2000 = vsub.s32 2, %v1999
    %v2001 = vrot.slane %v1988, %v2000
    %v2037 = vunpack.c.l.b16 %v1956
    %v2038 = vunpack.c.h.b16 %v1956
    %v2039 = vunpack.c.l.b16 %v1957
    %v2040 = vunpack.c.l.b16 %v1958
    %v2041 = vunpack.c.h.b16 %v1958
    %v2042 = vunpack.c.l.b16 %v1959
    %v2043 = vunpack.c.l.b16 %v1960
    %v2044 = vunpack.c.h.b16 %v1960
    %v2045 = vunpack.c.l.b16 %v1961
    %v2046 = vunpack.c.l.b16 %v1962
    %v2047 = vunpack.c.h.b16 %v1962
    %v2048 = vunpack.c.l.b16 %v1963
    %v2049 = vunpack.c.l.b16 %v1964
    %v2050 = vunpack.c.h.b16 %v1964
    %v2051 = vunpack.c.l.b16 %v1965
    %v2052 = vunpack.c.l.b16 %v1966
    %v2053 = vunpack.c.h.b16 %v1966
    %v2054 = vunpack.c.l.b16 %v1967
    %v2055 = vunpack.c.l.b16 %v1968
    %v2056 = vunpack.c.h.b16 %v1968
    %v2057 = vunpack.c.l.b16 %v1969
    %v2058 = vunpack.c.l.b16 %v1970
    %v2059 = vunpack.c.h.b16 %v1970
    %v2060 = vunpack.c.l.b16 %v1971
    %v2061 = vunpack.c.l.b16 %v1972
    %v2062 = vunpack.c.h.b16 %v1972
    %v2063 = vunpack.c.l.b16 %v1973
    %v2064 = vunpack.c.l.b16 %v1974
    %v2065 = vunpack.c.h.b16 %v1974
    %v2066 = vunpack.c.l.b16 %v1975
    %v2067 = vunpack.c.l.b16 %v1976
    %v2068 = vunpack.c.h.b16 %v1976
    %v2069 = vunpack.c.l.b16 %v1977
    %v2070 = vunpack.c.l.b16 %v1978
    %v2071 = vunpack.c.h.b16 %v1978
    %v2072 = vunpack.c.l.b16 %v1979
    %v2073 = vunpack.c.l.b16 %v1980
    %v2074 = vunpack.c.h.b16 %v1980
    %v2075 = vunpack.c.l.b16 %v1981
    %v2076 = vunpack.c.l.b16 %v1982
    %v2077 = vunpack.c.h.b16 %v1982
    %v2078 = vunpack.c.l.b16 %v1983
    %v2079 = vunpack.c.l.b16 %v1984
    %v2080 = vunpack.c.h.b16 %v1984
    %v2081 = vunpack.c.l.b16 %v1985
    %v2082 = vunpack.c.l.b16 %v1986
    %v2083 = vunpack.c.h.b16 %v1986
    %v2084 = vunpack.c.l.b16 %v1987
    %v2085 = vpack.c.b16 %v2040, %v2037
    %v2086 = vpack.c.b16 %v2041, %v2038
    %v2087 = vpack.c.b16 %v2042, %v2039
    %v2088 = vpack.c.b16 %v2046, %v2043
    %v2089 = vpack.c.b16 %v2047, %v2044
    %v2090 = vpack.c.b16 %v2048, %v2045
    %v2091 = vpack.c.b16 %v2052, %v2049
    %v2092 = vpack.c.b16 %v2053, %v2050
    %v2093 = vpack.c.b16 %v2054, %v2051
    %v2094 = vpack.c.b16 %v2058, %v2055
    %v2095 = vpack.c.b16 %v2059, %v2056
    %v2096 = vpack.c.b16 %v2060, %v2057
    %v2097 = vpack.c.b16 %v2064, %v2061
    %v2098 = vpack.c.b16 %v2065, %v2062
    %v2099 = vpack.c.b16 %v2066, %v2063
    %v2100 = vpack.c.b16 %v2070, %v2067
    %v2101 = vpack.c.b16 %v2071, %v2068
    %v2102 = vpack.c.b16 %v2072, %v2069
    %v2103 = vpack.c.b16 %v2076, %v2073
    %v2104 = vpack.c.b16 %v2077, %v2074
    %v2105 = vpack.c.b16 %v2078, %v2075
    %v2106 = vpack.c.b16 %v2082, %v2079
    %v2107 = vpack.c.b16 %v2083, %v2080
    %v2108 = vpack.c.b16 %v2084, %v2081
    %2133 = vmatprep.subr.bf16.mxu0 %v2086
    %2134 = vmatpush1.bf16.msra.mxu0 %v2085
    %2135 = vmatprep.subr.bf16.mxu0 %v2089
    %2136 = vmatpush1.bf16.msra.mxu0 %v2088
    %2137 = vmatprep.subr.bf16.mxu0 %v2092
    %2138 = vmatpush1.bf16.msra.mxu0 %v2091
    %2139 = vmatprep.subr.bf16.mxu0 %v2095
    %2140 = vmatpush1.bf16.msra.mxu0 %v2094
    %2141 = vmatprep.subr.bf16.mxu0 %v2098
    %2142 = vmatpush1.bf16.msra.mxu0 %v2097
    %2143 = vmatprep.subr.bf16.mxu0 %v2101
    %2144 = vmatpush1.bf16.msra.mxu0 %v2100
    %2145 = vmatprep.subr.bf16.mxu0 %v2104
    %2146 = vmatpush1.bf16.msra.mxu0 %v2103
    %2147 = vmatprep.subr.bf16.mxu0 %v2107
    %2148 = vmatpush1.bf16.msra.mxu0 %v2106
    %2149 = vmatprep.subr.bf16.mxu0 0
    %2150 = vmatpush1.bf16.msra.mxu0 0
    %2151 = vmatprep.subr.bf16.mxu0 0
    %2152 = vmatpush1.bf16.msra.mxu0 0
    %2153 = vmatprep.subr.bf16.mxu0 0
    %2154 = vmatpush1.bf16.msra.mxu0 0
    %2155 = vmatprep.subr.bf16.mxu0 0
    %2156 = vmatpush1.bf16.msra.mxu0 0
    %2157 = vmatprep.subr.bf16.mxu0 0
    %2158 = vmatpush1.bf16.msra.mxu0 0
    %2159 = vmatprep.subr.bf16.mxu0 0
    %2160 = vmatpush1.bf16.msra.mxu0 0
    %2161 = vmatprep.subr.bf16.mxu0 0
    %2162 = vmatpush1.bf16.msra.mxu0 0
    %2163 = vmatprep.subr.bf16.mxu0 0
    %2164 = vmatpush1.bf16.msra.mxu0 0
    %2165 = vmatprep.mubr.bf16.mxu0 0
    %2166 = vmatmul.mubr.bf16.gmra.mrb[0].mxu0 %v1955
    %v2167 = vpop.f32.mrb[0].mxu0
    %v2168 = vadd.f32 %v1993, %v2167
    %v2169 = vpop.f32.mrb[0].mxu0
    %v2170 = vadd.f32 %v1997, %v2169
    %v2171 = vpop.f32.mrb[0].mxu0
    %v2172 = vpop.f32.mrb[0].mxu0
    %2173 = vdwg.mxu0
    %2174 = vmatprep.subr.bf16.mxu0 0
    %2175 = vmatpush1.bf16.msra.mxu0 %v2087
    %2176 = vmatprep.subr.bf16.mxu0 0
    %2177 = vmatpush1.bf16.msra.mxu0 %v2090
    %2178 = vmatprep.subr.bf16.mxu0 0
    %2179 = vmatpush1.bf16.msra.mxu0 %v2093
    %2180 = vmatprep.subr.bf16.mxu0 0
    %2181 = vmatpush1.bf16.msra.mxu0 %v2096
    %2182 = vmatprep.subr.bf16.mxu0 0
    %2183 = vmatpush1.bf16.msra.mxu0 %v2099
    %2184 = vmatprep.subr.bf16.mxu0 0
    %2185 = vmatpush1.bf16.msra.mxu0 %v2102
    %2186 = vmatprep.subr.bf16.mxu0 0
    %2187 = vmatpush1.bf16.msra.mxu0 %v2105
    %2188 = vmatprep.subr.bf16.mxu0 0
    %2189 = vmatpush1.bf16.msra.mxu0 %v2108
    %2190 = vmatprep.subr.bf16.mxu0 0
    %2191 = vmatpush1.bf16.msra.mxu0 0
    %2192 = vmatprep.subr.bf16.mxu0 0
    %2193 = vmatpush1.bf16.msra.mxu0 0
    %2194 = vmatprep.subr.bf16.mxu0 0
    %2195 = vmatpush1.bf16.msra.mxu0 0
    %2196 = vmatprep.subr.bf16.mxu0 0
    %2197 = vmatpush1.bf16.msra.mxu0 0
    %2198 = vmatprep.subr.bf16.mxu0 0
    %2199 = vmatpush1.bf16.msra.mxu0 0
    %2200 = vmatprep.subr.bf16.mxu0 0
    %2201 = vmatpush1.bf16.msra.mxu0 0
    %2202 = vmatprep.subr.bf16.mxu0 0
    %2203 = vmatpush1.bf16.msra.mxu0 0
    %2204 = vmatprep.subr.bf16.mxu0 0
    %2205 = vmatpush1.bf16.msra.mxu0 0
    %2206 = vmatprep.mubr.bf16.mxu0 0
    %2207 = vmatmul.mubr.bf16.gmra.mrb[0].mxu0 %v1955
    %v2208 = vpop.f32.mrb[0].mxu0
    %v2209 = vadd.f32 %v2001, %v2208
    %v2210 = vpop.f32.mrb[0].mxu0
    %v2211 = vpop.f32.mrb[0].mxu0
    %v2212 = vpop.f32.mrb[0].mxu0
    %2213 = vdwg.mxu0
    %v2214 = vadd.f32 %v1909, %v2168
    %v2215 = vxor.u32 %v2214, 2147483648
    %v2216 = vmul.f32 %v2215, 1.442695
    %v2217 = vpow.pop %v2216
    %v2218 = vadd.f32 %v2217, 1.0
    %v2219 = vrcp.pop %v2218
    %v2220 = vmul.f32 1.0, %v2219
    %v2221 = vadd.f32 %v1911, %v2170
    %v2222 = vxor.u32 %v2221, 2147483648
    %v2223 = vmul.f32 %v2222, 1.442695
    %v2224 = vpow.pop %v2223
    %v2225 = vadd.f32 %v2224, 1.0
    %v2226 = vrcp.pop %v2225
    %v2227 = vmul.f32 1.0, %v2226
    %v2228 = vmul.f32 %v2220, %v2209
    %v2229 = vadd.f32 %v1950, %v2228
    %v2230 = vtanh.pop %v2229
    %v2231 = vsub.f32 1.0, %v2227
    %v2232 = vmul.f32 %v2231, %v2230
    %v2233 = vmul.f32 %v2227, %v1694
    %v2234 = vadd.f32 %v2232, %v2233
    %2235 = vst [vmem:[#allocation2] sm:$0x3] %v2234
    %s2236 = scalar_lea.vmem [#allocation9], 6
    %2237 = vst [vmem:[%s2236] sm:$0x3] %v2234
    %v2238 = vld [vmem:[#allocation2] sm:$0x3]
    %s2239 = scalar_lea.vmem [#allocation3], 4
    %v2240 = vld [vmem:[%s2239] sm:$0x1]
    %v2241 = vld [vmem:[#allocation6] sm:$0xff]
    %v2242 = vld [vmem:[#allocation6 + $0x8] sm:$0xf]
    %v2243 = vld [vmem:[#allocation6 + $0xc] sm:$0xff]
    %v2244 = vld [vmem:[#allocation6 + $0x14] sm:$0xf]
    %v2245 = vld [vmem:[#allocation6 + $0x18] sm:$0xff]
    %v2246 = vld [vmem:[#allocation6 + $0x20] sm:$0xf]
    %v2247 = vld [vmem:[#allocation6 + $0x24] sm:$0xff]
    %v2248 = vld [vmem:[#allocation6 + $0x2c] sm:$0xf]
    %v2249 = vld [vmem:[#allocation6 + $0x30] sm:$0xff]
    %v2250 = vld [vmem:[#allocation6 + $0x38] sm:$0xf]
    %v2251 = vld [vmem:[#allocation6 + $0x3c] sm:$0xff]
    %v2252 = vld [vmem:[#allocation6 + $0x44] sm:$0xf]
    %v2253 = vld [vmem:[#allocation6 + $0x48] sm:$0xff]
    %v2254 = vld [vmem:[#allocation6 + $0x50] sm:$0xf]
    %v2255 = vld [vmem:[#allocation6 + $0x54] sm:$0xff]
    %v2256 = vld [vmem:[#allocation6 + $0x5c] sm:$0xf]
    %v2257 = vld [vmem:[#allocation6 + $0x60] sm:$0xff]
    %v2258 = vld [vmem:[#allocation6 + $0x68] sm:$0xf]
    %v2259 = vld [vmem:[#allocation6 + $0x6c] sm:$0xff]
    %v2260 = vld [vmem:[#allocation6 + $0x74] sm:$0xf]
    %v2261 = vld [vmem:[#allocation6 + $0x78] sm:$0xff]
    %v2262 = vld [vmem:[#allocation6 + $0x80] sm:$0xf]
    %v2263 = vld [vmem:[#allocation6 + $0x84] sm:$0xff]
    %v2264 = vld [vmem:[#allocation6 + $0x8c] sm:$0xf]
    %v2265 = vld [vmem:[#allocation6 + $0x90] sm:$0xff]
    %v2266 = vld [vmem:[#allocation6 + $0x98] sm:$0xf]
    %v2267 = vld [vmem:[#allocation6 + $0x9c] sm:$0xff]
    %v2268 = vld [vmem:[#allocation6 + $0xa4] sm:$0xf]
    %v2269 = vld [vmem:[#allocation6 + $0xa8] sm:$0xff]
    %v2270 = vld [vmem:[#allocation6 + $0xb0] sm:$0xf]
    %v2271 = vld [vmem:[#allocation6 + $0xb4] sm:$0xff]
    %v2272 = vld [vmem:[#allocation6 + $0xbc] sm:$0xf]
    %v2273 = vld [vmem:[%s3] sm:$0x7]
    %v2275 = vlaneseq
    %v2276 = vshrl.u32 %v2275, 7
    %v2277 = vsub.s32 0, %v2276
    %v2278 = vrot.slane %v2273, %v2277
    %v2279 = vlaneseq
    %v2280 = vshrl.u32 %v2279, 7
    %v2281 = vsub.s32 1, %v2280
    %v2282 = vrot.slane %v2273, %v2281
    %v2283 = vlaneseq
    %v2284 = vshrl.u32 %v2283, 7
    %v2285 = vsub.s32 2, %v2284
    %v2286 = vrot.slane %v2273, %v2285
    %v2322 = vunpack.c.l.b16 %v2241
    %v2323 = vunpack.c.h.b16 %v2241
    %v2324 = vunpack.c.l.b16 %v2242
    %v2325 = vunpack.c.l.b16 %v2243
    %v2326 = vunpack.c.h.b16 %v2243
    %v2327 = vunpack.c.l.b16 %v2244
    %v2328 = vunpack.c.l.b16 %v2245
    %v2329 = vunpack.c.h.b16 %v2245
    %v2330 = vunpack.c.l.b16 %v2246
    %v2331 = vunpack.c.l.b16 %v2247
    %v2332 = vunpack.c.h.b16 %v2247
    %v2333 = vunpack.c.l.b16 %v2248
    %v2334 = vunpack.c.l.b16 %v2249
    %v2335 = vunpack.c.h.b16 %v2249
    %v2336 = vunpack.c.l.b16 %v2250
    %v2337 = vunpack.c.l.b16 %v2251
    %v2338 = vunpack.c.h.b16 %v2251
    %v2339 = vunpack.c.l.b16 %v2252
    %v2340 = vunpack.c.l.b16 %v2253
    %v2341 = vunpack.c.h.b16 %v2253
    %v2342 = vunpack.c.l.b16 %v2254
    %v2343 = vunpack.c.l.b16 %v2255
    %v2344 = vunpack.c.h.b16 %v2255
    %v2345 = vunpack.c.l.b16 %v2256
    %v2346 = vunpack.c.l.b16 %v2257
    %v2347 = vunpack.c.h.b16 %v2257
    %v2348 = vunpack.c.l.b16 %v2258
    %v2349 = vunpack.c.l.b16 %v2259
    %v2350 = vunpack.c.h.b16 %v2259
    %v2351 = vunpack.c.l.b16 %v2260
    %v2352 = vunpack.c.l.b16 %v2261
    %v2353 = vunpack.c.h.b16 %v2261
    %v2354 = vunpack.c.l.b16 %v2262
    %v2355 = vunpack.c.l.b16 %v2263
    %v2356 = vunpack.c.h.b16 %v2263
    %v2357 = vunpack.c.l.b16 %v2264
    %v2358 = vunpack.c.l.b16 %v2265
    %v2359 = vunpack.c.h.b16 %v2265
    %v2360 = vunpack.c.l.b16 %v2266
    %v2361 = vunpack.c.l.b16 %v2267
    %v2362 = vunpack.c.h.b16 %v2267
    %v2363 = vunpack.c.l.b16 %v2268
    %v2364 = vunpack.c.l.b16 %v2269
    %v2365 = vunpack.c.h.b16 %v2269
    %v2366 = vunpack.c.l.b16 %v2270
    %v2367 = vunpack.c.l.b16 %v2271
    %v2368 = vunpack.c.h.b16 %v2271
    %v2369 = vunpack.c.l.b16 %v2272
    %v2370 = vpack.c.b16 %v2325, %v2322
    %v2371 = vpack.c.b16 %v2326, %v2323
    %v2372 = vpack.c.b16 %v2327, %v2324
    %v2373 = vpack.c.b16 %v2331, %v2328
    %v2374 = vpack.c.b16 %v2332, %v2329
    %v2375 = vpack.c.b16 %v2333, %v2330
    %v2376 = vpack.c.b16 %v2337, %v2334
    %v2377 = vpack.c.b16 %v2338, %v2335
    %v2378 = vpack.c.b16 %v2339, %v2336
    %v2379 = vpack.c.b16 %v2343, %v2340
    %v2380 = vpack.c.b16 %v2344, %v2341
    %v2381 = vpack.c.b16 %v2345, %v2342
    %v2382 = vpack.c.b16 %v2349, %v2346
    %v2383 = vpack.c.b16 %v2350, %v2347
    %v2384 = vpack.c.b16 %v2351, %v2348
    %v2385 = vpack.c.b16 %v2355, %v2352
    %v2386 = vpack.c.b16 %v2356, %v2353
    %v2387 = vpack.c.b16 %v2357, %v2354
    %v2388 = vpack.c.b16 %v2361, %v2358
    %v2389 = vpack.c.b16 %v2362, %v2359
    %v2390 = vpack.c.b16 %v2363, %v2360
    %v2391 = vpack.c.b16 %v2367, %v2364
    %v2392 = vpack.c.b16 %v2368, %v2365
    %v2393 = vpack.c.b16 %v2369, %v2366
    %2418 = vmatprep.subr.bf16.mxu0 %v2371
    %2419 = vmatpush1.bf16.msra.mxu0 %v2370
    %2420 = vmatprep.subr.bf16.mxu0 %v2374
    %2421 = vmatpush1.bf16.msra.mxu0 %v2373
    %2422 = vmatprep.subr.bf16.mxu0 %v2377
    %2423 = vmatpush1.bf16.msra.mxu0 %v2376
    %2424 = vmatprep.subr.bf16.mxu0 %v2380
    %2425 = vmatpush1.bf16.msra.mxu0 %v2379
    %2426 = vmatprep.subr.bf16.mxu0 %v2383
    %2427 = vmatpush1.bf16.msra.mxu0 %v2382
    %2428 = vmatprep.subr.bf16.mxu0 %v2386
    %2429 = vmatpush1.bf16.msra.mxu0 %v2385
    %2430 = vmatprep.subr.bf16.mxu0 %v2389
    %2431 = vmatpush1.bf16.msra.mxu0 %v2388
    %2432 = vmatprep.subr.bf16.mxu0 %v2392
    %2433 = vmatpush1.bf16.msra.mxu0 %v2391
    %2434 = vmatprep.subr.bf16.mxu0 0
    %2435 = vmatpush1.bf16.msra.mxu0 0
    %2436 = vmatprep.subr.bf16.mxu0 0
    %2437 = vmatpush1.bf16.msra.mxu0 0
    %2438 = vmatprep.subr.bf16.mxu0 0
    %2439 = vmatpush1.bf16.msra.mxu0 0
    %2440 = vmatprep.subr.bf16.mxu0 0
    %2441 = vmatpush1.bf16.msra.mxu0 0
    %2442 = vmatprep.subr.bf16.mxu0 0
    %2443 = vmatpush1.bf16.msra.mxu0 0
    %2444 = vmatprep.subr.bf16.mxu0 0
    %2445 = vmatpush1.bf16.msra.mxu0 0
    %2446 = vmatprep.subr.bf16.mxu0 0
    %2447 = vmatpush1.bf16.msra.mxu0 0
    %2448 = vmatprep.subr.bf16.mxu0 0
    %2449 = vmatpush1.bf16.msra.mxu0 0
    %2450 = vmatprep.mubr.bf16.mxu0 0
    %2451 = vmatmul.mubr.bf16.gmra.mrb[0].mxu0 %v2240
    %v2452 = vpop.f32.mrb[0].mxu0
    %v2453 = vadd.f32 %v2278, %v2452
    %v2454 = vpop.f32.mrb[0].mxu0
    %v2455 = vadd.f32 %v2282, %v2454
    %v2456 = vpop.f32.mrb[0].mxu0
    %v2457 = vpop.f32.mrb[0].mxu0
    %2458 = vdwg.mxu0
    %2459 = vmatprep.subr.bf16.mxu0 0
    %2460 = vmatpush1.bf16.msra.mxu0 %v2372
    %2461 = vmatprep.subr.bf16.mxu0 0
    %2462 = vmatpush1.bf16.msra.mxu0 %v2375
    %2463 = vmatprep.subr.bf16.mxu0 0
    %2464 = vmatpush1.bf16.msra.mxu0 %v2378
    %2465 = vmatprep.subr.bf16.mxu0 0
    %2466 = vmatpush1.bf16.msra.mxu0 %v2381
    %2467 = vmatprep.subr.bf16.mxu0 0
    %2468 = vmatpush1.bf16.msra.mxu0 %v2384
    %2469 = vmatprep.subr.bf16.mxu0 0
    %2470 = vmatpush1.bf16.msra.mxu0 %v2387
    %2471 = vmatprep.subr.bf16.mxu0 0
    %2472 = vmatpush1.bf16.msra.mxu0 %v2390
    %2473 = vmatprep.subr.bf16.mxu0 0
    %2474 = vmatpush1.bf16.msra.mxu0 %v2393
    %2475 = vmatprep.subr.bf16.mxu0 0
    %2476 = vmatpush1.bf16.msra.mxu0 0
    %2477 = vmatprep.subr.bf16.mxu0 0
    %2478 = vmatpush1.bf16.msra.mxu0 0
    %2479 = vmatprep.subr.bf16.mxu0 0
    %2480 = vmatpush1.bf16.msra.mxu0 0
    %2481 = vmatprep.subr.bf16.mxu0 0
    %2482 = vmatpush1.bf16.msra.mxu0 0
    %2483 = vmatprep.subr.bf16.mxu0 0
    %2484 = vmatpush1.bf16.msra.mxu0 0
    %2485 = vmatprep.subr.bf16.mxu0 0
    %2486 = vmatpush1.bf16.msra.mxu0 0
    %2487 = vmatprep.subr.bf16.mxu0 0
    %2488 = vmatpush1.bf16.msra.mxu0 0
    %2489 = vmatprep.subr.bf16.mxu0 0
    %2490 = vmatpush1.bf16.msra.mxu0 0
    %2491 = vmatprep.mubr.bf16.mxu0 0
    %2492 = vmatmul.mubr.bf16.gmra.mrb[0].mxu0 %v2240
    %v2493 = vpop.f32.mrb[0].mxu0
    %v2494 = vadd.f32 %v2286, %v2493
    %v2495 = vpop.f32.mrb[0].mxu0
    %v2496 = vpop.f32.mrb[0].mxu0
    %v2497 = vpop.f32.mrb[0].mxu0
    %2498 = vdwg.mxu0
    %v2499 = vpack.c.bf16 %v2238, %v2238
    %v2500 = vld [vmem:[#allocation8] sm:$0xff]
    %v2501 = vld [vmem:[#allocation8 + $0x8] sm:$0xf]
    %v2502 = vld [vmem:[#allocation8 + $0xc] sm:$0xff]
    %v2503 = vld [vmem:[#allocation8 + $0x14] sm:$0xf]
    %v2504 = vld [vmem:[#allocation8 + $0x18] sm:$0xff]
    %v2505 = vld [vmem:[#allocation8 + $0x20] sm:$0xf]
    %v2506 = vld [vmem:[#allocation8 + $0x24] sm:$0xff]
    %v2507 = vld [vmem:[#allocation8 + $0x2c] sm:$0xf]
    %v2508 = vld [vmem:[#allocation8 + $0x30] sm:$0xff]
    %v2509 = vld [vmem:[#allocation8 + $0x38] sm:$0xf]
    %v2510 = vld [vmem:[#allocation8 + $0x3c] sm:$0xff]
    %v2511 = vld [vmem:[#allocation8 + $0x44] sm:$0xf]
    %v2512 = vld [vmem:[#allocation8 + $0x48] sm:$0xff]
    %v2513 = vld [vmem:[#allocation8 + $0x50] sm:$0xf]
    %v2514 = vld [vmem:[#allocation8 + $0x54] sm:$0xff]
    %v2515 = vld [vmem:[#allocation8 + $0x5c] sm:$0xf]
    %v2516 = vld [vmem:[#allocation8 + $0x60] sm:$0xff]
    %v2517 = vld [vmem:[#allocation8 + $0x68] sm:$0xf]
    %v2518 = vld [vmem:[#allocation8 + $0x6c] sm:$0xff]
    %v2519 = vld [vmem:[#allocation8 + $0x74] sm:$0xf]
    %v2520 = vld [vmem:[#allocation8 + $0x78] sm:$0xff]
    %v2521 = vld [vmem:[#allocation8 + $0x80] sm:$0xf]
    %v2522 = vld [vmem:[#allocation8 + $0x84] sm:$0xff]
    %v2523 = vld [vmem:[#allocation8 + $0x8c] sm:$0xf]
    %v2524 = vld [vmem:[#allocation8 + $0x90] sm:$0xff]
    %v2525 = vld [vmem:[#allocation8 + $0x98] sm:$0xf]
    %v2526 = vld [vmem:[#allocation8 + $0x9c] sm:$0xff]
    %v2527 = vld [vmem:[#allocation8 + $0xa4] sm:$0xf]
    %v2528 = vld [vmem:[#allocation8 + $0xa8] sm:$0xff]
    %v2529 = vld [vmem:[#allocation8 + $0xb0] sm:$0xf]
    %v2530 = vld [vmem:[#allocation8 + $0xb4] sm:$0xff]
    %v2531 = vld [vmem:[#allocation8 + $0xbc] sm:$0xf]
    %v2532 = vld [vmem:[%s4] sm:$0x7]
    %v2534 = vlaneseq
    %v2535 = vshrl.u32 %v2534, 7
    %v2536 = vsub.s32 0, %v2535
    %v2537 = vrot.slane %v2532, %v2536
    %v2538 = vlaneseq
    %v2539 = vshrl.u32 %v2538, 7
    %v2540 = vsub.s32 1, %v2539
    %v2541 = vrot.slane %v2532, %v2540
    %v2542 = vlaneseq
    %v2543 = vshrl.u32 %v2542, 7
    %v2544 = vsub.s32 2, %v2543
    %v2545 = vrot.slane %v2532, %v2544
    %v2581 = vunpack.c.l.b16 %v2500
    %v2582 = vunpack.c.h.b16 %v2500
    %v2583 = vunpack.c.l.b16 %v2501
    %v2584 = vunpack.c.l.b16 %v2502
    %v2585 = vunpack.c.h.b16 %v2502
    %v2586 = vunpack.c.l.b16 %v2503
    %v2587 = vunpack.c.l.b16 %v2504
    %v2588 = vunpack.c.h.b16 %v2504
    %v2589 = vunpack.c.l.b16 %v2505
    %v2590 = vunpack.c.l.b16 %v2506
    %v2591 = vunpack.c.h.b16 %v2506
    %v2592 = vunpack.c.l.b16 %v2507
    %v2593 = vunpack.c.l.b16 %v2508
    %v2594 = vunpack.c.h.b16 %v2508
    %v2595 = vunpack.c.l.b16 %v2509
    %v2596 = vunpack.c.l.b16 %v2510
    %v2597 = vunpack.c.h.b16 %v2510
    %v2598 = vunpack.c.l.b16 %v2511
    %v2599 = vunpack.c.l.b16 %v2512
    %v2600 = vunpack.c.h.b16 %v2512
    %v2601 = vunpack.c.l.b16 %v2513
    %v2602 = vunpack.c.l.b16 %v2514
    %v2603 = vunpack.c.h.b16 %v2514
    %v2604 = vunpack.c.l.b16 %v2515
    %v2605 = vunpack.c.l.b16 %v2516
    %v2606 = vunpack.c.h.b16 %v2516
    %v2607 = vunpack.c.l.b16 %v2517
    %v2608 = vunpack.c.l.b16 %v2518
    %v2609 = vunpack.c.h.b16 %v2518
    %v2610 = vunpack.c.l.b16 %v2519
    %v2611 = vunpack.c.l.b16 %v2520
    %v2612 = vunpack.c.h.b16 %v2520
    %v2613 = vunpack.c.l.b16 %v2521
    %v2614 = vunpack.c.l.b16 %v2522
    %v2615 = vunpack.c.h.b16 %v2522
    %v2616 = vunpack.c.l.b16 %v2523
    %v2617 = vunpack.c.l.b16 %v2524
    %v2618 = vunpack.c.h.b16 %v2524
    %v2619 = vunpack.c.l.b16 %v2525
    %v2620 = vunpack.c.l.b16 %v2526
    %v2621 = vunpack.c.h.b16 %v2526
    %v2622 = vunpack.c.l.b16 %v2527
    %v2623 = vunpack.c.l.b16 %v2528
    %v2624 = vunpack.c.h.b16 %v2528
    %v2625 = vunpack.c.l.b16 %v2529
    %v2626 = vunpack.c.l.b16 %v2530
    %v2627 = vunpack.c.h.b16 %v2530
    %v2628 = vunpack.c.l.b16 %v2531
    %v2629 = vpack.c.b16 %v2584, %v2581
    %v2630 = vpack.c.b16 %v2585, %v2582
    %v2631 = vpack.c.b16 %v2586, %v2583
    %v2632 = vpack.c.b16 %v2590, %v2587
    %v2633 = vpack.c.b16 %v2591, %v2588
    %v2634 = vpack.c.b16 %v2592, %v2589
    %v2635 = vpack.c.b16 %v2596, %v2593
    %v2636 = vpack.c.b16 %v2597, %v2594
    %v2637 = vpack.c.b16 %v2598, %v2595
    %v2638 = vpack.c.b16 %v2602, %v2599
    %v2639 = vpack.c.b16 %v2603, %v2600
    %v2640 = vpack.c.b16 %v2604, %v2601
    %v2641 = vpack.c.b16 %v2608, %v2605
    %v2642 = vpack.c.b16 %v2609, %v2606
    %v2643 = vpack.c.b16 %v2610, %v2607
    %v2644 = vpack.c.b16 %v2614, %v2611
    %v2645 = vpack.c.b16 %v2615, %v2612
    %v2646 = vpack.c.b16 %v2616, %v2613
    %v2647 = vpack.c.b16 %v2620, %v2617
    %v2648 = vpack.c.b16 %v2621, %v2618
    %v2649 = vpack.c.b16 %v2622, %v2619
    %v2650 = vpack.c.b16 %v2626, %v2623
    %v2651 = vpack.c.b16 %v2627, %v2624
    %v2652 = vpack.c.b16 %v2628, %v2625
    %2677 = vmatprep.subr.bf16.mxu0 %v2630
    %2678 = vmatpush1.bf16.msra.mxu0 %v2629
    %2679 = vmatprep.subr.bf16.mxu0 %v2633
    %2680 = vmatpush1.bf16.msra.mxu0 %v2632
    %2681 = vmatprep.subr.bf16.mxu0 %v2636
    %2682 = vmatpush1.bf16.msra.mxu0 %v2635
    %2683 = vmatprep.subr.bf16.mxu0 %v2639
    %2684 = vmatpush1.bf16.msra.mxu0 %v2638
    %2685 = vmatprep.subr.bf16.mxu0 %v2642
    %2686 = vmatpush1.bf16.msra.mxu0 %v2641
    %2687 = vmatprep.subr.bf16.mxu0 %v2645
    %2688 = vmatpush1.bf16.msra.mxu0 %v2644
    %2689 = vmatprep.subr.bf16.mxu0 %v2648
    %2690 = vmatpush1.bf16.msra.mxu0 %v2647
    %2691 = vmatprep.subr.bf16.mxu0 %v2651
    %2692 = vmatpush1.bf16.msra.mxu0 %v2650
    %2693 = vmatprep.subr.bf16.mxu0 0
    %2694 = vmatpush1.bf16.msra.mxu0 0
    %2695 = vmatprep.subr.bf16.mxu0 0
    %2696 = vmatpush1.bf16.msra.mxu0 0
    %2697 = vmatprep.subr.bf16.mxu0 0
    %2698 = vmatpush1.bf16.msra.mxu0 0
    %2699 = vmatprep.subr.bf16.mxu0 0
    %2700 = vmatpush1.bf16.msra.mxu0 0
    %2701 = vmatprep.subr.bf16.mxu0 0
    %2702 = vmatpush1.bf16.msra.mxu0 0
    %2703 = vmatprep.subr.bf16.mxu0 0
    %2704 = vmatpush1.bf16.msra.mxu0 0
    %2705 = vmatprep.subr.bf16.mxu0 0
    %2706 = vmatpush1.bf16.msra.mxu0 0
    %2707 = vmatprep.subr.bf16.mxu0 0
    %2708 = vmatpush1.bf16.msra.mxu0 0
    %2709 = vmatprep.mubr.bf16.mxu0 0
    %2710 = vmatmul.mubr.bf16.gmra.mrb[0].mxu0 %v2499
    %v2711 = vpop.f32.mrb[0].mxu0
    %v2712 = vadd.f32 %v2537, %v2711
    %v2713 = vpop.f32.mrb[0].mxu0
    %v2714 = vadd.f32 %v2541, %v2713
    %v2715 = vpop.f32.mrb[0].mxu0
    %v2716 = vpop.f32.mrb[0].mxu0
    %2717 = vdwg.mxu0
    %2718 = vmatprep.subr.bf16.mxu0 0
    %2719 = vmatpush1.bf16.msra.mxu0 %v2631
    %2720 = vmatprep.subr.bf16.mxu0 0
    %2721 = vmatpush1.bf16.msra.mxu0 %v2634
    %2722 = vmatprep.subr.bf16.mxu0 0
    %2723 = vmatpush1.bf16.msra.mxu0 %v2637
    %2724 = vmatprep.subr.bf16.mxu0 0
    %2725 = vmatpush1.bf16.msra.mxu0 %v2640
    %2726 = vmatprep.subr.bf16.mxu0 0
    %2727 = vmatpush1.bf16.msra.mxu0 %v2643
    %2728 = vmatprep.subr.bf16.mxu0 0
    %2729 = vmatpush1.bf16.msra.mxu0 %v2646
    %2730 = vmatprep.subr.bf16.mxu0 0
    %2731 = vmatpush1.bf16.msra.mxu0 %v2649
    %2732 = vmatprep.subr.bf16.mxu0 0
    %2733 = vmatpush1.bf16.msra.mxu0 %v2652
    %2734 = vmatprep.subr.bf16.mxu0 0
    %2735 = vmatpush1.bf16.msra.mxu0 0
    %2736 = vmatprep.subr.bf16.mxu0 0
    %2737 = vmatpush1.bf16.msra.mxu0 0
    %2738 = vmatprep.subr.bf16.mxu0 0
    %2739 = vmatpush1.bf16.msra.mxu0 0
    %2740 = vmatprep.subr.bf16.mxu0 0
    %2741 = vmatpush1.bf16.msra.mxu0 0
    %2742 = vmatprep.subr.bf16.mxu0 0
    %2743 = vmatpush1.bf16.msra.mxu0 0
    %2744 = vmatprep.subr.bf16.mxu0 0
    %2745 = vmatpush1.bf16.msra.mxu0 0
    %2746 = vmatprep.subr.bf16.mxu0 0
    %2747 = vmatpush1.bf16.msra.mxu0 0
    %2748 = vmatprep.subr.bf16.mxu0 0
    %2749 = vmatpush1.bf16.msra.mxu0 0
    %2750 = vmatprep.mubr.bf16.mxu0 0
    %2751 = vmatmul.mubr.bf16.gmra.mrb[0].mxu0 %v2499
    %v2752 = vpop.f32.mrb[0].mxu0
    %v2753 = vadd.f32 %v2545, %v2752
    %v2754 = vpop.f32.mrb[0].mxu0
    %v2755 = vpop.f32.mrb[0].mxu0
    %v2756 = vpop.f32.mrb[0].mxu0
    %2757 = vdwg.mxu0
    %v2758 = vadd.f32 %v2453, %v2712
    %v2759 = vxor.u32 %v2758, 2147483648
    %v2760 = vmul.f32 %v2759, 1.442695
    %v2761 = vpow.pop %v2760
    %v2762 = vadd.f32 %v2761, 1.0
    %v2763 = vrcp.pop %v2762
    %v2764 = vmul.f32 1.0, %v2763
    %v2765 = vadd.f32 %v2455, %v2714
    %v2766 = vxor.u32 %v2765, 2147483648
    %v2767 = vmul.f32 %v2766, 1.442695
    %v2768 = vpow.pop %v2767
    %v2769 = vadd.f32 %v2768, 1.0
    %v2770 = vrcp.pop %v2769
    %v2771 = vmul.f32 1.0, %v2770
    %v2772 = vmul.f32 %v2764, %v2753
    %v2773 = vadd.f32 %v2494, %v2772
    %v2774 = vtanh.pop %v2773
    %v2775 = vsub.f32 1.0, %v2771
    %v2776 = vmul.f32 %v2775, %v2774
    %v2777 = vmul.f32 %v2771, %v2238
    %v2778 = vadd.f32 %v2776, %v2777
    %2779 = vst [vmem:[#allocation2] sm:$0x3] %v2778
    %s2780 = scalar_lea.vmem [#allocation9], 8
    %2781 = vst [vmem:[%s2780] sm:$0x3] %v2778
    %v2782 = vld [vmem:[#allocation2] sm:$0x3]
    %s2783 = scalar_lea.vmem [#allocation3], 5
    %v2784 = vld [vmem:[%s2783] sm:$0x1]
    %v2785 = vld [vmem:[#allocation6] sm:$0xff]
    %v2786 = vld [vmem:[#allocation6 + $0x8] sm:$0xf]
    %v2787 = vld [vmem:[#allocation6 + $0xc] sm:$0xff]
    %v2788 = vld [vmem:[#allocation6 + $0x14] sm:$0xf]
    %v2789 = vld [vmem:[#allocation6 + $0x18] sm:$0xff]
    %v2790 = vld [vmem:[#allocation6 + $0x20] sm:$0xf]
    %v2791 = vld [vmem:[#allocation6 + $0x24] sm:$0xff]
    %v2792 = vld [vmem:[#allocation6 + $0x2c] sm:$0xf]
    %v2793 = vld [vmem:[#allocation6 + $0x30] sm:$0xff]
    %v2794 = vld [vmem:[#allocation6 + $0x38] sm:$0xf]
    %v2795 = vld [vmem:[#allocation6 + $0x3c] sm:$0xff]
    %v2796 = vld [vmem:[#allocation6 + $0x44] sm:$0xf]
    %v2797 = vld [vmem:[#allocation6 + $0x48] sm:$0xff]
    %v2798 = vld [vmem:[#allocation6 + $0x50] sm:$0xf]
    %v2799 = vld [vmem:[#allocation6 + $0x54] sm:$0xff]
    %v2800 = vld [vmem:[#allocation6 + $0x5c] sm:$0xf]
    %v2801 = vld [vmem:[#allocation6 + $0x60] sm:$0xff]
    %v2802 = vld [vmem:[#allocation6 + $0x68] sm:$0xf]
    %v2803 = vld [vmem:[#allocation6 + $0x6c] sm:$0xff]
    %v2804 = vld [vmem:[#allocation6 + $0x74] sm:$0xf]
    %v2805 = vld [vmem:[#allocation6 + $0x78] sm:$0xff]
    %v2806 = vld [vmem:[#allocation6 + $0x80] sm:$0xf]
    %v2807 = vld [vmem:[#allocation6 + $0x84] sm:$0xff]
    %v2808 = vld [vmem:[#allocation6 + $0x8c] sm:$0xf]
    %v2809 = vld [vmem:[#allocation6 + $0x90] sm:$0xff]
    %v2810 = vld [vmem:[#allocation6 + $0x98] sm:$0xf]
    %v2811 = vld [vmem:[#allocation6 + $0x9c] sm:$0xff]
    %v2812 = vld [vmem:[#allocation6 + $0xa4] sm:$0xf]
    %v2813 = vld [vmem:[#allocation6 + $0xa8] sm:$0xff]
    %v2814 = vld [vmem:[#allocation6 + $0xb0] sm:$0xf]
    %v2815 = vld [vmem:[#allocation6 + $0xb4] sm:$0xff]
    %v2816 = vld [vmem:[#allocation6 + $0xbc] sm:$0xf]
    %v2817 = vld [vmem:[%s3] sm:$0x7]
    %v2819 = vlaneseq
    %v2820 = vshrl.u32 %v2819, 7
    %v2821 = vsub.s32 0, %v2820
    %v2822 = vrot.slane %v2817, %v2821
    %v2823 = vlaneseq
    %v2824 = vshrl.u32 %v2823, 7
    %v2825 = vsub.s32 1, %v2824
    %v2826 = vrot.slane %v2817, %v2825
    %v2827 = vlaneseq
    %v2828 = vshrl.u32 %v2827, 7
    %v2829 = vsub.s32 2, %v2828
    %v2830 = vrot.slane %v2817, %v2829
    %v2866 = vunpack.c.l.b16 %v2785
    %v2867 = vunpack.c.h.b16 %v2785
    %v2868 = vunpack.c.l.b16 %v2786
    %v2869 = vunpack.c.l.b16 %v2787
    %v2870 = vunpack.c.h.b16 %v2787
    %v2871 = vunpack.c.l.b16 %v2788
    %v2872 = vunpack.c.l.b16 %v2789
    %v2873 = vunpack.c.h.b16 %v2789
    %v2874 = vunpack.c.l.b16 %v2790
    %v2875 = vunpack.c.l.b16 %v2791
    %v2876 = vunpack.c.h.b16 %v2791
    %v2877 = vunpack.c.l.b16 %v2792
    %v2878 = vunpack.c.l.b16 %v2793
    %v2879 = vunpack.c.h.b16 %v2793
    %v2880 = vunpack.c.l.b16 %v2794
    %v2881 = vunpack.c.l.b16 %v2795
    %v2882 = vunpack.c.h.b16 %v2795
    %v2883 = vunpack.c.l.b16 %v2796
    %v2884 = vunpack.c.l.b16 %v2797
    %v2885 = vunpack.c.h.b16 %v2797
    %v2886 = vunpack.c.l.b16 %v2798
    %v2887 = vunpack.c.l.b16 %v2799
    %v2888 = vunpack.c.h.b16 %v2799
    %v2889 = vunpack.c.l.b16 %v2800
    %v2890 = vunpack.c.l.b16 %v2801
    %v2891 = vunpack.c.h.b16 %v2801
    %v2892 = vunpack.c.l.b16 %v2802
    %v2893 = vunpack.c.l.b16 %v2803
    %v2894 = vunpack.c.h.b16 %v2803
    %v2895 = vunpack.c.l.b16 %v2804
    %v2896 = vunpack.c.l.b16 %v2805
    %v2897 = vunpack.c.h.b16 %v2805
    %v2898 = vunpack.c.l.b16 %v2806
    %v2899 = vunpack.c.l.b16 %v2807
    %v2900 = vunpack.c.h.b16 %v2807
    %v2901 = vunpack.c.l.b16 %v2808
    %v2902 = vunpack.c.l.b16 %v2809
    %v2903 = vunpack.c.h.b16 %v2809
    %v2904 = vunpack.c.l.b16 %v2810
    %v2905 = vunpack.c.l.b16 %v2811
    %v2906 = vunpack.c.h.b16 %v2811
    %v2907 = vunpack.c.l.b16 %v2812
    %v2908 = vunpack.c.l.b16 %v2813
    %v2909 = vunpack.c.h.b16 %v2813
    %v2910 = vunpack.c.l.b16 %v2814
    %v2911 = vunpack.c.l.b16 %v2815
    %v2912 = vunpack.c.h.b16 %v2815
    %v2913 = vunpack.c.l.b16 %v2816
    %v2914 = vpack.c.b16 %v2869, %v2866
    %v2915 = vpack.c.b16 %v2870, %v2867
    %v2916 = vpack.c.b16 %v2871, %v2868
    %v2917 = vpack.c.b16 %v2875, %v2872
    %v2918 = vpack.c.b16 %v2876, %v2873
    %v2919 = vpack.c.b16 %v2877, %v2874
    %v2920 = vpack.c.b16 %v2881, %v2878
    %v2921 = vpack.c.b16 %v2882, %v2879
    %v2922 = vpack.c.b16 %v2883, %v2880
    %v2923 = vpack.c.b16 %v2887, %v2884
    %v2924 = vpack.c.b16 %v2888, %v2885
    %v2925 = vpack.c.b16 %v2889, %v2886
    %v2926 = vpack.c.b16 %v2893, %v2890
    %v2927 = vpack.c.b16 %v2894, %v2891
    %v2928 = vpack.c.b16 %v2895, %v2892
    %v2929 = vpack.c.b16 %v2899, %v2896
    %v2930 = vpack.c.b16 %v2900, %v2897
    %v2931 = vpack.c.b16 %v2901, %v2898
    %v2932 = vpack.c.b16 %v2905, %v2902
    %v2933 = vpack.c.b16 %v2906, %v2903
    %v2934 = vpack.c.b16 %v2907, %v2904
    %v2935 = vpack.c.b16 %v2911, %v2908
    %v2936 = vpack.c.b16 %v2912, %v2909
    %v2937 = vpack.c.b16 %v2913, %v2910
    %2962 = vmatprep.subr.bf16.mxu0 %v2915
    %2963 = vmatpush1.bf16.msra.mxu0 %v2914
    %2964 = vmatprep.subr.bf16.mxu0 %v2918
    %2965 = vmatpush1.bf16.msra.mxu0 %v2917
    %2966 = vmatprep.subr.bf16.mxu0 %v2921
    %2967 = vmatpush1.bf16.msra.mxu0 %v2920
    %2968 = vmatprep.subr.bf16.mxu0 %v2924
    %2969 = vmatpush1.bf16.msra.mxu0 %v2923
    %2970 = vmatprep.subr.bf16.mxu0 %v2927
    %2971 = vmatpush1.bf16.msra.mxu0 %v2926
    %2972 = vmatprep.subr.bf16.mxu0 %v2930
    %2973 = vmatpush1.bf16.msra.mxu0 %v2929
    %2974 = vmatprep.subr.bf16.mxu0 %v2933
    %2975 = vmatpush1.bf16.msra.mxu0 %v2932
    %2976 = vmatprep.subr.bf16.mxu0 %v2936
    %2977 = vmatpush1.bf16.msra.mxu0 %v2935
    %2978 = vmatprep.subr.bf16.mxu0 0
    %2979 = vmatpush1.bf16.msra.mxu0 0
    %2980 = vmatprep.subr.bf16.mxu0 0
    %2981 = vmatpush1.bf16.msra.mxu0 0
    %2982 = vmatprep.subr.bf16.mxu0 0
    %2983 = vmatpush1.bf16.msra.mxu0 0
    %2984 = vmatprep.subr.bf16.mxu0 0
    %2985 = vmatpush1.bf16.msra.mxu0 0
    %2986 = vmatprep.subr.bf16.mxu0 0
    %2987 = vmatpush1.bf16.msra.mxu0 0
    %2988 = vmatprep.subr.bf16.mxu0 0
    %2989 = vmatpush1.bf16.msra.mxu0 0
    %2990 = vmatprep.subr.bf16.mxu0 0
    %2991 = vmatpush1.bf16.msra.mxu0 0
    %2992 = vmatprep.subr.bf16.mxu0 0
    %2993 = vmatpush1.bf16.msra.mxu0 0
    %2994 = vmatprep.mubr.bf16.mxu0 0
    %2995 = vmatmul.mubr.bf16.gmra.mrb[0].mxu0 %v2784
    %v2996 = vpop.f32.mrb[0].mxu0
    %v2997 = vadd.f32 %v2822, %v2996
    %v2998 = vpop.f32.mrb[0].mxu0
    %v2999 = vadd.f32 %v2826, %v2998
    %v3000 = vpop.f32.mrb[0].mxu0
    %v3001 = vpop.f32.mrb[0].mxu0
    %3002 = vdwg.mxu0
    %3003 = vmatprep.subr.bf16.mxu0 0
    %3004 = vmatpush1.bf16.msra.mxu0 %v2916
    %3005 = vmatprep.subr.bf16.mxu0 0
    %3006 = vmatpush1.bf16.msra.mxu0 %v2919
    %3007 = vmatprep.subr.bf16.mxu0 0
    %3008 = vmatpush1.bf16.msra.mxu0 %v2922
    %3009 = vmatprep.subr.bf16.mxu0 0
    %3010 = vmatpush1.bf16.msra.mxu0 %v2925
    %3011 = vmatprep.subr.bf16.mxu0 0
    %3012 = vmatpush1.bf16.msra.mxu0 %v2928
    %3013 = vmatprep.subr.bf16.mxu0 0
    %3014 = vmatpush1.bf16.msra.mxu0 %v2931
    %3015 = vmatprep.subr.bf16.mxu0 0
    %3016 = vmatpush1.bf16.msra.mxu0 %v2934
    %3017 = vmatprep.subr.bf16.mxu0 0
    %3018 = vmatpush1.bf16.msra.mxu0 %v2937
    %3019 = vmatprep.subr.bf16.mxu0 0
    %3020 = vmatpush1.bf16.msra.mxu0 0
    %3021 = vmatprep.subr.bf16.mxu0 0
    %3022 = vmatpush1.bf16.msra.mxu0 0
    %3023 = vmatprep.subr.bf16.mxu0 0
    %3024 = vmatpush1.bf16.msra.mxu0 0
    %3025 = vmatprep.subr.bf16.mxu0 0
    %3026 = vmatpush1.bf16.msra.mxu0 0
    %3027 = vmatprep.subr.bf16.mxu0 0
    %3028 = vmatpush1.bf16.msra.mxu0 0
    %3029 = vmatprep.subr.bf16.mxu0 0
    %3030 = vmatpush1.bf16.msra.mxu0 0
    %3031 = vmatprep.subr.bf16.mxu0 0
    %3032 = vmatpush1.bf16.msra.mxu0 0
    %3033 = vmatprep.subr.bf16.mxu0 0
    %3034 = vmatpush1.bf16.msra.mxu0 0
    %3035 = vmatprep.mubr.bf16.mxu0 0
    %3036 = vmatmul.mubr.bf16.gmra.mrb[0].mxu0 %v2784
    %v3037 = vpop.f32.mrb[0].mxu0
    %v3038 = vadd.f32 %v2830, %v3037
    %v3039 = vpop.f32.mrb[0].mxu0
    %v3040 = vpop.f32.mrb[0].mxu0
    %v3041 = vpop.f32.mrb[0].mxu0
    %3042 = vdwg.mxu0
    %v3043 = vpack.c.bf16 %v2782, %v2782
    %v3044 = vld [vmem:[#allocation8] sm:$0xff]
    %v3045 = vld [vmem:[#allocation8 + $0x8] sm:$0xf]
    %v3046 = vld [vmem:[#allocation8 + $0xc] sm:$0xff]
    %v3047 = vld [vmem:[#allocation8 + $0x14] sm:$0xf]
    %v3048 = vld [vmem:[#allocation8 + $0x18] sm:$0xff]
    %v3049 = vld [vmem:[#allocation8 + $0x20] sm:$0xf]
    %v3050 = vld [vmem:[#allocation8 + $0x24] sm:$0xff]
    %v3051 = vld [vmem:[#allocation8 + $0x2c] sm:$0xf]
    %v3052 = vld [vmem:[#allocation8 + $0x30] sm:$0xff]
    %v3053 = vld [vmem:[#allocation8 + $0x38] sm:$0xf]
    %v3054 = vld [vmem:[#allocation8 + $0x3c] sm:$0xff]
    %v3055 = vld [vmem:[#allocation8 + $0x44] sm:$0xf]
    %v3056 = vld [vmem:[#allocation8 + $0x48] sm:$0xff]
    %v3057 = vld [vmem:[#allocation8 + $0x50] sm:$0xf]
    %v3058 = vld [vmem:[#allocation8 + $0x54] sm:$0xff]
    %v3059 = vld [vmem:[#allocation8 + $0x5c] sm:$0xf]
    %v3060 = vld [vmem:[#allocation8 + $0x60] sm:$0xff]
    %v3061 = vld [vmem:[#allocation8 + $0x68] sm:$0xf]
    %v3062 = vld [vmem:[#allocation8 + $0x6c] sm:$0xff]
    %v3063 = vld [vmem:[#allocation8 + $0x74] sm:$0xf]
    %v3064 = vld [vmem:[#allocation8 + $0x78] sm:$0xff]
    %v3065 = vld [vmem:[#allocation8 + $0x80] sm:$0xf]
    %v3066 = vld [vmem:[#allocation8 + $0x84] sm:$0xff]
    %v3067 = vld [vmem:[#allocation8 + $0x8c] sm:$0xf]
    %v3068 = vld [vmem:[#allocation8 + $0x90] sm:$0xff]
    %v3069 = vld [vmem:[#allocation8 + $0x98] sm:$0xf]
    %v3070 = vld [vmem:[#allocation8 + $0x9c] sm:$0xff]
    %v3071 = vld [vmem:[#allocation8 + $0xa4] sm:$0xf]
    %v3072 = vld [vmem:[#allocation8 + $0xa8] sm:$0xff]
    %v3073 = vld [vmem:[#allocation8 + $0xb0] sm:$0xf]
    %v3074 = vld [vmem:[#allocation8 + $0xb4] sm:$0xff]
    %v3075 = vld [vmem:[#allocation8 + $0xbc] sm:$0xf]
    %v3076 = vld [vmem:[%s4] sm:$0x7]
    %v3078 = vlaneseq
    %v3079 = vshrl.u32 %v3078, 7
    %v3080 = vsub.s32 0, %v3079
    %v3081 = vrot.slane %v3076, %v3080
    %v3082 = vlaneseq
    %v3083 = vshrl.u32 %v3082, 7
    %v3084 = vsub.s32 1, %v3083
    %v3085 = vrot.slane %v3076, %v3084
    %v3086 = vlaneseq
    %v3087 = vshrl.u32 %v3086, 7
    %v3088 = vsub.s32 2, %v3087
    %v3089 = vrot.slane %v3076, %v3088
    %v3125 = vunpack.c.l.b16 %v3044
    %v3126 = vunpack.c.h.b16 %v3044
    %v3127 = vunpack.c.l.b16 %v3045
    %v3128 = vunpack.c.l.b16 %v3046
    %v3129 = vunpack.c.h.b16 %v3046
    %v3130 = vunpack.c.l.b16 %v3047
    %v3131 = vunpack.c.l.b16 %v3048
    %v3132 = vunpack.c.h.b16 %v3048
    %v3133 = vunpack.c.l.b16 %v3049
    %v3134 = vunpack.c.l.b16 %v3050
    %v3135 = vunpack.c.h.b16 %v3050
    %v3136 = vunpack.c.l.b16 %v3051
    %v3137 = vunpack.c.l.b16 %v3052
    %v3138 = vunpack.c.h.b16 %v3052
    %v3139 = vunpack.c.l.b16 %v3053
    %v3140 = vunpack.c.l.b16 %v3054
    %v3141 = vunpack.c.h.b16 %v3054
    %v3142 = vunpack.c.l.b16 %v3055
    %v3143 = vunpack.c.l.b16 %v3056
    %v3144 = vunpack.c.h.b16 %v3056
    %v3145 = vunpack.c.l.b16 %v3057
    %v3146 = vunpack.c.l.b16 %v3058
    %v3147 = vunpack.c.h.b16 %v3058
    %v3148 = vunpack.c.l.b16 %v3059
    %v3149 = vunpack.c.l.b16 %v3060
    %v3150 = vunpack.c.h.b16 %v3060
    %v3151 = vunpack.c.l.b16 %v3061
    %v3152 = vunpack.c.l.b16 %v3062
    %v3153 = vunpack.c.h.b16 %v3062
    %v3154 = vunpack.c.l.b16 %v3063
    %v3155 = vunpack.c.l.b16 %v3064
    %v3156 = vunpack.c.h.b16 %v3064
    %v3157 = vunpack.c.l.b16 %v3065
    %v3158 = vunpack.c.l.b16 %v3066
    %v3159 = vunpack.c.h.b16 %v3066
    %v3160 = vunpack.c.l.b16 %v3067
    %v3161 = vunpack.c.l.b16 %v3068
    %v3162 = vunpack.c.h.b16 %v3068
    %v3163 = vunpack.c.l.b16 %v3069
    %v3164 = vunpack.c.l.b16 %v3070
    %v3165 = vunpack.c.h.b16 %v3070
    %v3166 = vunpack.c.l.b16 %v3071
    %v3167 = vunpack.c.l.b16 %v3072
    %v3168 = vunpack.c.h.b16 %v3072
    %v3169 = vunpack.c.l.b16 %v3073
    %v3170 = vunpack.c.l.b16 %v3074
    %v3171 = vunpack.c.h.b16 %v3074
    %v3172 = vunpack.c.l.b16 %v3075
    %v3173 = vpack.c.b16 %v3128, %v3125
    %v3174 = vpack.c.b16 %v3129, %v3126
    %v3175 = vpack.c.b16 %v3130, %v3127
    %v3176 = vpack.c.b16 %v3134, %v3131
    %v3177 = vpack.c.b16 %v3135, %v3132
    %v3178 = vpack.c.b16 %v3136, %v3133
    %v3179 = vpack.c.b16 %v3140, %v3137
    %v3180 = vpack.c.b16 %v3141, %v3138
    %v3181 = vpack.c.b16 %v3142, %v3139
    %v3182 = vpack.c.b16 %v3146, %v3143
    %v3183 = vpack.c.b16 %v3147, %v3144
    %v3184 = vpack.c.b16 %v3148, %v3145
    %v3185 = vpack.c.b16 %v3152, %v3149
    %v3186 = vpack.c.b16 %v3153, %v3150
    %v3187 = vpack.c.b16 %v3154, %v3151
    %v3188 = vpack.c.b16 %v3158, %v3155
    %v3189 = vpack.c.b16 %v3159, %v3156
    %v3190 = vpack.c.b16 %v3160, %v3157
    %v3191 = vpack.c.b16 %v3164, %v3161
    %v3192 = vpack.c.b16 %v3165, %v3162
    %v3193 = vpack.c.b16 %v3166, %v3163
    %v3194 = vpack.c.b16 %v3170, %v3167
    %v3195 = vpack.c.b16 %v3171, %v3168
    %v3196 = vpack.c.b16 %v3172, %v3169
    %3221 = vmatprep.subr.bf16.mxu0 %v3174
    %3222 = vmatpush1.bf16.msra.mxu0 %v3173
    %3223 = vmatprep.subr.bf16.mxu0 %v3177
    %3224 = vmatpush1.bf16.msra.mxu0 %v3176
    %3225 = vmatprep.subr.bf16.mxu0 %v3180
    %3226 = vmatpush1.bf16.msra.mxu0 %v3179
    %3227 = vmatprep.subr.bf16.mxu0 %v3183
    %3228 = vmatpush1.bf16.msra.mxu0 %v3182
    %3229 = vmatprep.subr.bf16.mxu0 %v3186
    %3230 = vmatpush1.bf16.msra.mxu0 %v3185
    %3231 = vmatprep.subr.bf16.mxu0 %v3189
    %3232 = vmatpush1.bf16.msra.mxu0 %v3188
    %3233 = vmatprep.subr.bf16.mxu0 %v3192
    %3234 = vmatpush1.bf16.msra.mxu0 %v3191
    %3235 = vmatprep.subr.bf16.mxu0 %v3195
    %3236 = vmatpush1.bf16.msra.mxu0 %v3194
    %3237 = vmatprep.subr.bf16.mxu0 0
    %3238 = vmatpush1.bf16.msra.mxu0 0
    %3239 = vmatprep.subr.bf16.mxu0 0
    %3240 = vmatpush1.bf16.msra.mxu0 0
    %3241 = vmatprep.subr.bf16.mxu0 0
    %3242 = vmatpush1.bf16.msra.mxu0 0
    %3243 = vmatprep.subr.bf16.mxu0 0
    %3244 = vmatpush1.bf16.msra.mxu0 0
    %3245 = vmatprep.subr.bf16.mxu0 0
    %3246 = vmatpush1.bf16.msra.mxu0 0
    %3247 = vmatprep.subr.bf16.mxu0 0
    %3248 = vmatpush1.bf16.msra.mxu0 0
    %3249 = vmatprep.subr.bf16.mxu0 0
    %3250 = vmatpush1.bf16.msra.mxu0 0
    %3251 = vmatprep.subr.bf16.mxu0 0
    %3252 = vmatpush1.bf16.msra.mxu0 0
    %3253 = vmatprep.mubr.bf16.mxu0 0
    %3254 = vmatmul.mubr.bf16.gmra.mrb[0].mxu0 %v3043
    %v3255 = vpop.f32.mrb[0].mxu0
    %v3256 = vadd.f32 %v3081, %v3255
    %v3257 = vpop.f32.mrb[0].mxu0
    %v3258 = vadd.f32 %v3085, %v3257
    %v3259 = vpop.f32.mrb[0].mxu0
    %v3260 = vpop.f32.mrb[0].mxu0
    %3261 = vdwg.mxu0
    %3262 = vmatprep.subr.bf16.mxu0 0
    %3263 = vmatpush1.bf16.msra.mxu0 %v3175
    %3264 = vmatprep.subr.bf16.mxu0 0
    %3265 = vmatpush1.bf16.msra.mxu0 %v3178
    %3266 = vmatprep.subr.bf16.mxu0 0
    %3267 = vmatpush1.bf16.msra.mxu0 %v3181
    %3268 = vmatprep.subr.bf16.mxu0 0
    %3269 = vmatpush1.bf16.msra.mxu0 %v3184
    %3270 = vmatprep.subr.bf16.mxu0 0
    %3271 = vmatpush1.bf16.msra.mxu0 %v3187
    %3272 = vmatprep.subr.bf16.mxu0 0
    %3273 = vmatpush1.bf16.msra.mxu0 %v3190
    %3274 = vmatprep.subr.bf16.mxu0 0
    %3275 = vmatpush1.bf16.msra.mxu0 %v3193
    %3276 = vmatprep.subr.bf16.mxu0 0
    %3277 = vmatpush1.bf16.msra.mxu0 %v3196
    %3278 = vmatprep.subr.bf16.mxu0 0
    %3279 = vmatpush1.bf16.msra.mxu0 0
    %3280 = vmatprep.subr.bf16.mxu0 0
    %3281 = vmatpush1.bf16.msra.mxu0 0
    %3282 = vmatprep.subr.bf16.mxu0 0
    %3283 = vmatpush1.bf16.msra.mxu0 0
    %3284 = vmatprep.subr.bf16.mxu0 0
    %3285 = vmatpush1.bf16.msra.mxu0 0
    %3286 = vmatprep.subr.bf16.mxu0 0
    %3287 = vmatpush1.bf16.msra.mxu0 0
    %3288 = vmatprep.subr.bf16.mxu0 0
    %3289 = vmatpush1.bf16.msra.mxu0 0
    %3290 = vmatprep.subr.bf16.mxu0 0
    %3291 = vmatpush1.bf16.msra.mxu0 0
    %3292 = vmatprep.subr.bf16.mxu0 0
    %3293 = vmatpush1.bf16.msra.mxu0 0
    %3294 = vmatprep.mubr.bf16.mxu0 0
    %3295 = vmatmul.mubr.bf16.gmra.mrb[0].mxu0 %v3043
    %v3296 = vpop.f32.mrb[0].mxu0
    %v3297 = vadd.f32 %v3089, %v3296
    %v3298 = vpop.f32.mrb[0].mxu0
    %v3299 = vpop.f32.mrb[0].mxu0
    %v3300 = vpop.f32.mrb[0].mxu0
    %3301 = vdwg.mxu0
    %v3302 = vadd.f32 %v2997, %v3256
    %v3303 = vxor.u32 %v3302, 2147483648
    %v3304 = vmul.f32 %v3303, 1.442695
    %v3305 = vpow.pop %v3304
    %v3306 = vadd.f32 %v3305, 1.0
    %v3307 = vrcp.pop %v3306
    %v3308 = vmul.f32 1.0, %v3307
    %v3309 = vadd.f32 %v2999, %v3258
    %v3310 = vxor.u32 %v3309, 2147483648
    %v3311 = vmul.f32 %v3310, 1.442695
    %v3312 = vpow.pop %v3311
    %v3313 = vadd.f32 %v3312, 1.0
    %v3314 = vrcp.pop %v3313
    %v3315 = vmul.f32 1.0, %v3314
    %v3316 = vmul.f32 %v3308, %v3297
    %v3317 = vadd.f32 %v3038, %v3316
    %v3318 = vtanh.pop %v3317
    %v3319 = vsub.f32 1.0, %v3315
    %v3320 = vmul.f32 %v3319, %v3318
    %v3321 = vmul.f32 %v3315, %v2782
    %v3322 = vadd.f32 %v3320, %v3321
    %3323 = vst [vmem:[#allocation2] sm:$0x3] %v3322
    %s3324 = scalar_lea.vmem [#allocation9], 10
    %3325 = vst [vmem:[%s3324] sm:$0x3] %v3322
    %v3326 = vld [vmem:[#allocation2] sm:$0x3]
    %s3327 = scalar_lea.vmem [#allocation3], 6
    %v3328 = vld [vmem:[%s3327] sm:$0x1]
    %v3329 = vld [vmem:[#allocation6] sm:$0xff]
    %v3330 = vld [vmem:[#allocation6 + $0x8] sm:$0xf]
    %v3331 = vld [vmem:[#allocation6 + $0xc] sm:$0xff]
    %v3332 = vld [vmem:[#allocation6 + $0x14] sm:$0xf]
    %v3333 = vld [vmem:[#allocation6 + $0x18] sm:$0xff]
    %v3334 = vld [vmem:[#allocation6 + $0x20] sm:$0xf]
    %v3335 = vld [vmem:[#allocation6 + $0x24] sm:$0xff]
    %v3336 = vld [vmem:[#allocation6 + $0x2c] sm:$0xf]
    %v3337 = vld [vmem:[#allocation6 + $0x30] sm:$0xff]
    %v3338 = vld [vmem:[#allocation6 + $0x38] sm:$0xf]
    %v3339 = vld [vmem:[#allocation6 + $0x3c] sm:$0xff]
    %v3340 = vld [vmem:[#allocation6 + $0x44] sm:$0xf]
    %v3341 = vld [vmem:[#allocation6 + $0x48] sm:$0xff]
    %v3342 = vld [vmem:[#allocation6 + $0x50] sm:$0xf]
    %v3343 = vld [vmem:[#allocation6 + $0x54] sm:$0xff]
    %v3344 = vld [vmem:[#allocation6 + $0x5c] sm:$0xf]
    %v3345 = vld [vmem:[#allocation6 + $0x60] sm:$0xff]
    %v3346 = vld [vmem:[#allocation6 + $0x68] sm:$0xf]
    %v3347 = vld [vmem:[#allocation6 + $0x6c] sm:$0xff]
    %v3348 = vld [vmem:[#allocation6 + $0x74] sm:$0xf]
    %v3349 = vld [vmem:[#allocation6 + $0x78] sm:$0xff]
    %v3350 = vld [vmem:[#allocation6 + $0x80] sm:$0xf]
    %v3351 = vld [vmem:[#allocation6 + $0x84] sm:$0xff]
    %v3352 = vld [vmem:[#allocation6 + $0x8c] sm:$0xf]
    %v3353 = vld [vmem:[#allocation6 + $0x90] sm:$0xff]
    %v3354 = vld [vmem:[#allocation6 + $0x98] sm:$0xf]
    %v3355 = vld [vmem:[#allocation6 + $0x9c] sm:$0xff]
    %v3356 = vld [vmem:[#allocation6 + $0xa4] sm:$0xf]
    %v3357 = vld [vmem:[#allocation6 + $0xa8] sm:$0xff]
    %v3358 = vld [vmem:[#allocation6 + $0xb0] sm:$0xf]
    %v3359 = vld [vmem:[#allocation6 + $0xb4] sm:$0xff]
    %v3360 = vld [vmem:[#allocation6 + $0xbc] sm:$0xf]
    %v3361 = vld [vmem:[%s3] sm:$0x7]
    %v3363 = vlaneseq
    %v3364 = vshrl.u32 %v3363, 7
    %v3365 = vsub.s32 0, %v3364
    %v3366 = vrot.slane %v3361, %v3365
    %v3367 = vlaneseq
    %v3368 = vshrl.u32 %v3367, 7
    %v3369 = vsub.s32 1, %v3368
    %v3370 = vrot.slane %v3361, %v3369
    %v3371 = vlaneseq
    %v3372 = vshrl.u32 %v3371, 7
    %v3373 = vsub.s32 2, %v3372
    %v3374 = vrot.slane %v3361, %v3373
    %v3410 = vunpack.c.l.b16 %v3329
    %v3411 = vunpack.c.h.b16 %v3329
    %v3412 = vunpack.c.l.b16 %v3330
    %v3413 = vunpack.c.l.b16 %v3331
    %v3414 = vunpack.c.h.b16 %v3331
    %v3415 = vunpack.c.l.b16 %v3332
    %v3416 = vunpack.c.l.b16 %v3333
    %v3417 = vunpack.c.h.b16 %v3333
    %v3418 = vunpack.c.l.b16 %v3334
    %v3419 = vunpack.c.l.b16 %v3335
    %v3420 = vunpack.c.h.b16 %v3335
    %v3421 = vunpack.c.l.b16 %v3336
    %v3422 = vunpack.c.l.b16 %v3337
    %v3423 = vunpack.c.h.b16 %v3337
    %v3424 = vunpack.c.l.b16 %v3338
    %v3425 = vunpack.c.l.b16 %v3339
    %v3426 = vunpack.c.h.b16 %v3339
    %v3427 = vunpack.c.l.b16 %v3340
    %v3428 = vunpack.c.l.b16 %v3341
    %v3429 = vunpack.c.h.b16 %v3341
    %v3430 = vunpack.c.l.b16 %v3342
    %v3431 = vunpack.c.l.b16 %v3343
    %v3432 = vunpack.c.h.b16 %v3343
    %v3433 = vunpack.c.l.b16 %v3344
    %v3434 = vunpack.c.l.b16 %v3345
    %v3435 = vunpack.c.h.b16 %v3345
    %v3436 = vunpack.c.l.b16 %v3346
    %v3437 = vunpack.c.l.b16 %v3347
    %v3438 = vunpack.c.h.b16 %v3347
    %v3439 = vunpack.c.l.b16 %v3348
    %v3440 = vunpack.c.l.b16 %v3349
    %v3441 = vunpack.c.h.b16 %v3349
    %v3442 = vunpack.c.l.b16 %v3350
    %v3443 = vunpack.c.l.b16 %v3351
    %v3444 = vunpack.c.h.b16 %v3351
    %v3445 = vunpack.c.l.b16 %v3352
    %v3446 = vunpack.c.l.b16 %v3353
    %v3447 = vunpack.c.h.b16 %v3353
    %v3448 = vunpack.c.l.b16 %v3354
    %v3449 = vunpack.c.l.b16 %v3355
    %v3450 = vunpack.c.h.b16 %v3355
    %v3451 = vunpack.c.l.b16 %v3356
    %v3452 = vunpack.c.l.b16 %v3357
    %v3453 = vunpack.c.h.b16 %v3357
    %v3454 = vunpack.c.l.b16 %v3358
    %v3455 = vunpack.c.l.b16 %v3359
    %v3456 = vunpack.c.h.b16 %v3359
    %v3457 = vunpack.c.l.b16 %v3360
    %v3458 = vpack.c.b16 %v3413, %v3410
    %v3459 = vpack.c.b16 %v3414, %v3411
    %v3460 = vpack.c.b16 %v3415, %v3412
    %v3461 = vpack.c.b16 %v3419, %v3416
    %v3462 = vpack.c.b16 %v3420, %v3417
    %v3463 = vpack.c.b16 %v3421, %v3418
    %v3464 = vpack.c.b16 %v3425, %v3422
    %v3465 = vpack.c.b16 %v3426, %v3423
    %v3466 = vpack.c.b16 %v3427, %v3424
    %v3467 = vpack.c.b16 %v3431, %v3428
    %v3468 = vpack.c.b16 %v3432, %v3429
    %v3469 = vpack.c.b16 %v3433, %v3430
    %v3470 = vpack.c.b16 %v3437, %v3434
    %v3471 = vpack.c.b16 %v3438, %v3435
    %v3472 = vpack.c.b16 %v3439, %v3436
    %v3473 = vpack.c.b16 %v3443, %v3440
    %v3474 = vpack.c.b16 %v3444, %v3441
    %v3475 = vpack.c.b16 %v3445, %v3442
    %v3476 = vpack.c.b16 %v3449, %v3446
    %v3477 = vpack.c.b16 %v3450, %v3447
    %v3478 = vpack.c.b16 %v3451, %v3448
    %v3479 = vpack.c.b16 %v3455, %v3452
    %v3480 = vpack.c.b16 %v3456, %v3453
    %v3481 = vpack.c.b16 %v3457, %v3454
    %3506 = vmatprep.subr.bf16.mxu0 %v3459
    %3507 = vmatpush1.bf16.msra.mxu0 %v3458
    %3508 = vmatprep.subr.bf16.mxu0 %v3462
    %3509 = vmatpush1.bf16.msra.mxu0 %v3461
    %3510 = vmatprep.subr.bf16.mxu0 %v3465
    %3511 = vmatpush1.bf16.msra.mxu0 %v3464
    %3512 = vmatprep.subr.bf16.mxu0 %v3468
    %3513 = vmatpush1.bf16.msra.mxu0 %v3467
    %3514 = vmatprep.subr.bf16.mxu0 %v3471
    %3515 = vmatpush1.bf16.msra.mxu0 %v3470
    %3516 = vmatprep.subr.bf16.mxu0 %v3474
    %3517 = vmatpush1.bf16.msra.mxu0 %v3473
    %3518 = vmatprep.subr.bf16.mxu0 %v3477
    %3519 = vmatpush1.bf16.msra.mxu0 %v3476
    %3520 = vmatprep.subr.bf16.mxu0 %v3480
    %3521 = vmatpush1.bf16.msra.mxu0 %v3479
    %3522 = vmatprep.subr.bf16.mxu0 0
    %3523 = vmatpush1.bf16.msra.mxu0 0
    %3524 = vmatprep.subr.bf16.mxu0 0
    %3525 = vmatpush1.bf16.msra.mxu0 0
    %3526 = vmatprep.subr.bf16.mxu0 0
    %3527 = vmatpush1.bf16.msra.mxu0 0
    %3528 = vmatprep.subr.bf16.mxu0 0
    %3529 = vmatpush1.bf16.msra.mxu0 0
    %3530 = vmatprep.subr.bf16.mxu0 0
    %3531 = vmatpush1.bf16.msra.mxu0 0
    %3532 = vmatprep.subr.bf16.mxu0 0
    %3533 = vmatpush1.bf16.msra.mxu0 0
    %3534 = vmatprep.subr.bf16.mxu0 0
    %3535 = vmatpush1.bf16.msra.mxu0 0
    %3536 = vmatprep.subr.bf16.mxu0 0
    %3537 = vmatpush1.bf16.msra.mxu0 0
    %3538 = vmatprep.mubr.bf16.mxu0 0
    %3539 = vmatmul.mubr.bf16.gmra.mrb[0].mxu0 %v3328
    %v3540 = vpop.f32.mrb[0].mxu0
    %v3541 = vadd.f32 %v3366, %v3540
    %v3542 = vpop.f32.mrb[0].mxu0
    %v3543 = vadd.f32 %v3370, %v3542
    %v3544 = vpop.f32.mrb[0].mxu0
    %v3545 = vpop.f32.mrb[0].mxu0
    %3546 = vdwg.mxu0
    %3547 = vmatprep.subr.bf16.mxu0 0
    %3548 = vmatpush1.bf16.msra.mxu0 %v3460
    %3549 = vmatprep.subr.bf16.mxu0 0
    %3550 = vmatpush1.bf16.msra.mxu0 %v3463
    %3551 = vmatprep.subr.bf16.mxu0 0
    %3552 = vmatpush1.bf16.msra.mxu0 %v3466
    %3553 = vmatprep.subr.bf16.mxu0 0
    %3554 = vmatpush1.bf16.msra.mxu0 %v3469
    %3555 = vmatprep.subr.bf16.mxu0 0
    %3556 = vmatpush1.bf16.msra.mxu0 %v3472
    %3557 = vmatprep.subr.bf16.mxu0 0
    %3558 = vmatpush1.bf16.msra.mxu0 %v3475
    %3559 = vmatprep.subr.bf16.mxu0 0
    %3560 = vmatpush1.bf16.msra.mxu0 %v3478
    %3561 = vmatprep.subr.bf16.mxu0 0
    %3562 = vmatpush1.bf16.msra.mxu0 %v3481
    %3563 = vmatprep.subr.bf16.mxu0 0
    %3564 = vmatpush1.bf16.msra.mxu0 0
    %3565 = vmatprep.subr.bf16.mxu0 0
    %3566 = vmatpush1.bf16.msra.mxu0 0
    %3567 = vmatprep.subr.bf16.mxu0 0
    %3568 = vmatpush1.bf16.msra.mxu0 0
    %3569 = vmatprep.subr.bf16.mxu0 0
    %3570 = vmatpush1.bf16.msra.mxu0 0
    %3571 = vmatprep.subr.bf16.mxu0 0
    %3572 = vmatpush1.bf16.msra.mxu0 0
    %3573 = vmatprep.subr.bf16.mxu0 0
    %3574 = vmatpush1.bf16.msra.mxu0 0
    %3575 = vmatprep.subr.bf16.mxu0 0
    %3576 = vmatpush1.bf16.msra.mxu0 0
    %3577 = vmatprep.subr.bf16.mxu0 0
    %3578 = vmatpush1.bf16.msra.mxu0 0
    %3579 = vmatprep.mubr.bf16.mxu0 0
    %3580 = vmatmul.mubr.bf16.gmra.mrb[0].mxu0 %v3328
    %v3581 = vpop.f32.mrb[0].mxu0
    %v3582 = vadd.f32 %v3374, %v3581
    %v3583 = vpop.f32.mrb[0].mxu0
    %v3584 = vpop.f32.mrb[0].mxu0
    %v3585 = vpop.f32.mrb[0].mxu0
    %3586 = vdwg.mxu0
    %v3587 = vpack.c.bf16 %v3326, %v3326
    %v3588 = vld [vmem:[#allocation8] sm:$0xff]
    %v3589 = vld [vmem:[#allocation8 + $0x8] sm:$0xf]
    %v3590 = vld [vmem:[#allocation8 + $0xc] sm:$0xff]
    %v3591 = vld [vmem:[#allocation8 + $0x14] sm:$0xf]
    %v3592 = vld [vmem:[#allocation8 + $0x18] sm:$0xff]
    %v3593 = vld [vmem:[#allocation8 + $0x20] sm:$0xf]
    %v3594 = vld [vmem:[#allocation8 + $0x24] sm:$0xff]
    %v3595 = vld [vmem:[#allocation8 + $0x2c] sm:$0xf]
    %v3596 = vld [vmem:[#allocation8 + $0x30] sm:$0xff]
    %v3597 = vld [vmem:[#allocation8 + $0x38] sm:$0xf]
    %v3598 = vld [vmem:[#allocation8 + $0x3c] sm:$0xff]
    %v3599 = vld [vmem:[#allocation8 + $0x44] sm:$0xf]
    %v3600 = vld [vmem:[#allocation8 + $0x48] sm:$0xff]
    %v3601 = vld [vmem:[#allocation8 + $0x50] sm:$0xf]
    %v3602 = vld [vmem:[#allocation8 + $0x54] sm:$0xff]
    %v3603 = vld [vmem:[#allocation8 + $0x5c] sm:$0xf]
    %v3604 = vld [vmem:[#allocation8 + $0x60] sm:$0xff]
    %v3605 = vld [vmem:[#allocation8 + $0x68] sm:$0xf]
    %v3606 = vld [vmem:[#allocation8 + $0x6c] sm:$0xff]
    %v3607 = vld [vmem:[#allocation8 + $0x74] sm:$0xf]
    %v3608 = vld [vmem:[#allocation8 + $0x78] sm:$0xff]
    %v3609 = vld [vmem:[#allocation8 + $0x80] sm:$0xf]
    %v3610 = vld [vmem:[#allocation8 + $0x84] sm:$0xff]
    %v3611 = vld [vmem:[#allocation8 + $0x8c] sm:$0xf]
    %v3612 = vld [vmem:[#allocation8 + $0x90] sm:$0xff]
    %v3613 = vld [vmem:[#allocation8 + $0x98] sm:$0xf]
    %v3614 = vld [vmem:[#allocation8 + $0x9c] sm:$0xff]
    %v3615 = vld [vmem:[#allocation8 + $0xa4] sm:$0xf]
    %v3616 = vld [vmem:[#allocation8 + $0xa8] sm:$0xff]
    %v3617 = vld [vmem:[#allocation8 + $0xb0] sm:$0xf]
    %v3618 = vld [vmem:[#allocation8 + $0xb4] sm:$0xff]
    %v3619 = vld [vmem:[#allocation8 + $0xbc] sm:$0xf]
    %v3620 = vld [vmem:[%s4] sm:$0x7]
    %v3622 = vlaneseq
    %v3623 = vshrl.u32 %v3622, 7
    %v3624 = vsub.s32 0, %v3623
    %v3625 = vrot.slane %v3620, %v3624
    %v3626 = vlaneseq
    %v3627 = vshrl.u32 %v3626, 7
    %v3628 = vsub.s32 1, %v3627
    %v3629 = vrot.slane %v3620, %v3628
    %v3630 = vlaneseq
    %v3631 = vshrl.u32 %v3630, 7
    %v3632 = vsub.s32 2, %v3631
    %v3633 = vrot.slane %v3620, %v3632
    %v3669 = vunpack.c.l.b16 %v3588
    %v3670 = vunpack.c.h.b16 %v3588
    %v3671 = vunpack.c.l.b16 %v3589
    %v3672 = vunpack.c.l.b16 %v3590
    %v3673 = vunpack.c.h.b16 %v3590
    %v3674 = vunpack.c.l.b16 %v3591
    %v3675 = vunpack.c.l.b16 %v3592
    %v3676 = vunpack.c.h.b16 %v3592
    %v3677 = vunpack.c.l.b16 %v3593
    %v3678 = vunpack.c.l.b16 %v3594
    %v3679 = vunpack.c.h.b16 %v3594
    %v3680 = vunpack.c.l.b16 %v3595
    %v3681 = vunpack.c.l.b16 %v3596
    %v3682 = vunpack.c.h.b16 %v3596
    %v3683 = vunpack.c.l.b16 %v3597
    %v3684 = vunpack.c.l.b16 %v3598
    %v3685 = vunpack.c.h.b16 %v3598
    %v3686 = vunpack.c.l.b16 %v3599
    %v3687 = vunpack.c.l.b16 %v3600
    %v3688 = vunpack.c.h.b16 %v3600
    %v3689 = vunpack.c.l.b16 %v3601
    %v3690 = vunpack.c.l.b16 %v3602
    %v3691 = vunpack.c.h.b16 %v3602
    %v3692 = vunpack.c.l.b16 %v3603
    %v3693 = vunpack.c.l.b16 %v3604
    %v3694 = vunpack.c.h.b16 %v3604
    %v3695 = vunpack.c.l.b16 %v3605
    %v3696 = vunpack.c.l.b16 %v3606
    %v3697 = vunpack.c.h.b16 %v3606
    %v3698 = vunpack.c.l.b16 %v3607
    %v3699 = vunpack.c.l.b16 %v3608
    %v3700 = vunpack.c.h.b16 %v3608
    %v3701 = vunpack.c.l.b16 %v3609
    %v3702 = vunpack.c.l.b16 %v3610
    %v3703 = vunpack.c.h.b16 %v3610
    %v3704 = vunpack.c.l.b16 %v3611
    %v3705 = vunpack.c.l.b16 %v3612
    %v3706 = vunpack.c.h.b16 %v3612
    %v3707 = vunpack.c.l.b16 %v3613
    %v3708 = vunpack.c.l.b16 %v3614
    %v3709 = vunpack.c.h.b16 %v3614
    %v3710 = vunpack.c.l.b16 %v3615
    %v3711 = vunpack.c.l.b16 %v3616
    %v3712 = vunpack.c.h.b16 %v3616
    %v3713 = vunpack.c.l.b16 %v3617
    %v3714 = vunpack.c.l.b16 %v3618
    %v3715 = vunpack.c.h.b16 %v3618
    %v3716 = vunpack.c.l.b16 %v3619
    %v3717 = vpack.c.b16 %v3672, %v3669
    %v3718 = vpack.c.b16 %v3673, %v3670
    %v3719 = vpack.c.b16 %v3674, %v3671
    %v3720 = vpack.c.b16 %v3678, %v3675
    %v3721 = vpack.c.b16 %v3679, %v3676
    %v3722 = vpack.c.b16 %v3680, %v3677
    %v3723 = vpack.c.b16 %v3684, %v3681
    %v3724 = vpack.c.b16 %v3685, %v3682
    %v3725 = vpack.c.b16 %v3686, %v3683
    %v3726 = vpack.c.b16 %v3690, %v3687
    %v3727 = vpack.c.b16 %v3691, %v3688
    %v3728 = vpack.c.b16 %v3692, %v3689
    %v3729 = vpack.c.b16 %v3696, %v3693
    %v3730 = vpack.c.b16 %v3697, %v3694
    %v3731 = vpack.c.b16 %v3698, %v3695
    %v3732 = vpack.c.b16 %v3702, %v3699
    %v3733 = vpack.c.b16 %v3703, %v3700
    %v3734 = vpack.c.b16 %v3704, %v3701
    %v3735 = vpack.c.b16 %v3708, %v3705
    %v3736 = vpack.c.b16 %v3709, %v3706
    %v3737 = vpack.c.b16 %v3710, %v3707
    %v3738 = vpack.c.b16 %v3714, %v3711
    %v3739 = vpack.c.b16 %v3715, %v3712
    %v3740 = vpack.c.b16 %v3716, %v3713
    %3765 = vmatprep.subr.bf16.mxu0 %v3718
    %3766 = vmatpush1.bf16.msra.mxu0 %v3717
    %3767 = vmatprep.subr.bf16.mxu0 %v3721
    %3768 = vmatpush1.bf16.msra.mxu0 %v3720
    %3769 = vmatprep.subr.bf16.mxu0 %v3724
    %3770 = vmatpush1.bf16.msra.mxu0 %v3723
    %3771 = vmatprep.subr.bf16.mxu0 %v3727
    %3772 = vmatpush1.bf16.msra.mxu0 %v3726
    %3773 = vmatprep.subr.bf16.mxu0 %v3730
    %3774 = vmatpush1.bf16.msra.mxu0 %v3729
    %3775 = vmatprep.subr.bf16.mxu0 %v3733
    %3776 = vmatpush1.bf16.msra.mxu0 %v3732
    %3777 = vmatprep.subr.bf16.mxu0 %v3736
    %3778 = vmatpush1.bf16.msra.mxu0 %v3735
    %3779 = vmatprep.subr.bf16.mxu0 %v3739
    %3780 = vmatpush1.bf16.msra.mxu0 %v3738
    %3781 = vmatprep.subr.bf16.mxu0 0
    %3782 = vmatpush1.bf16.msra.mxu0 0
    %3783 = vmatprep.subr.bf16.mxu0 0
    %3784 = vmatpush1.bf16.msra.mxu0 0
    %3785 = vmatprep.subr.bf16.mxu0 0
    %3786 = vmatpush1.bf16.msra.mxu0 0
    %3787 = vmatprep.subr.bf16.mxu0 0
    %3788 = vmatpush1.bf16.msra.mxu0 0
    %3789 = vmatprep.subr.bf16.mxu0 0
    %3790 = vmatpush1.bf16.msra.mxu0 0
    %3791 = vmatprep.subr.bf16.mxu0 0
    %3792 = vmatpush1.bf16.msra.mxu0 0
    %3793 = vmatprep.subr.bf16.mxu0 0
    %3794 = vmatpush1.bf16.msra.mxu0 0
    %3795 = vmatprep.subr.bf16.mxu0 0
    %3796 = vmatpush1.bf16.msra.mxu0 0
    %3797 = vmatprep.mubr.bf16.mxu0 0
    %3798 = vmatmul.mubr.bf16.gmra.mrb[0].mxu0 %v3587
    %v3799 = vpop.f32.mrb[0].mxu0
    %v3800 = vadd.f32 %v3625, %v3799
    %v3801 = vpop.f32.mrb[0].mxu0
    %v3802 = vadd.f32 %v3629, %v3801
    %v3803 = vpop.f32.mrb[0].mxu0
    %v3804 = vpop.f32.mrb[0].mxu0
    %3805 = vdwg.mxu0
    %3806 = vmatprep.subr.bf16.mxu0 0
    %3807 = vmatpush1.bf16.msra.mxu0 %v3719
    %3808 = vmatprep.subr.bf16.mxu0 0
    %3809 = vmatpush1.bf16.msra.mxu0 %v3722
    %3810 = vmatprep.subr.bf16.mxu0 0
    %3811 = vmatpush1.bf16.msra.mxu0 %v3725
    %3812 = vmatprep.subr.bf16.mxu0 0
    %3813 = vmatpush1.bf16.msra.mxu0 %v3728
    %3814 = vmatprep.subr.bf16.mxu0 0
    %3815 = vmatpush1.bf16.msra.mxu0 %v3731
    %3816 = vmatprep.subr.bf16.mxu0 0
    %3817 = vmatpush1.bf16.msra.mxu0 %v3734
    %3818 = vmatprep.subr.bf16.mxu0 0
    %3819 = vmatpush1.bf16.msra.mxu0 %v3737
    %3820 = vmatprep.subr.bf16.mxu0 0
    %3821 = vmatpush1.bf16.msra.mxu0 %v3740
    %3822 = vmatprep.subr.bf16.mxu0 0
    %3823 = vmatpush1.bf16.msra.mxu0 0
    %3824 = vmatprep.subr.bf16.mxu0 0
    %3825 = vmatpush1.bf16.msra.mxu0 0
    %3826 = vmatprep.subr.bf16.mxu0 0
    %3827 = vmatpush1.bf16.msra.mxu0 0
    %3828 = vmatprep.subr.bf16.mxu0 0
    %3829 = vmatpush1.bf16.msra.mxu0 0
    %3830 = vmatprep.subr.bf16.mxu0 0
    %3831 = vmatpush1.bf16.msra.mxu0 0
    %3832 = vmatprep.subr.bf16.mxu0 0
    %3833 = vmatpush1.bf16.msra.mxu0 0
    %3834 = vmatprep.subr.bf16.mxu0 0
    %3835 = vmatpush1.bf16.msra.mxu0 0
    %3836 = vmatprep.subr.bf16.mxu0 0
    %3837 = vmatpush1.bf16.msra.mxu0 0
    %3838 = vmatprep.mubr.bf16.mxu0 0
    %3839 = vmatmul.mubr.bf16.gmra.mrb[0].mxu0 %v3587
    %v3840 = vpop.f32.mrb[0].mxu0
    %v3841 = vadd.f32 %v3633, %v3840
    %v3842 = vpop.f32.mrb[0].mxu0
    %v3843 = vpop.f32.mrb[0].mxu0
    %v3844 = vpop.f32.mrb[0].mxu0
    %3845 = vdwg.mxu0
    %v3846 = vadd.f32 %v3541, %v3800
    %v3847 = vxor.u32 %v3846, 2147483648
    %v3848 = vmul.f32 %v3847, 1.442695
    %v3849 = vpow.pop %v3848
    %v3850 = vadd.f32 %v3849, 1.0
    %v3851 = vrcp.pop %v3850
    %v3852 = vmul.f32 1.0, %v3851
    %v3853 = vadd.f32 %v3543, %v3802
    %v3854 = vxor.u32 %v3853, 2147483648
    %v3855 = vmul.f32 %v3854, 1.442695
    %v3856 = vpow.pop %v3855
    %v3857 = vadd.f32 %v3856, 1.0
    %v3858 = vrcp.pop %v3857
    %v3859 = vmul.f32 1.0, %v3858
    %v3860 = vmul.f32 %v3852, %v3841
    %v3861 = vadd.f32 %v3582, %v3860
    %v3862 = vtanh.pop %v3861
    %v3863 = vsub.f32 1.0, %v3859
    %v3864 = vmul.f32 %v3863, %v3862
    %v3865 = vmul.f32 %v3859, %v3326
    %v3866 = vadd.f32 %v3864, %v3865
    %3867 = vst [vmem:[#allocation2] sm:$0x3] %v3866
    %s3868 = scalar_lea.vmem [#allocation9], 12
    %3869 = vst [vmem:[%s3868] sm:$0x3] %v3866
    %v3870 = vld [vmem:[#allocation2] sm:$0x3]
    %s3871 = scalar_lea.vmem [#allocation3], 7
    %v3872 = vld [vmem:[%s3871] sm:$0x1]
    %v3873 = vld [vmem:[#allocation6] sm:$0xff]
    %v3874 = vld [vmem:[#allocation6 + $0x8] sm:$0xf]
    %v3875 = vld [vmem:[#allocation6 + $0xc] sm:$0xff]
    %v3876 = vld [vmem:[#allocation6 + $0x14] sm:$0xf]
    %v3877 = vld [vmem:[#allocation6 + $0x18] sm:$0xff]
    %v3878 = vld [vmem:[#allocation6 + $0x20] sm:$0xf]
    %v3879 = vld [vmem:[#allocation6 + $0x24] sm:$0xff]
    %v3880 = vld [vmem:[#allocation6 + $0x2c] sm:$0xf]
    %v3881 = vld [vmem:[#allocation6 + $0x30] sm:$0xff]
    %v3882 = vld [vmem:[#allocation6 + $0x38] sm:$0xf]
    %v3883 = vld [vmem:[#allocation6 + $0x3c] sm:$0xff]
    %v3884 = vld [vmem:[#allocation6 + $0x44] sm:$0xf]
    %v3885 = vld [vmem:[#allocation6 + $0x48] sm:$0xff]
    %v3886 = vld [vmem:[#allocation6 + $0x50] sm:$0xf]
    %v3887 = vld [vmem:[#allocation6 + $0x54] sm:$0xff]
    %v3888 = vld [vmem:[#allocation6 + $0x5c] sm:$0xf]
    %v3889 = vld [vmem:[#allocation6 + $0x60] sm:$0xff]
    %v3890 = vld [vmem:[#allocation6 + $0x68] sm:$0xf]
    %v3891 = vld [vmem:[#allocation6 + $0x6c] sm:$0xff]
    %v3892 = vld [vmem:[#allocation6 + $0x74] sm:$0xf]
    %v3893 = vld [vmem:[#allocation6 + $0x78] sm:$0xff]
    %v3894 = vld [vmem:[#allocation6 + $0x80] sm:$0xf]
    %v3895 = vld [vmem:[#allocation6 + $0x84] sm:$0xff]
    %v3896 = vld [vmem:[#allocation6 + $0x8c] sm:$0xf]
    %v3897 = vld [vmem:[#allocation6 + $0x90] sm:$0xff]
    %v3898 = vld [vmem:[#allocation6 + $0x98] sm:$0xf]
    %v3899 = vld [vmem:[#allocation6 + $0x9c] sm:$0xff]
    %v3900 = vld [vmem:[#allocation6 + $0xa4] sm:$0xf]
    %v3901 = vld [vmem:[#allocation6 + $0xa8] sm:$0xff]
    %v3902 = vld [vmem:[#allocation6 + $0xb0] sm:$0xf]
    %v3903 = vld [vmem:[#allocation6 + $0xb4] sm:$0xff]
    %v3904 = vld [vmem:[#allocation6 + $0xbc] sm:$0xf]
    %v3905 = vld [vmem:[%s3] sm:$0x7]
    %v3907 = vlaneseq
    %v3908 = vshrl.u32 %v3907, 7
    %v3909 = vsub.s32 0, %v3908
    %v3910 = vrot.slane %v3905, %v3909
    %v3911 = vlaneseq
    %v3912 = vshrl.u32 %v3911, 7
    %v3913 = vsub.s32 1, %v3912
    %v3914 = vrot.slane %v3905, %v3913
    %v3915 = vlaneseq
    %v3916 = vshrl.u32 %v3915, 7
    %v3917 = vsub.s32 2, %v3916
    %v3918 = vrot.slane %v3905, %v3917
    %v3954 = vunpack.c.l.b16 %v3873
    %v3955 = vunpack.c.h.b16 %v3873
    %v3956 = vunpack.c.l.b16 %v3874
    %v3957 = vunpack.c.l.b16 %v3875
    %v3958 = vunpack.c.h.b16 %v3875
    %v3959 = vunpack.c.l.b16 %v3876
    %v3960 = vunpack.c.l.b16 %v3877
    %v3961 = vunpack.c.h.b16 %v3877
    %v3962 = vunpack.c.l.b16 %v3878
    %v3963 = vunpack.c.l.b16 %v3879
    %v3964 = vunpack.c.h.b16 %v3879
    %v3965 = vunpack.c.l.b16 %v3880
    %v3966 = vunpack.c.l.b16 %v3881
    %v3967 = vunpack.c.h.b16 %v3881
    %v3968 = vunpack.c.l.b16 %v3882
    %v3969 = vunpack.c.l.b16 %v3883
    %v3970 = vunpack.c.h.b16 %v3883
    %v3971 = vunpack.c.l.b16 %v3884
    %v3972 = vunpack.c.l.b16 %v3885
    %v3973 = vunpack.c.h.b16 %v3885
    %v3974 = vunpack.c.l.b16 %v3886
    %v3975 = vunpack.c.l.b16 %v3887
    %v3976 = vunpack.c.h.b16 %v3887
    %v3977 = vunpack.c.l.b16 %v3888
    %v3978 = vunpack.c.l.b16 %v3889
    %v3979 = vunpack.c.h.b16 %v3889
    %v3980 = vunpack.c.l.b16 %v3890
    %v3981 = vunpack.c.l.b16 %v3891
    %v3982 = vunpack.c.h.b16 %v3891
    %v3983 = vunpack.c.l.b16 %v3892
    %v3984 = vunpack.c.l.b16 %v3893
    %v3985 = vunpack.c.h.b16 %v3893
    %v3986 = vunpack.c.l.b16 %v3894
    %v3987 = vunpack.c.l.b16 %v3895
    %v3988 = vunpack.c.h.b16 %v3895
    %v3989 = vunpack.c.l.b16 %v3896
    %v3990 = vunpack.c.l.b16 %v3897
    %v3991 = vunpack.c.h.b16 %v3897
    %v3992 = vunpack.c.l.b16 %v3898
    %v3993 = vunpack.c.l.b16 %v3899
    %v3994 = vunpack.c.h.b16 %v3899
    %v3995 = vunpack.c.l.b16 %v3900
    %v3996 = vunpack.c.l.b16 %v3901
    %v3997 = vunpack.c.h.b16 %v3901
    %v3998 = vunpack.c.l.b16 %v3902
    %v3999 = vunpack.c.l.b16 %v3903
    %v4000 = vunpack.c.h.b16 %v3903
    %v4001 = vunpack.c.l.b16 %v3904
    %v4002 = vpack.c.b16 %v3957, %v3954
    %v4003 = vpack.c.b16 %v3958, %v3955
    %v4004 = vpack.c.b16 %v3959, %v3956
    %v4005 = vpack.c.b16 %v3963, %v3960
    %v4006 = vpack.c.b16 %v3964, %v3961
    %v4007 = vpack.c.b16 %v3965, %v3962
    %v4008 = vpack.c.b16 %v3969, %v3966
    %v4009 = vpack.c.b16 %v3970, %v3967
    %v4010 = vpack.c.b16 %v3971, %v3968
    %v4011 = vpack.c.b16 %v3975, %v3972
    %v4012 = vpack.c.b16 %v3976, %v3973
    %v4013 = vpack.c.b16 %v3977, %v3974
    %v4014 = vpack.c.b16 %v3981, %v3978
    %v4015 = vpack.c.b16 %v3982, %v3979
    %v4016 = vpack.c.b16 %v3983, %v3980
    %v4017 = vpack.c.b16 %v3987, %v3984
    %v4018 = vpack.c.b16 %v3988, %v3985
    %v4019 = vpack.c.b16 %v3989, %v3986
    %v4020 = vpack.c.b16 %v3993, %v3990
    %v4021 = vpack.c.b16 %v3994, %v3991
    %v4022 = vpack.c.b16 %v3995, %v3992
    %v4023 = vpack.c.b16 %v3999, %v3996
    %v4024 = vpack.c.b16 %v4000, %v3997
    %v4025 = vpack.c.b16 %v4001, %v3998
    %4050 = vmatprep.subr.bf16.mxu0 %v4003
    %4051 = vmatpush1.bf16.msra.mxu0 %v4002
    %4052 = vmatprep.subr.bf16.mxu0 %v4006
    %4053 = vmatpush1.bf16.msra.mxu0 %v4005
    %4054 = vmatprep.subr.bf16.mxu0 %v4009
    %4055 = vmatpush1.bf16.msra.mxu0 %v4008
    %4056 = vmatprep.subr.bf16.mxu0 %v4012
    %4057 = vmatpush1.bf16.msra.mxu0 %v4011
    %4058 = vmatprep.subr.bf16.mxu0 %v4015
    %4059 = vmatpush1.bf16.msra.mxu0 %v4014
    %4060 = vmatprep.subr.bf16.mxu0 %v4018
    %4061 = vmatpush1.bf16.msra.mxu0 %v4017
    %4062 = vmatprep.subr.bf16.mxu0 %v4021
    %4063 = vmatpush1.bf16.msra.mxu0 %v4020
    %4064 = vmatprep.subr.bf16.mxu0 %v4024
    %4065 = vmatpush1.bf16.msra.mxu0 %v4023
    %4066 = vmatprep.subr.bf16.mxu0 0
    %4067 = vmatpush1.bf16.msra.mxu0 0
    %4068 = vmatprep.subr.bf16.mxu0 0
    %4069 = vmatpush1.bf16.msra.mxu0 0
    %4070 = vmatprep.subr.bf16.mxu0 0
    %4071 = vmatpush1.bf16.msra.mxu0 0
    %4072 = vmatprep.subr.bf16.mxu0 0
    %4073 = vmatpush1.bf16.msra.mxu0 0
    %4074 = vmatprep.subr.bf16.mxu0 0
    %4075 = vmatpush1.bf16.msra.mxu0 0
    %4076 = vmatprep.subr.bf16.mxu0 0
    %4077 = vmatpush1.bf16.msra.mxu0 0
    %4078 = vmatprep.subr.bf16.mxu0 0
    %4079 = vmatpush1.bf16.msra.mxu0 0
    %4080 = vmatprep.subr.bf16.mxu0 0
    %4081 = vmatpush1.bf16.msra.mxu0 0
    %4082 = vmatprep.mubr.bf16.mxu0 0
    %4083 = vmatmul.mubr.bf16.gmra.mrb[0].mxu0 %v3872
    %v4084 = vpop.f32.mrb[0].mxu0
    %v4085 = vadd.f32 %v3910, %v4084
    %v4086 = vpop.f32.mrb[0].mxu0
    %v4087 = vadd.f32 %v3914, %v4086
    %v4088 = vpop.f32.mrb[0].mxu0
    %v4089 = vpop.f32.mrb[0].mxu0
    %4090 = vdwg.mxu0
    %4091 = vmatprep.subr.bf16.mxu0 0
    %4092 = vmatpush1.bf16.msra.mxu0 %v4004
    %4093 = vmatprep.subr.bf16.mxu0 0
    %4094 = vmatpush1.bf16.msra.mxu0 %v4007
    %4095 = vmatprep.subr.bf16.mxu0 0
    %4096 = vmatpush1.bf16.msra.mxu0 %v4010
    %4097 = vmatprep.subr.bf16.mxu0 0
    %4098 = vmatpush1.bf16.msra.mxu0 %v4013
    %4099 = vmatprep.subr.bf16.mxu0 0
    %4100 = vmatpush1.bf16.msra.mxu0 %v4016
    %4101 = vmatprep.subr.bf16.mxu0 0
    %4102 = vmatpush1.bf16.msra.mxu0 %v4019
    %4103 = vmatprep.subr.bf16.mxu0 0
    %4104 = vmatpush1.bf16.msra.mxu0 %v4022
    %4105 = vmatprep.subr.bf16.mxu0 0
    %4106 = vmatpush1.bf16.msra.mxu0 %v4025
    %4107 = vmatprep.subr.bf16.mxu0 0
    %4108 = vmatpush1.bf16.msra.mxu0 0
    %4109 = vmatprep.subr.bf16.mxu0 0
    %4110 = vmatpush1.bf16.msra.mxu0 0
    %4111 = vmatprep.subr.bf16.mxu0 0
    %4112 = vmatpush1.bf16.msra.mxu0 0
    %4113 = vmatprep.subr.bf16.mxu0 0
    %4114 = vmatpush1.bf16.msra.mxu0 0
    %4115 = vmatprep.subr.bf16.mxu0 0
    %4116 = vmatpush1.bf16.msra.mxu0 0
    %4117 = vmatprep.subr.bf16.mxu0 0
    %4118 = vmatpush1.bf16.msra.mxu0 0
    %4119 = vmatprep.subr.bf16.mxu0 0
    %4120 = vmatpush1.bf16.msra.mxu0 0
    %4121 = vmatprep.subr.bf16.mxu0 0
    %4122 = vmatpush1.bf16.msra.mxu0 0
    %4123 = vmatprep.mubr.bf16.mxu0 0
    %4124 = vmatmul.mubr.bf16.gmra.mrb[0].mxu0 %v3872
    %v4125 = vpop.f32.mrb[0].mxu0
    %v4126 = vadd.f32 %v3918, %v4125
    %v4127 = vpop.f32.mrb[0].mxu0
    %v4128 = vpop.f32.mrb[0].mxu0
    %v4129 = vpop.f32.mrb[0].mxu0
    %4130 = vdwg.mxu0
    %v4131 = vpack.c.bf16 %v3870, %v3870
    %v4132 = vld [vmem:[#allocation8] sm:$0xff]
    %v4133 = vld [vmem:[#allocation8 + $0x8] sm:$0xf]
    %v4134 = vld [vmem:[#allocation8 + $0xc] sm:$0xff]
    %v4135 = vld [vmem:[#allocation8 + $0x14] sm:$0xf]
    %v4136 = vld [vmem:[#allocation8 + $0x18] sm:$0xff]
    %v4137 = vld [vmem:[#allocation8 + $0x20] sm:$0xf]
    %v4138 = vld [vmem:[#allocation8 + $0x24] sm:$0xff]
    %v4139 = vld [vmem:[#allocation8 + $0x2c] sm:$0xf]
    %v4140 = vld [vmem:[#allocation8 + $0x30] sm:$0xff]
    %v4141 = vld [vmem:[#allocation8 + $0x38] sm:$0xf]
    %v4142 = vld [vmem:[#allocation8 + $0x3c] sm:$0xff]
    %v4143 = vld [vmem:[#allocation8 + $0x44] sm:$0xf]
    %v4144 = vld [vmem:[#allocation8 + $0x48] sm:$0xff]
    %v4145 = vld [vmem:[#allocation8 + $0x50] sm:$0xf]
    %v4146 = vld [vmem:[#allocation8 + $0x54] sm:$0xff]
    %v4147 = vld [vmem:[#allocation8 + $0x5c] sm:$0xf]
    %v4148 = vld [vmem:[#allocation8 + $0x60] sm:$0xff]
    %v4149 = vld [vmem:[#allocation8 + $0x68] sm:$0xf]
    %v4150 = vld [vmem:[#allocation8 + $0x6c] sm:$0xff]
    %v4151 = vld [vmem:[#allocation8 + $0x74] sm:$0xf]
    %v4152 = vld [vmem:[#allocation8 + $0x78] sm:$0xff]
    %v4153 = vld [vmem:[#allocation8 + $0x80] sm:$0xf]
    %v4154 = vld [vmem:[#allocation8 + $0x84] sm:$0xff]
    %v4155 = vld [vmem:[#allocation8 + $0x8c] sm:$0xf]
    %v4156 = vld [vmem:[#allocation8 + $0x90] sm:$0xff]
    %v4157 = vld [vmem:[#allocation8 + $0x98] sm:$0xf]
    %v4158 = vld [vmem:[#allocation8 + $0x9c] sm:$0xff]
    %v4159 = vld [vmem:[#allocation8 + $0xa4] sm:$0xf]
    %v4160 = vld [vmem:[#allocation8 + $0xa8] sm:$0xff]
    %v4161 = vld [vmem:[#allocation8 + $0xb0] sm:$0xf]
    %v4162 = vld [vmem:[#allocation8 + $0xb4] sm:$0xff]
    %v4163 = vld [vmem:[#allocation8 + $0xbc] sm:$0xf]
    %v4164 = vld [vmem:[%s4] sm:$0x7]
    %v4166 = vlaneseq
    %v4167 = vshrl.u32 %v4166, 7
    %v4168 = vsub.s32 0, %v4167
    %v4169 = vrot.slane %v4164, %v4168
    %v4170 = vlaneseq
    %v4171 = vshrl.u32 %v4170, 7
    %v4172 = vsub.s32 1, %v4171
    %v4173 = vrot.slane %v4164, %v4172
    %v4174 = vlaneseq
    %v4175 = vshrl.u32 %v4174, 7
    %v4176 = vsub.s32 2, %v4175
    %v4177 = vrot.slane %v4164, %v4176
    %v4213 = vunpack.c.l.b16 %v4132
    %v4214 = vunpack.c.h.b16 %v4132
    %v4215 = vunpack.c.l.b16 %v4133
    %v4216 = vunpack.c.l.b16 %v4134
    %v4217 = vunpack.c.h.b16 %v4134
    %v4218 = vunpack.c.l.b16 %v4135
    %v4219 = vunpack.c.l.b16 %v4136
    %v4220 = vunpack.c.h.b16 %v4136
    %v4221 = vunpack.c.l.b16 %v4137
    %v4222 = vunpack.c.l.b16 %v4138
    %v4223 = vunpack.c.h.b16 %v4138
    %v4224 = vunpack.c.l.b16 %v4139
    %v4225 = vunpack.c.l.b16 %v4140
    %v4226 = vunpack.c.h.b16 %v4140
    %v4227 = vunpack.c.l.b16 %v4141
    %v4228 = vunpack.c.l.b16 %v4142
    %v4229 = vunpack.c.h.b16 %v4142
    %v4230 = vunpack.c.l.b16 %v4143
    %v4231 = vunpack.c.l.b16 %v4144
    %v4232 = vunpack.c.h.b16 %v4144
    %v4233 = vunpack.c.l.b16 %v4145
    %v4234 = vunpack.c.l.b16 %v4146
    %v4235 = vunpack.c.h.b16 %v4146
    %v4236 = vunpack.c.l.b16 %v4147
    %v4237 = vunpack.c.l.b16 %v4148
    %v4238 = vunpack.c.h.b16 %v4148
    %v4239 = vunpack.c.l.b16 %v4149
    %v4240 = vunpack.c.l.b16 %v4150
    %v4241 = vunpack.c.h.b16 %v4150
    %v4242 = vunpack.c.l.b16 %v4151
    %v4243 = vunpack.c.l.b16 %v4152
    %v4244 = vunpack.c.h.b16 %v4152
    %v4245 = vunpack.c.l.b16 %v4153
    %v4246 = vunpack.c.l.b16 %v4154
    %v4247 = vunpack.c.h.b16 %v4154
    %v4248 = vunpack.c.l.b16 %v4155
    %v4249 = vunpack.c.l.b16 %v4156
    %v4250 = vunpack.c.h.b16 %v4156
    %v4251 = vunpack.c.l.b16 %v4157
    %v4252 = vunpack.c.l.b16 %v4158
    %v4253 = vunpack.c.h.b16 %v4158
    %v4254 = vunpack.c.l.b16 %v4159
    %v4255 = vunpack.c.l.b16 %v4160
    %v4256 = vunpack.c.h.b16 %v4160
    %v4257 = vunpack.c.l.b16 %v4161
    %v4258 = vunpack.c.l.b16 %v4162
    %v4259 = vunpack.c.h.b16 %v4162
    %v4260 = vunpack.c.l.b16 %v4163
    %v4261 = vpack.c.b16 %v4216, %v4213
    %v4262 = vpack.c.b16 %v4217, %v4214
    %v4263 = vpack.c.b16 %v4218, %v4215
    %v4264 = vpack.c.b16 %v4222, %v4219
    %v4265 = vpack.c.b16 %v4223, %v4220
    %v4266 = vpack.c.b16 %v4224, %v4221
    %v4267 = vpack.c.b16 %v4228, %v4225
    %v4268 = vpack.c.b16 %v4229, %v4226
    %v4269 = vpack.c.b16 %v4230, %v4227
    %v4270 = vpack.c.b16 %v4234, %v4231
    %v4271 = vpack.c.b16 %v4235, %v4232
    %v4272 = vpack.c.b16 %v4236, %v4233
    %v4273 = vpack.c.b16 %v4240, %v4237
    %v4274 = vpack.c.b16 %v4241, %v4238
    %v4275 = vpack.c.b16 %v4242, %v4239
    %v4276 = vpack.c.b16 %v4246, %v4243
    %v4277 = vpack.c.b16 %v4247, %v4244
    %v4278 = vpack.c.b16 %v4248, %v4245
    %v4279 = vpack.c.b16 %v4252, %v4249
    %v4280 = vpack.c.b16 %v4253, %v4250
    %v4281 = vpack.c.b16 %v4254, %v4251
    %v4282 = vpack.c.b16 %v4258, %v4255
    %v4283 = vpack.c.b16 %v4259, %v4256
    %v4284 = vpack.c.b16 %v4260, %v4257
    %4309 = vmatprep.subr.bf16.mxu0 %v4262
    %4310 = vmatpush1.bf16.msra.mxu0 %v4261
    %4311 = vmatprep.subr.bf16.mxu0 %v4265
    %4312 = vmatpush1.bf16.msra.mxu0 %v4264
    %4313 = vmatprep.subr.bf16.mxu0 %v4268
    %4314 = vmatpush1.bf16.msra.mxu0 %v4267
    %4315 = vmatprep.subr.bf16.mxu0 %v4271
    %4316 = vmatpush1.bf16.msra.mxu0 %v4270
    %4317 = vmatprep.subr.bf16.mxu0 %v4274
    %4318 = vmatpush1.bf16.msra.mxu0 %v4273
    %4319 = vmatprep.subr.bf16.mxu0 %v4277
    %4320 = vmatpush1.bf16.msra.mxu0 %v4276
    %4321 = vmatprep.subr.bf16.mxu0 %v4280
    %4322 = vmatpush1.bf16.msra.mxu0 %v4279
    %4323 = vmatprep.subr.bf16.mxu0 %v4283
    %4324 = vmatpush1.bf16.msra.mxu0 %v4282
    %4325 = vmatprep.subr.bf16.mxu0 0
    %4326 = vmatpush1.bf16.msra.mxu0 0
    %4327 = vmatprep.subr.bf16.mxu0 0
    %4328 = vmatpush1.bf16.msra.mxu0 0
    %4329 = vmatprep.subr.bf16.mxu0 0
    %4330 = vmatpush1.bf16.msra.mxu0 0
    %4331 = vmatprep.subr.bf16.mxu0 0
    %4332 = vmatpush1.bf16.msra.mxu0 0
    %4333 = vmatprep.subr.bf16.mxu0 0
    %4334 = vmatpush1.bf16.msra.mxu0 0
    %4335 = vmatprep.subr.bf16.mxu0 0
    %4336 = vmatpush1.bf16.msra.mxu0 0
    %4337 = vmatprep.subr.bf16.mxu0 0
    %4338 = vmatpush1.bf16.msra.mxu0 0
    %4339 = vmatprep.subr.bf16.mxu0 0
    %4340 = vmatpush1.bf16.msra.mxu0 0
    %4341 = vmatprep.mubr.bf16.mxu0 0
    %4342 = vmatmul.mubr.bf16.gmra.mrb[0].mxu0 %v4131
    %v4343 = vpop.f32.mrb[0].mxu0
    %v4344 = vadd.f32 %v4169, %v4343
    %v4345 = vpop.f32.mrb[0].mxu0
    %v4346 = vadd.f32 %v4173, %v4345
    %v4347 = vpop.f32.mrb[0].mxu0
    %v4348 = vpop.f32.mrb[0].mxu0
    %4349 = vdwg.mxu0
    %4350 = vmatprep.subr.bf16.mxu0 0
    %4351 = vmatpush1.bf16.msra.mxu0 %v4263
    %4352 = vmatprep.subr.bf16.mxu0 0
    %4353 = vmatpush1.bf16.msra.mxu0 %v4266
    %4354 = vmatprep.subr.bf16.mxu0 0
    %4355 = vmatpush1.bf16.msra.mxu0 %v4269
    %4356 = vmatprep.subr.bf16.mxu0 0
    %4357 = vmatpush1.bf16.msra.mxu0 %v4272
    %4358 = vmatprep.subr.bf16.mxu0 0
    %4359 = vmatpush1.bf16.msra.mxu0 %v4275
    %4360 = vmatprep.subr.bf16.mxu0 0
    %4361 = vmatpush1.bf16.msra.mxu0 %v4278
    %4362 = vmatprep.subr.bf16.mxu0 0
    %4363 = vmatpush1.bf16.msra.mxu0 %v4281
    %4364 = vmatprep.subr.bf16.mxu0 0
    %4365 = vmatpush1.bf16.msra.mxu0 %v4284
    %4366 = vmatprep.subr.bf16.mxu0 0
    %4367 = vmatpush1.bf16.msra.mxu0 0
    %4368 = vmatprep.subr.bf16.mxu0 0
    %4369 = vmatpush1.bf16.msra.mxu0 0
    %4370 = vmatprep.subr.bf16.mxu0 0
    %4371 = vmatpush1.bf16.msra.mxu0 0
    %4372 = vmatprep.subr.bf16.mxu0 0
    %4373 = vmatpush1.bf16.msra.mxu0 0
    %4374 = vmatprep.subr.bf16.mxu0 0
    %4375 = vmatpush1.bf16.msra.mxu0 0
    %4376 = vmatprep.subr.bf16.mxu0 0
    %4377 = vmatpush1.bf16.msra.mxu0 0
    %4378 = vmatprep.subr.bf16.mxu0 0
    %4379 = vmatpush1.bf16.msra.mxu0 0
    %4380 = vmatprep.subr.bf16.mxu0 0
    %4381 = vmatpush1.bf16.msra.mxu0 0
    %4382 = vmatprep.mubr.bf16.mxu0 0
    %4383 = vmatmul.mubr.bf16.gmra.mrb[0].mxu0 %v4131
    %v4384 = vpop.f32.mrb[0].mxu0
    %v4385 = vadd.f32 %v4177, %v4384
    %v4386 = vpop.f32.mrb[0].mxu0
    %v4387 = vpop.f32.mrb[0].mxu0
    %v4388 = vpop.f32.mrb[0].mxu0
    %4389 = vdwg.mxu0
    %v4390 = vadd.f32 %v4085, %v4344
    %v4391 = vxor.u32 %v4390, 2147483648
    %v4392 = vmul.f32 %v4391, 1.442695
    %v4393 = vpow.pop %v4392
    %v4394 = vadd.f32 %v4393, 1.0
    %v4395 = vrcp.pop %v4394
    %v4396 = vmul.f32 1.0, %v4395
    %v4397 = vadd.f32 %v4087, %v4346
    %v4398 = vxor.u32 %v4397, 2147483648
    %v4399 = vmul.f32 %v4398, 1.442695
    %v4400 = vpow.pop %v4399
    %v4401 = vadd.f32 %v4400, 1.0
    %v4402 = vrcp.pop %v4401
    %v4403 = vmul.f32 1.0, %v4402
    %v4404 = vmul.f32 %v4396, %v4385
    %v4405 = vadd.f32 %v4126, %v4404
    %v4406 = vtanh.pop %v4405
    %v4407 = vsub.f32 1.0, %v4403
    %v4408 = vmul.f32 %v4407, %v4406
    %v4409 = vmul.f32 %v4403, %v3870
    %v4410 = vadd.f32 %v4408, %v4409
    %4411 = vst [vmem:[#allocation2] sm:$0x3] %v4410
    %s4412 = scalar_lea.vmem [#allocation9], 14
    %4413 = vst [vmem:[%s4412] sm:$0x3] %v4410
    // Predicated region
    $region34: #{tpu_custom_call.1} parent=1 // pred_check
      _
    $region35: #{tpu_custom_call.1} parent=1 // pred_check_branch
      %4415 = sbr.rel (0) target = $region37
    $region36: #{tpu_custom_call.1} parent=1 // pred_region
      %s4417 = ssub.s32 256, 256
      %4418 = vsyncadd [#allocation5], %s4417
      %s4419 = sshll.u32 [#allocation9], 4
      %s4420 = int_to_ptr.vmem [resolvable:$true] %s4419
      %4425 = dma.vmem_to_hbm [thread:$0]  %s4420, 256, %s5, [#allocation5], 32, 32, 2
    $region37: #{tpu_custom_call.1} parent=1 // pred_fallthru
      _
    // Predicated region
    $region38: #{tpu_custom_call.1} parent=1 // pred_check
      _
    $region39: #{tpu_custom_call.1} parent=1 // pred_check_branch
      %4427 = sbr.rel (0) target = $region41
    $region40: #{tpu_custom_call.1} parent=1 // pred_region
      %4428 = dma.done [#allocation5], 256
    $region41: #{tpu_custom_call.1} parent=1 // pred_fallthru
      _
    %4429 = vsyncpa [#allocation4], 1
    %4430 = vsyncpa [#allocation7], 1
    %4431 = vsyncpa [#allocation5], 1

</llo_original>
